<compile_context>
chip_gen: v5e
topology: v5e:2x2
jax: 0.10.0
libtpu: 0.0.40
codegen_flags: <defaults>
</compile_context>

<pallas_src>
import functools

import jax
import jax.numpy as jnp
import numpy as np
from jax import lax
from jax.experimental import pallas as pl
from jax.experimental.pallas import tpu as pltpu

NEG_SLOPE = 0.01
BIG = 3.0e38          # f32 sentinel for the masked min (accumulator stays f32)
LANE = 128            # vreg lane width  -> all feature dims padded to this
SUB = 8               # vreg sublane width
M_CHUNK = 128         # hyperedge rows reduced per masked-min step
P_CHUNK = 16          # motif rows per masked-min step (bounds 3-D intermediate)


def _rup(x, m):
    return ((x + m - 1) // m) * m


def _leaky(x):
    return jnp.where(x > 0, x, NEG_SLOPE * x)


def _mm(a, b):       # a @ b
    return lax.dot_general(a, b, (((1,), (0,)), ((), ())),
                           preferred_element_type=jnp.float32)


def _mm_tA(a, b):    # a.T @ b
    return lax.dot_general(a, b, (((0,), (0,)), ((), ())),
                           preferred_element_type=jnp.float32)


def _mm_tB(a, b):    # a @ b.T
    return lax.dot_general(a, b, (((1,), (1,)), ((), ())),
                           preferred_element_type=jnp.float32)


def _mm_i01_bf16x2(a_bf16, x_f32):
    """a @ x where `a` is an exact small-integer bf16 matrix and `x` is f32.

    Splits x into bf16 hi/lo halves so both MXU passes run at bf16 rate while
    keeping ~f32 accuracy: products against 0/1 entries are exact, the f32
    accumulator is exact, and the split only drops bits below ~2^-17 of x.
    """
    hi = x_f32.astype(jnp.bfloat16)
    lo = (x_f32 - hi.astype(jnp.float32)).astype(jnp.bfloat16)
    return _mm(a_bf16, hi) + _mm(a_bf16, lo)


# --------------------------------------------------------------------------
# Kernel
# --------------------------------------------------------------------------
def hypergraph_motif_kernel(
    emb_ref, H_ref, Ht_ref, Agt_ref, Amean_ref, pen_ref,
    dinv_ref, binv_ref, dsig_ref, mnz_ref,
    Wh_ref, bh_ref, Wlin_ref, blin_ref,
    Wg_ref, bg_ref, Wl2_ref, bl2_ref, Wf_ref, bf_ref,
    out_ref, *, apply_sigmoid: bool,
):
    # ---------------- Node2VecHypergraphConv ----------------
    Xw = _mm_tB(emb_ref[...], Wh_ref[...])                    # [N, C1p]  f32
    # he = B^-1 (H^T Xw) ;  H / H^T stay bf16 (0/1 exact), data operand bf16x2
    he = binv_ref[...] * _mm_i01_bf16x2(Ht_ref[...], Xw)      # [Mp, C1p]
    Z = dinv_ref[...] * _mm_i01_bf16x2(H_ref[...], he) + bh_ref[...]
    Z = _leaky(Z)                                              # [N, C1p]
    G = _mm_tA(Z, Z)                                           # [C1p, C1p]
    G = _leaky(_mm_tB(G, Wlin_ref[...]) + blin_ref[...])

    # ---------------- edge_embeddings ----------------
    Ye = _mm(Amean_ref[...], G)                                # mean agg [Mp, C1p]
    Xg = _mm_tB(Ye, Wg_ref[...])                               # [Mp, C2p]
    dsig = dsig_ref[...]                                       # [Mp, 1] D^-1/2
    # GCN operator is stored already transposed in glue: plain matmul, no XLU
    # transpose, bf16 MXU rate via the bf16x2 split of the scaled operand.
    Yg = dsig * _mm_i01_bf16x2(Agt_ref[...], dsig * Xg) + bg_ref[...]
    Y2 = _leaky(_mm_tB(Yg, Wl2_ref[...]) + bl2_ref[...])       # [Mp, C2p]

    # ---------------- motif_embeddings (masked min) ----------------
    # pen[p, m] = 0 if hyperedge m belongs to motif group p, else BIG.
    # min_m (Y2[m, c] + pen[p, m])  -> one VPU add + sublane-axis reduce,
    # no Y2 transpose; chunked over (Pp, Mp) to bound the 3-D intermediate.
    pen = pen_ref[...]                                         # [Pp, Mp] f32
    Pp, Mp = pen.shape
    C2p = Y2.shape[1]
    blocks = []
    for p0 in range(0, Pp, P_CHUNK):
        pc = min(P_CHUNK, Pp - p0)
        acc = jnp.full((pc, C2p), BIG, jnp.float32)
        for m0 in range(0, Mp, M_CHUNK):
            mc = min(M_CHUNK, Mp - m0)
            cand = jnp.min(
                pen[p0:p0 + pc, m0:m0 + mc][:, :, None]
                + Y2[m0:m0 + mc, :][None, :, :],
                axis=1)                                        # [pc, C2p]
            acc = jnp.minimum(acc, cand)
        blocks.append(acc)
    Ymin = blocks[0] if len(blocks) == 1 else jnp.concatenate(blocks, axis=0)
    # empty motif groups -> 0 (flag precomputed in glue; reference matches)
    Ymin = jnp.where(mnz_ref[...] > 0.5, Ymin, 0.0)            # [Pp, C2p]

    # linear_3 and linear_out folded into a single matmul (done in glue)
    y = _mm_tB(Ymin, Wf_ref[...]) + bf_ref[...]                # [Pp, Coutp]
    if apply_sigmoid:
        y = jax.nn.sigmoid(y)
    out_ref[...] = y


def _in_spec(shape):
    nd = len(shape)
    # grid=(1,): nothing to pipeline, so single-buffer every input (halves
    # resident VMEM vs. the default double buffering).
    return pl.BlockSpec(shape, lambda i, nd=nd: (0,) * nd,
                        pipeline_mode=pl.Buffered(buffer_count=1))


def _out_spec(shape):
    nd = len(shape)
    return pl.BlockSpec(shape, lambda i, nd=nd: (0,) * nd)


def _pad2d(x, rows, cols, dtype=jnp.float32):
    out = jnp.zeros((rows, cols), dtype)
    return out.at[: x.shape[0], : x.shape[1]].set(x.astype(dtype))


# --------------------------------------------------------------------------
# Glue: dense structure operators + all structure-only normalisers
# --------------------------------------------------------------------------
def build_dense_operands(edge_index, edge_edge_index, motif_edge_index,
                         num_nodes, num_edges, num_motifs, c1p, mp, pp):
    ei = edge_index
    # node-hyperedge incidence (and its transpose, so the kernel never
    # transposes).  Small-integer multiplicities are exact in bf16 (<256).
    H = jnp.zeros((num_nodes, mp), jnp.float32).at[ei[0], ei[1]].add(1.0)
    Ht = jnp.zeros((mp, num_nodes), jnp.float32).at[ei[1], ei[0]].add(1.0)
    deg = jnp.sum(H, axis=1, keepdims=True)                   # node degree [N,1]
    dinv = jnp.where(deg > 0, 1.0 / deg, 0.0)
    esz = jnp.sum(Ht, axis=1, keepdims=True)                  # hyperedge size [Mp,1]
    binv = jnp.where(esz > 0, 1.0 / esz, 0.0)

    # MeanAggregation(y[edge_index[0]], edge_index[1]) as a dense row-normalised
    # operator.  Columns are NODE ids indexing rows of the [C1,C1] gram matrix,
    # which requires num_nodes <= channels_1 (faithful to the PyTorch code).
    cnt = jnp.zeros((mp,), jnp.float32).at[ei[1]].add(1.0)
    A_mean = jnp.zeros((mp, c1p), jnp.float32).at[ei[1], ei[0]].add(1.0)
    A_mean = A_mean / jnp.maximum(cnt[:, None], 1.0)

    # GCN adjacency, built ALREADY TRANSPOSED (rows = target edge): gcn_norm
    # drops existing self loops and adds fresh ones for the real num_edges rows.
    ee = edge_edge_index
    w = jnp.where(ee[0] != ee[1], 1.0, 0.0).astype(jnp.float32)
    idx = jnp.arange(num_edges)
    Agt = (jnp.zeros((mp, mp), jnp.float32)
           .at[ee[1], ee[0]].add(w)
           .at[idx, idx].add(1.0))
    gdeg = jnp.sum(Agt, axis=1, keepdims=True)                # in-degree by target
    dsig = jnp.where(gdeg > 0, gdeg ** -0.5, 0.0)

    # motif membership -> additive min-penalty (0 member / BIG non-member) and
    # non-empty-group flag.
    mi = motif_edge_index
    mask = jnp.zeros((pp, mp), jnp.float32).at[mi[1], mi[0]].max(1.0)
    pen = (1.0 - mask) * BIG
    mnz = (jnp.sum(mask, axis=1, keepdims=True) > 0).astype(jnp.float32)

    # TODO(synk): dinv/binv/dsig/mnz are kept as [rows,1] columns (padded to 128
    # lanes in VMEM); at very large Mp on v7x they could be packed lane-dense.
    return (H.astype(jnp.bfloat16), Ht.astype(jnp.bfloat16),
            Agt.astype(jnp.bfloat16), A_mean, pen, dinv, binv, dsig, mnz)


# --------------------------------------------------------------------------
# Wrapper
# --------------------------------------------------------------------------
def hypergraph_motif_conv_e(params, edge_index, edge_edge_index,
                            motif_edge_index, num_nodes, num_edges, num_motifs,
                            sigmoid=False):
    (emb, Wh, bh, Wlin, blin, Wg, bg, Wl2, bl2, Wl3, bl3, Wlo, blo) = params
    n, c1 = emb.shape
    c2 = Wg.shape[0]
    c_out = Wlo.shape[0]
    # forward does `y[edge_index[0]]` on the [C1, C1] gram matrix, so node ids
    # must be valid row indices of that matrix (exactly as in the PyTorch code).
    assert num_nodes <= c1

    # lane-dense padded sizes (sub-128 feature dims waste the MXU and force
    # masked partial stores)
    c1p, c2p, coutp = _rup(c1, LANE), _rup(c2, LANE), _rup(c_out, LANE)
    mp, pp = _rup(num_edges, LANE), _rup(num_motifs, SUB)

    (H, Ht, Agt, A_mean, pen, dinv, binv, dsig, mnz) = build_dense_operands(
        edge_index, edge_edge_index, motif_edge_index,
        num_nodes, num_edges, num_motifs, c1p, mp, pp)

    # zero-pad weights/biases to lane width; padded channels stay exactly zero
    # through every layer (leaky_relu(0) == 0, biases padded with zeros).
    emb_p = _pad2d(emb, n, c1p)
    Wh_p, bh_p = _pad2d(Wh, c1p, c1p), _pad2d(bh, 1, c1p)
    Wlin_p, blin_p = _pad2d(Wlin, c1p, c1p), _pad2d(blin, 1, c1p)
    Wg_p, bg_p = _pad2d(Wg, c2p, c1p), _pad2d(bg, 1, c2p)
    Wl2_p, bl2_p = _pad2d(Wl2, c2p, c2p), _pad2d(bl2, 1, c2p)
    # fold linear_3 and linear_out (no nonlinearity between them)
    Wfold = Wlo @ Wl3                                   # [Cout, C2]
    bfold = bl3 @ Wlo.T + blo                           # [1, Cout]
    Wf_p, bf_p = _pad2d(Wfold, coutp, c2p), _pad2d(bfold, 1, coutp)

    inputs = (emb_p, H, Ht, Agt, A_mean, pen, dinv, binv, dsig, mnz,
              Wh_p, bh_p, Wlin_p, blin_p, Wg_p, bg_p, Wl2_p, bl2_p, Wf_p, bf_p)

    # ---- VMEM budget: single-buffered inputs + padded intermediates ----
    def tile_bytes(shape, dtype):
        sub = 16 if dtype == jnp.bfloat16 else 8
        return _rup(shape[0], sub) * _rup(shape[1], LANE) * jnp.dtype(dtype).itemsize

    in_vmem = sum(tile_bytes(x.shape, x.dtype) for x in inputs)
    out_vmem = _rup(pp, SUB) * coutp * 4
    inter_vmem = 4 * (3 * n * c1p + 2 * c1p * c1p + 3 * mp * c1p
                      + 5 * mp * c2p + P_CHUNK * M_CHUNK * c2p + pp * c2p)
    try:
        phys_vmem = int(pltpu.get_tpu_info().vmem_capacity_bytes)
    except Exception:                      # conservative default (v7x per-core)
        phys_vmem = 64 * 2 ** 20
    vmem_limit = int(min(phys_vmem - 8 * 2 ** 20,
                         max(32 * 2 ** 20, 2 * (in_vmem + out_vmem + inter_vmem))))

    # advisory cost estimate so XLA schedules the glue around a long custom call
    flops = 2 * (n * c1p * c1p + 2 * mp * n * c1p + 2 * n * mp * c1p
                 + n * c1p * c1p + c1p * c1p * c1p + mp * c1p * c1p
                 + mp * c1p * c2p + 2 * mp * mp * c2p + mp * c2p * c2p
                 + pp * mp * c2p + pp * c2p * coutp)
    bytes_accessed = (sum(int(x.size) * x.dtype.itemsize for x in inputs)
                      + pp * coutp * 4)
    cost = pl.CostEstimate(flops=int(flops),
                           transcendentals=int(pp * coutp if sigmoid else 0),
                           bytes_accessed=int(bytes_accessed))

    kernel = functools.partial(hypergraph_motif_kernel, apply_sigmoid=sigmoid)
    # TODO(synk): on v7x (2 TensorCores, 64 MiB VMEM) the Mp^2 GCN contraction
    # and the masked min would benefit from being split into tiled pallas_calls
    # with a "parallel" grid axis; kept as one fused grid=(1,) kernel here
    # because every stage consumes the full output of the previous stage.
    out_pad = pl.pallas_call(
        kernel,
        out_shape=jax.ShapeDtypeStruct((pp, coutp), jnp.float32),
        grid=(1,),
        in_specs=[_in_spec(x.shape) for x in inputs],
        out_specs=_out_spec((pp, coutp)),
        compiler_params=pltpu.CompilerParams(
            dimension_semantics=("arbitrary",),
            vmem_limit_bytes=vmem_limit),
        cost_estimate=cost,
    )(*inputs)
    return out_pad[:num_motifs, :c_out]


# ------------------- pure-JAX reference (PyG-style, scatter-based) -------------------
def reference(params, edge_index, edge_edge_index, motif_edge_index,
              num_nodes, num_edges, num_motifs, sigmoid=False):
    (emb, Wh, bh, Wlin, blin, Wg, bg, Wl2, bl2, Wl3, bl3, Wlo, blo) = params
    src, e = edge_index
    ones = jnp.ones(src.shape[0], jnp.float32)
    D = jax.ops.segment_sum(ones, src, num_nodes)
    D = jnp.where(D > 0, 1.0 / D, 0.0)
    B = jax.ops.segment_sum(ones, e, num_edges)
    B = jnp.where(B > 0, 1.0 / B, 0.0)
    xw = emb @ Wh.T
    out_e = jax.ops.segment_sum(B[e][:, None] * xw[src], e, num_edges)
    out_v = jax.ops.segment_sum(D[src][:, None] * out_e[e], src, num_nodes) + bh
    z = _leaky(out_v)
    G = z.T @ z
    G = _leaky(G @ Wlin.T + blin)
    gath = G[src]
    cnt = jax.ops.segment_sum(ones, e, num_edges)
    Ye = jax.ops.segment_sum(gath, e, num_edges) / jnp.maximum(cnt, 1.0)[:, None]
    s2, d2 = edge_edge_index
    w = jnp.where(s2 != d2, 1.0, 0.0)
    s2 = jnp.concatenate([s2, jnp.arange(num_edges)])
    d2 = jnp.concatenate([d2, jnp.arange(num_edges)])
    w = jnp.concatenate([w, jnp.ones(num_edges)])
    deg = jax.ops.segment_sum(w, d2, num_edges)
    dis = jnp.where(deg > 0, deg ** -0.5, 0.0)
    norm = dis[s2] * w * dis[d2]
    xg = Ye @ Wg.T
    Yg = jax.ops.segment_sum(norm[:, None] * xg[s2], d2, num_edges) + bg
    Y2 = _leaky(Yg @ Wl2.T + bl2)
    ms, md = motif_edge_index
    Ymin = jax.ops.segment_min(Y2[ms], md, num_motifs)
    grp = jax.ops.segment_sum(jnp.ones(ms.shape[0], jnp.float32), md, num_motifs)
    Ymin = jnp.where(grp[:, None] > 0, Ymin, 0.0)   # empty groups -> 0 (matches kernel)
    Y3 = Ymin @ Wl3.T + bl3
    y_out = Y3 @ Wlo.T + blo
    if sigmoid:
        y_out = jax.nn.sigmoid(y_out)
    return y_out


def _init_linear(key, out_c, in_c, scale=0.1):
    kw, kb = jax.random.split(key)
    W = scale * jax.random.normal(kw, (out_c, in_c), jnp.float32)
    b = scale * jax.random.normal(kb, (1, out_c), jnp.float32)
    return W, b


if __name__ == "__main__":
    # small, module-consistent shapes
    N, C1, C2, C3, COUT = 16, 16, 16, 8, 4       # num_nodes, channels_1..out
    M, P = 8, 4                                  # num hyperedges, num motifs

    key = jax.random.PRNGKey(0)
    ks = jax.random.split(key, 10)

    # graph structure (every hyperedge / motif group non-empty)
    members_per_edge = 4
    edge_index = jnp.stack([
        jax.random.randint(ks[0], (M * members_per_edge,), 0, N),
        jnp.repeat(jnp.arange(M), members_per_edge),
    ])
    edge_edge_index = jnp.stack([
        jax.random.randint(ks[1], (16,), 0, M),
        jax.random.randint(ks[2], (16,), 0, M),
    ])
    motif_edge_index = jnp.stack([
        jax.random.randint(ks[3], (P * 3,), 0, M),
        jnp.repeat(jnp.arange(P), 3),
    ])

    # deterministic parameters
    emb = 0.1 * jax.random.normal(ks[4], (N, C1), jnp.float32)   # Node2Vec table
    Wh = 0.1 * jax.random.normal(ks[5], (C1, C1), jnp.float32)   # HypergraphConv.lin
    bh = 0.1 * jax.random.normal(jax.random.fold_in(ks[5], 1), (1, C1), jnp.float32)
    Wlin, blin = _init_linear(ks[6], C1, C1)                     # Node2VecHypergraphConv.linear
    Wg = 0.1 * jax.random.normal(ks[7], (C2, C1), jnp.float32)   # GCNConv.lin
    bg = 0.1 * jax.random.normal(jax.random.fold_in(ks[7], 1), (1, C2), jnp.float32)
    Wl2, bl2 = _init_linear(ks[8], C2, C2)                       # linear_2
    k9a, k9b = jax.random.split(ks[9])
    Wl3, bl3 = _init_linear(k9a, C3, C2)                         # linear_3
    Wlo, blo = _init_linear(k9b, COUT, C3)                       # linear_out
    # TODO(synk): edge_linear_out / aggr_1 sigmoid branch produce values that
    # forward() discards, so they are intentionally not computed.

    params = (emb, Wh, bh, Wlin, blin, Wg, bg, Wl2, bl2, Wl3, bl3, Wlo, blo)

    y = hypergraph_motif_conv_e(params, edge_index, edge_edge_index,
                                motif_edge_index, N, M, P, sigmoid=False)
    y = jax.block_until_ready(y)

    y_ref = reference(params, edge_index, edge_edge_index, motif_edge_index,
                      N, M, P, sigmoid=False)
    np.testing.assert_allclose(np.asarray(y), np.asarray(y_ref),
                               rtol=1e-4, atol=1e-4)
    print("KERNEL_OK")
</pallas_src>

<mosaic_0001>
module attributes {stable_mosaic.version = 11 : i64} {
  func.func @hypergraph_motif_kernel(%arg0: i32, %arg1: memref<16x128xf32, #tpu.memory_space<vmem>>, %arg2: memref<16x128xbf16, #tpu.memory_space<vmem>>, %arg3: memref<128x16xbf16, #tpu.memory_space<vmem>>, %arg4: memref<128x128xbf16, #tpu.memory_space<vmem>>, %arg5: memref<128x128xf32, #tpu.memory_space<vmem>>, %arg6: memref<8x128xf32, #tpu.memory_space<vmem>>, %arg7: memref<16x1xf32, #tpu.memory_space<vmem>>, %arg8: memref<128x1xf32, #tpu.memory_space<vmem>>, %arg9: memref<128x1xf32, #tpu.memory_space<vmem>>, %arg10: memref<8x1xf32, #tpu.memory_space<vmem>>, %arg11: memref<128x128xf32, #tpu.memory_space<vmem>>, %arg12: memref<1x128xf32, #tpu.memory_space<vmem>>, %arg13: memref<128x128xf32, #tpu.memory_space<vmem>>, %arg14: memref<1x128xf32, #tpu.memory_space<vmem>>, %arg15: memref<128x128xf32, #tpu.memory_space<vmem>>, %arg16: memref<1x128xf32, #tpu.memory_space<vmem>>, %arg17: memref<128x128xf32, #tpu.memory_space<vmem>>, %arg18: memref<1x128xf32, #tpu.memory_space<vmem>>, %arg19: memref<128x128xf32, #tpu.memory_space<vmem>>, %arg20: memref<1x128xf32, #tpu.memory_space<vmem>>, %arg21: memref<8x128xf32, #tpu.memory_space<vmem>>) attributes {dimension_semantics = [#tpu.dimension_semantics<arbitrary>], iteration_bounds = array<i64: 1>, scalar_prefetch = 0 : i64, scratch_operands = 0 : i64, tpu.core_type = #tpu.core_type<tc>, window_params = [{pipeline_mode = #tpu.pipeline_mode<synchronous>, transform_indices = @transform_0, window_bounds = array<i64: 16, 128>}, {pipeline_mode = #tpu.pipeline_mode<synchronous>, transform_indices = @transform_1, window_bounds = array<i64: 16, 128>}, {pipeline_mode = #tpu.pipeline_mode<synchronous>, transform_indices = @transform_2, window_bounds = array<i64: 128, 16>}, {pipeline_mode = #tpu.pipeline_mode<synchronous>, transform_indices = @transform_3, window_bounds = array<i64: 128, 128>}, {pipeline_mode = #tpu.pipeline_mode<synchronous>, transform_indices = @transform_4, window_bounds = array<i64: 128, 128>}, {pipeline_mode = #tpu.pipeline_mode<synchronous>, transform_indices = @transform_5, window_bounds = array<i64: 8, 128>}, {pipeline_mode = #tpu.pipeline_mode<synchronous>, transform_indices = @transform_6, window_bounds = array<i64: 16, 1>}, {pipeline_mode = #tpu.pipeline_mode<synchronous>, transform_indices = @transform_7, window_bounds = array<i64: 128, 1>}, {pipeline_mode = #tpu.pipeline_mode<synchronous>, transform_indices = @transform_8, window_bounds = array<i64: 128, 1>}, {pipeline_mode = #tpu.pipeline_mode<synchronous>, transform_indices = @transform_9, window_bounds = array<i64: 8, 1>}, {pipeline_mode = #tpu.pipeline_mode<synchronous>, transform_indices = @transform_10, window_bounds = array<i64: 128, 128>}, {pipeline_mode = #tpu.pipeline_mode<synchronous>, transform_indices = @transform_11, window_bounds = array<i64: 1, 128>}, {pipeline_mode = #tpu.pipeline_mode<synchronous>, transform_indices = @transform_12, window_bounds = array<i64: 128, 128>}, {pipeline_mode = #tpu.pipeline_mode<synchronous>, transform_indices = @transform_13, window_bounds = array<i64: 1, 128>}, {pipeline_mode = #tpu.pipeline_mode<synchronous>, transform_indices = @transform_14, window_bounds = array<i64: 128, 128>}, {pipeline_mode = #tpu.pipeline_mode<synchronous>, transform_indices = @transform_15, window_bounds = array<i64: 1, 128>}, {pipeline_mode = #tpu.pipeline_mode<synchronous>, transform_indices = @transform_16, window_bounds = array<i64: 128, 128>}, {pipeline_mode = #tpu.pipeline_mode<synchronous>, transform_indices = @transform_17, window_bounds = array<i64: 1, 128>}, {pipeline_mode = #tpu.pipeline_mode<synchronous>, transform_indices = @transform_18, window_bounds = array<i64: 128, 128>}, {pipeline_mode = #tpu.pipeline_mode<synchronous>, transform_indices = @transform_19, window_bounds = array<i64: 1, 128>}, {pipeline_mode = #tpu.pipeline_mode<synchronous>, transform_indices = @transform_20, window_bounds = array<i64: 8, 128>}]} {
    %c0 = arith.constant 0 : index
    %c0_0 = arith.constant 0 : index
    %0 = vector.load %arg1[%c0, %c0_0] : memref<16x128xf32, #tpu.memory_space<vmem>>, vector<16x128xf32>
    %c0_1 = arith.constant 0 : index
    %c0_2 = arith.constant 0 : index
    %1 = vector.load %arg11[%c0_1, %c0_2] : memref<128x128xf32, #tpu.memory_space<vmem>>, vector<128x128xf32>
    %cst = arith.constant dense<0.000000e+00> : vector<16x128xf32>
    %2 = tpu.matmul %0, %1, %cst {dimension_numbers = #tpu.dot_dimension_numbers<[1], [1], [0], [0], [0, 0, 1, 0], [], []>} : vector<16x128xf32>, vector<128x128xf32>, vector<16x128xf32> -> vector<16x128xf32>
    %c0_3 = arith.constant 0 : index
    %c0_4 = arith.constant 0 : index
    %3 = vector.load %arg8[%c0_3, %c0_4] : memref<128x1xf32, #tpu.memory_space<vmem>>, vector<128x1xf32>
    %c0_5 = arith.constant 0 : index
    %c0_6 = arith.constant 0 : index
    %4 = vector.load %arg3[%c0_5, %c0_6] : memref<128x16xbf16, #tpu.memory_space<vmem>>, vector<128x16xbf16>
    %5 = arith.truncf %2 : vector<16x128xf32> to vector<16x128xbf16>
    %6 = arith.extf %5 : vector<16x128xbf16> to vector<16x128xf32>
    %7 = arith.subf %2, %6 : vector<16x128xf32>
    %8 = arith.truncf %7 : vector<16x128xf32> to vector<16x128xbf16>
    %cst_7 = arith.constant dense<0.000000e+00> : vector<128x128xf32>
    %9 = tpu.matmul %4, %5, %cst_7 {dimension_numbers = #tpu.dot_dimension_numbers<[1], [0], [0], [1], [0, 0, 1, 1], [], []>} : vector<128x16xbf16>, vector<16x128xbf16>, vector<128x128xf32> -> vector<128x128xf32>
    %cst_8 = arith.constant dense<0.000000e+00> : vector<128x128xf32>
    %10 = tpu.matmul %4, %8, %cst_8 {dimension_numbers = #tpu.dot_dimension_numbers<[1], [0], [0], [1], [0, 0, 1, 1], [], []>} : vector<128x16xbf16>, vector<16x128xbf16>, vector<128x128xf32> -> vector<128x128xf32>
    %11 = arith.addf %9, %10 : vector<128x128xf32>
    %12 = vector.broadcast %3 : vector<128x1xf32> to vector<128x128xf32>
    %13 = arith.mulf %12, %11 : vector<128x128xf32>
    %c0_9 = arith.constant 0 : index
    %c0_10 = arith.constant 0 : index
    %14 = vector.load %arg7[%c0_9, %c0_10] : memref<16x1xf32, #tpu.memory_space<vmem>>, vector<16x1xf32>
    %c0_11 = arith.constant 0 : index
    %c0_12 = arith.constant 0 : index
    %15 = vector.load %arg2[%c0_11, %c0_12] : memref<16x128xbf16, #tpu.memory_space<vmem>>, vector<16x128xbf16>
    %16 = arith.truncf %13 : vector<128x128xf32> to vector<128x128xbf16>
    %17 = arith.extf %16 : vector<128x128xbf16> to vector<128x128xf32>
    %18 = arith.subf %13, %17 : vector<128x128xf32>
    %19 = arith.truncf %18 : vector<128x128xf32> to vector<128x128xbf16>
    %cst_13 = arith.constant dense<0.000000e+00> : vector<16x128xf32>
    %20 = tpu.matmul %15, %16, %cst_13 {dimension_numbers = #tpu.dot_dimension_numbers<[1], [0], [0], [1], [0, 0, 1, 1], [], []>} : vector<16x128xbf16>, vector<128x128xbf16>, vector<16x128xf32> -> vector<16x128xf32>
    %cst_14 = arith.constant dense<0.000000e+00> : vector<16x128xf32>
    %21 = tpu.matmul %15, %19, %cst_14 {dimension_numbers = #tpu.dot_dimension_numbers<[1], [0], [0], [1], [0, 0, 1, 1], [], []>} : vector<16x128xbf16>, vector<128x128xbf16>, vector<16x128xf32> -> vector<16x128xf32>
    %22 = arith.addf %20, %21 : vector<16x128xf32>
    %23 = vector.broadcast %14 : vector<16x1xf32> to vector<16x128xf32>
    %24 = arith.mulf %23, %22 : vector<16x128xf32>
    %c0_15 = arith.constant 0 : index
    %c0_16 = arith.constant 0 : index
    %25 = vector.load %arg12[%c0_15, %c0_16] : memref<1x128xf32, #tpu.memory_space<vmem>>, vector<1x128xf32>
    %26 = vector.broadcast %25 : vector<1x128xf32> to vector<16x128xf32>
    %27 = arith.addf %24, %26 : vector<16x128xf32>
    %cst_17 = arith.constant 0.000000e+00 : f32
    %28 = vector.broadcast %cst_17 : f32 to vector<16x128xf32>
    %29 = arith.cmpf ogt, %27, %28 : vector<16x128xf32>
    %cst_18 = arith.constant 0.00999999977 : f32
    %30 = vector.broadcast %cst_18 : f32 to vector<16x128xf32>
    %31 = arith.mulf %30, %27 : vector<16x128xf32>
    %32 = arith.select %29, %27, %31 : vector<16x128xi1>, vector<16x128xf32>
    %cst_19 = arith.constant dense<0.000000e+00> : vector<128x128xf32>
    %33 = tpu.matmul %32, %32, %cst_19 {dimension_numbers = #tpu.dot_dimension_numbers<[0], [0], [1], [1], [0, 1, 1, 1], [], []>} : vector<16x128xf32>, vector<16x128xf32>, vector<128x128xf32> -> vector<128x128xf32>
    %c0_20 = arith.constant 0 : index
    %c0_21 = arith.constant 0 : index
    %34 = vector.load %arg13[%c0_20, %c0_21] : memref<128x128xf32, #tpu.memory_space<vmem>>, vector<128x128xf32>
    %cst_22 = arith.constant dense<0.000000e+00> : vector<128x128xf32>
    %35 = tpu.matmul %33, %34, %cst_22 {dimension_numbers = #tpu.dot_dimension_numbers<[1], [1], [0], [0], [0, 0, 1, 0], [], []>} : vector<128x128xf32>, vector<128x128xf32>, vector<128x128xf32> -> vector<128x128xf32>
    %c0_23 = arith.constant 0 : index
    %c0_24 = arith.constant 0 : index
    %36 = vector.load %arg14[%c0_23, %c0_24] : memref<1x128xf32, #tpu.memory_space<vmem>>, vector<1x128xf32>
    %37 = vector.broadcast %36 : vector<1x128xf32> to vector<128x128xf32>
    %38 = arith.addf %35, %37 : vector<128x128xf32>
    %cst_25 = arith.constant 0.000000e+00 : f32
    %39 = vector.broadcast %cst_25 : f32 to vector<128x128xf32>
    %40 = arith.cmpf ogt, %38, %39 : vector<128x128xf32>
    %cst_26 = arith.constant 0.00999999977 : f32
    %41 = vector.broadcast %cst_26 : f32 to vector<128x128xf32>
    %42 = arith.mulf %41, %38 : vector<128x128xf32>
    %43 = arith.select %40, %38, %42 : vector<128x128xi1>, vector<128x128xf32>
    %c0_27 = arith.constant 0 : index
    %c0_28 = arith.constant 0 : index
    %44 = vector.load %arg5[%c0_27, %c0_28] : memref<128x128xf32, #tpu.memory_space<vmem>>, vector<128x128xf32>
    %cst_29 = arith.constant dense<0.000000e+00> : vector<128x128xf32>
    %45 = tpu.matmul %44, %43, %cst_29 {dimension_numbers = #tpu.dot_dimension_numbers<[1], [0], [0], [1], [0, 0, 1, 1], [], []>} : vector<128x128xf32>, vector<128x128xf32>, vector<128x128xf32> -> vector<128x128xf32>
    %c0_30 = arith.constant 0 : index
    %c0_31 = arith.constant 0 : index
    %46 = vector.load %arg15[%c0_30, %c0_31] : memref<128x128xf32, #tpu.memory_space<vmem>>, vector<128x128xf32>
    %cst_32 = arith.constant dense<0.000000e+00> : vector<128x128xf32>
    %47 = tpu.matmul %45, %46, %cst_32 {dimension_numbers = #tpu.dot_dimension_numbers<[1], [1], [0], [0], [0, 0, 1, 0], [], []>} : vector<128x128xf32>, vector<128x128xf32>, vector<128x128xf32> -> vector<128x128xf32>
    %c0_33 = arith.constant 0 : index
    %c0_34 = arith.constant 0 : index
    %48 = vector.load %arg9[%c0_33, %c0_34] : memref<128x1xf32, #tpu.memory_space<vmem>>, vector<128x1xf32>
    %c0_35 = arith.constant 0 : index
    %c0_36 = arith.constant 0 : index
    %49 = vector.load %arg4[%c0_35, %c0_36] : memref<128x128xbf16, #tpu.memory_space<vmem>>, vector<128x128xbf16>
    %50 = vector.broadcast %48 : vector<128x1xf32> to vector<128x128xf32>
    %51 = arith.mulf %50, %47 : vector<128x128xf32>
    %52 = arith.truncf %51 : vector<128x128xf32> to vector<128x128xbf16>
    %53 = arith.extf %52 : vector<128x128xbf16> to vector<128x128xf32>
    %54 = arith.subf %51, %53 : vector<128x128xf32>
    %55 = arith.truncf %54 : vector<128x128xf32> to vector<128x128xbf16>
    %cst_37 = arith.constant dense<0.000000e+00> : vector<128x128xf32>
    %56 = tpu.matmul %49, %52, %cst_37 {dimension_numbers = #tpu.dot_dimension_numbers<[1], [0], [0], [1], [0, 0, 1, 1], [], []>} : vector<128x128xbf16>, vector<128x128xbf16>, vector<128x128xf32> -> vector<128x128xf32>
    %cst_38 = arith.constant dense<0.000000e+00> : vector<128x128xf32>
    %57 = tpu.matmul %49, %55, %cst_38 {dimension_numbers = #tpu.dot_dimension_numbers<[1], [0], [0], [1], [0, 0, 1, 1], [], []>} : vector<128x128xbf16>, vector<128x128xbf16>, vector<128x128xf32> -> vector<128x128xf32>
    %58 = arith.addf %56, %57 : vector<128x128xf32>
    %59 = vector.broadcast %48 : vector<128x1xf32> to vector<128x128xf32>
    %60 = arith.mulf %59, %58 : vector<128x128xf32>
    %c0_39 = arith.constant 0 : index
    %c0_40 = arith.constant 0 : index
    %61 = vector.load %arg16[%c0_39, %c0_40] : memref<1x128xf32, #tpu.memory_space<vmem>>, vector<1x128xf32>
    %62 = vector.broadcast %61 : vector<1x128xf32> to vector<128x128xf32>
    %63 = arith.addf %60, %62 : vector<128x128xf32>
    %c0_41 = arith.constant 0 : index
    %c0_42 = arith.constant 0 : index
    %64 = vector.load %arg17[%c0_41, %c0_42] : memref<128x128xf32, #tpu.memory_space<vmem>>, vector<128x128xf32>
    %cst_43 = arith.constant dense<0.000000e+00> : vector<128x128xf32>
    %65 = tpu.matmul %63, %64, %cst_43 {dimension_numbers = #tpu.dot_dimension_numbers<[1], [1], [0], [0], [0, 0, 1, 0], [], []>} : vector<128x128xf32>, vector<128x128xf32>, vector<128x128xf32> -> vector<128x128xf32>
    %c0_44 = arith.constant 0 : index
    %c0_45 = arith.constant 0 : index
    %66 = vector.load %arg18[%c0_44, %c0_45] : memref<1x128xf32, #tpu.memory_space<vmem>>, vector<1x128xf32>
    %67 = vector.broadcast %66 : vector<1x128xf32> to vector<128x128xf32>
    %68 = arith.addf %65, %67 : vector<128x128xf32>
    %cst_46 = arith.constant 0.000000e+00 : f32
    %69 = vector.broadcast %cst_46 : f32 to vector<128x128xf32>
    %70 = arith.cmpf ogt, %68, %69 : vector<128x128xf32>
    %cst_47 = arith.constant 0.00999999977 : f32
    %71 = vector.broadcast %cst_47 : f32 to vector<128x128xf32>
    %72 = arith.mulf %71, %68 : vector<128x128xf32>
    %73 = arith.select %70, %68, %72 : vector<128x128xi1>, vector<128x128xf32>
    %c0_48 = arith.constant 0 : index
    %c0_49 = arith.constant 0 : index
    %74 = vector.load %arg6[%c0_48, %c0_49] : memref<8x128xf32, #tpu.memory_space<vmem>>, vector<8x128xf32>
    %cst_50 = arith.constant 3.000000e+38 : f32
    %75 = vector.broadcast %cst_50 : f32 to vector<8x128xf32>
    %76 = vector.shape_cast %74 : vector<8x128xf32> to vector<8x128x1xf32>
    %77 = vector.shape_cast %73 : vector<128x128xf32> to vector<1x128x128xf32>
    %78 = vector.broadcast %76 : vector<8x128x1xf32> to vector<8x128x128xf32>
    %79 = vector.broadcast %77 : vector<1x128x128xf32> to vector<8x128x128xf32>
    %80 = arith.addf %78, %79 : vector<8x128x128xf32>
    %cst_51 = arith.constant dense<0x7F800000> : vector<8x128xf32>
    %81 = vector.multi_reduction <minimumf>, %80, %cst_51 [1] : vector<8x128x128xf32> to vector<8x128xf32>
    %82 = arith.minimumf %75, %81 : vector<8x128xf32>
    %c0_52 = arith.constant 0 : index
    %c0_53 = arith.constant 0 : index
    %83 = vector.load %arg10[%c0_52, %c0_53] : memref<8x1xf32, #tpu.memory_space<vmem>>, vector<8x1xf32>
    %cst_54 = arith.constant 5.000000e-01 : f32
    %84 = vector.broadcast %cst_54 : f32 to vector<8x1xf32>
    %85 = arith.cmpf ogt, %83, %84 : vector<8x1xf32>
    %cst_55 = arith.constant 0.000000e+00 : f32
    %86 = vector.shape_cast %85 : vector<8x1xi1> to vector<8x1xi1>
    %87 = vector.broadcast %86 : vector<8x1xi1> to vector<8x128xi1>
    %88 = vector.broadcast %cst_55 : f32 to vector<8x128xf32>
    %89 = arith.select %87, %82, %88 : vector<8x128xi1>, vector<8x128xf32>
    %c0_56 = arith.constant 0 : index
    %c0_57 = arith.constant 0 : index
    %90 = vector.load %arg19[%c0_56, %c0_57] : memref<128x128xf32, #tpu.memory_space<vmem>>, vector<128x128xf32>
    %cst_58 = arith.constant dense<0.000000e+00> : vector<8x128xf32>
    %91 = tpu.matmul %89, %90, %cst_58 {dimension_numbers = #tpu.dot_dimension_numbers<[1], [1], [0], [0], [0, 0, 1, 0], [], []>} : vector<8x128xf32>, vector<128x128xf32>, vector<8x128xf32> -> vector<8x128xf32>
    %c0_59 = arith.constant 0 : index
    %c0_60 = arith.constant 0 : index
    %92 = vector.load %arg20[%c0_59, %c0_60] : memref<1x128xf32, #tpu.memory_space<vmem>>, vector<1x128xf32>
    %93 = vector.broadcast %92 : vector<1x128xf32> to vector<8x128xf32>
    %94 = arith.addf %91, %93 : vector<8x128xf32>
    %c0_61 = arith.constant 0 : index
    %c0_62 = arith.constant 0 : index
    %95 = vector.load %arg21[%c0_61, %c0_62] : memref<8x128xf32, #tpu.memory_space<vmem>>, vector<8x128xf32>
    tpu.vector_store %arg21[%c0_61, %c0_62], %94 {strides = array<i32>} : memref<8x128xf32, #tpu.memory_space<vmem>>, vector<8x128xf32>,
    return
  }
  func.func @transform_0(%arg0: i32) -> (i32, i32) {
    %c0_i32 = arith.constant 0 : i32
    %c0_i32_0 = arith.constant 0 : i32
    %c0_i32_1 = arith.constant 0 : i32
    return %c0_i32, %c0_i32_0 : i32, i32
  }
  func.func @transform_1(%arg0: i32) -> (i32, i32) {
    %c0_i32 = arith.constant 0 : i32
    %c0_i32_0 = arith.constant 0 : i32
    %c0_i32_1 = arith.constant 0 : i32
    return %c0_i32, %c0_i32_0 : i32, i32
  }
  func.func @transform_2(%arg0: i32) -> (i32, i32) {
    %c0_i32 = arith.constant 0 : i32
    %c0_i32_0 = arith.constant 0 : i32
    %c0_i32_1 = arith.constant 0 : i32
    return %c0_i32, %c0_i32_0 : i32, i32
  }
  func.func @transform_3(%arg0: i32) -> (i32, i32) {
    %c0_i32 = arith.constant 0 : i32
    %c0_i32_0 = arith.constant 0 : i32
    %c0_i32_1 = arith.constant 0 : i32
    return %c0_i32, %c0_i32_0 : i32, i32
  }
  func.func @transform_4(%arg0: i32) -> (i32, i32) {
    %c0_i32 = arith.constant 0 : i32
    %c0_i32_0 = arith.constant 0 : i32
    %c0_i32_1 = arith.constant 0 : i32
    return %c0_i32, %c0_i32_0 : i32, i32
  }
  func.func @transform_5(%arg0: i32) -> (i32, i32) {
    %c0_i32 = arith.constant 0 : i32
    %c0_i32_0 = arith.constant 0 : i32
    %c0_i32_1 = arith.constant 0 : i32
    return %c0_i32, %c0_i32_0 : i32, i32
  }
  func.func @transform_6(%arg0: i32) -> (i32, i32) {
    %c0_i32 = arith.constant 0 : i32
    %c0_i32_0 = arith.constant 0 : i32
    %c0_i32_1 = arith.constant 0 : i32
    return %c0_i32, %c0_i32_0 : i32, i32
  }
  func.func @transform_7(%arg0: i32) -> (i32, i32) {
    %c0_i32 = arith.constant 0 : i32
    %c0_i32_0 = arith.constant 0 : i32
    %c0_i32_1 = arith.constant 0 : i32
    return %c0_i32, %c0_i32_0 : i32, i32
  }
  func.func @transform_8(%arg0: i32) -> (i32, i32) {
    %c0_i32 = arith.constant 0 : i32
    %c0_i32_0 = arith.constant 0 : i32
    %c0_i32_1 = arith.constant 0 : i32
    return %c0_i32, %c0_i32_0 : i32, i32
  }
  func.func @transform_9(%arg0: i32) -> (i32, i32) {
    %c0_i32 = arith.constant 0 : i32
    %c0_i32_0 = arith.constant 0 : i32
    %c0_i32_1 = arith.constant 0 : i32
    return %c0_i32, %c0_i32_0 : i32, i32
  }
  func.func @transform_10(%arg0: i32) -> (i32, i32) {
    %c0_i32 = arith.constant 0 : i32
    %c0_i32_0 = arith.constant 0 : i32
    %c0_i32_1 = arith.constant 0 : i32
    return %c0_i32, %c0_i32_0 : i32, i32
  }
  func.func @transform_11(%arg0: i32) -> (i32, i32) {
    %c0_i32 = arith.constant 0 : i32
    %c0_i32_0 = arith.constant 0 : i32
    %c0_i32_1 = arith.constant 0 : i32
    return %c0_i32, %c0_i32_0 : i32, i32
  }
  func.func @transform_12(%arg0: i32) -> (i32, i32) {
    %c0_i32 = arith.constant 0 : i32
    %c0_i32_0 = arith.constant 0 : i32
    %c0_i32_1 = arith.constant 0 : i32
    return %c0_i32, %c0_i32_0 : i32, i32
  }
  func.func @transform_13(%arg0: i32) -> (i32, i32) {
    %c0_i32 = arith.constant 0 : i32
    %c0_i32_0 = arith.constant 0 : i32
    %c0_i32_1 = arith.constant 0 : i32
    return %c0_i32, %c0_i32_0 : i32, i32
  }
  func.func @transform_14(%arg0: i32) -> (i32, i32) {
    %c0_i32 = arith.constant 0 : i32
    %c0_i32_0 = arith.constant 0 : i32
    %c0_i32_1 = arith.constant 0 : i32
    return %c0_i32, %c0_i32_0 : i32, i32
  }
  func.func @transform_15(%arg0: i32) -> (i32, i32) {
    %c0_i32 = arith.constant 0 : i32
    %c0_i32_0 = arith.constant 0 : i32
    %c0_i32_1 = arith.constant 0 : i32
    return %c0_i32, %c0_i32_0 : i32, i32
  }
  func.func @transform_16(%arg0: i32) -> (i32, i32) {
    %c0_i32 = arith.constant 0 : i32
    %c0_i32_0 = arith.constant 0 : i32
    %c0_i32_1 = arith.constant 0 : i32
    return %c0_i32, %c0_i32_0 : i32, i32
  }
  func.func @transform_17(%arg0: i32) -> (i32, i32) {
    %c0_i32 = arith.constant 0 : i32
    %c0_i32_0 = arith.constant 0 : i32
    %c0_i32_1 = arith.constant 0 : i32
    return %c0_i32, %c0_i32_0 : i32, i32
  }
  func.func @transform_18(%arg0: i32) -> (i32, i32) {
    %c0_i32 = arith.constant 0 : i32
    %c0_i32_0 = arith.constant 0 : i32
    %c0_i32_1 = arith.constant 0 : i32
    return %c0_i32, %c0_i32_0 : i32, i32
  }
  func.func @transform_19(%arg0: i32) -> (i32, i32) {
    %c0_i32 = arith.constant 0 : i32
    %c0_i32_0 = arith.constant 0 : i32
    %c0_i32_1 = arith.constant 0 : i32
    return %c0_i32, %c0_i32_0 : i32, i32
  }
  func.func @transform_20(%arg0: i32) -> (i32, i32) {
    %c0_i32 = arith.constant 0 : i32
    %c0_i32_0 = arith.constant 0 : i32
    %c0_i32_1 = arith.constant 0 : i32
    return %c0_i32, %c0_i32_0 : i32, i32
  }
}

</mosaic_0001>

<llo_original>
// kernel: tpu_custom_call.1
$region0: #{tpu_custom_call.1}
  #allocation0 [shape = 'u32[]', space=smem, size = 0x4, offset = 0x4, fixed_abs, tag = 'smem constant byte address 0x4 - core index']
  #allocation1 [shape = 'u32[72,128]{1,0:T(1,128)}', space=vmem, size = 0x9000, scoped, tag = 'internal scratch']
  %s0 = inlined_call_operand.vmem [shape: f32[16,128], index: 0, kind: input, shape index: {}]
  %s1 = inlined_call_operand.vmem [shape: bf16[16,128], index: 1, kind: input, shape index: {}]
  %s2 = inlined_call_operand.vmem [shape: bf16[128,16], index: 2, kind: input, shape index: {}]
  %s3 = inlined_call_operand.vmem [shape: bf16[128,128], index: 3, kind: input, shape index: {}]
  %s4 = inlined_call_operand.vmem [shape: f32[128,128], index: 4, kind: input, shape index: {}]
  %s5 = inlined_call_operand.hbm [shape: f32[8,128], index: 5, kind: input, shape index: {}]
  %s6 = inlined_call_operand.vmem [shape: f32[16,1], index: 6, kind: input, shape index: {}]
  %s7 = inlined_call_operand.vmem [shape: f32[128,1], index: 7, kind: input, shape index: {}]
  %s8 = inlined_call_operand.vmem [shape: f32[128,1], index: 8, kind: input, shape index: {}]
  %s9 = inlined_call_operand.vmem [shape: f32[8,1], index: 9, kind: input, shape index: {}]
  %s10 = inlined_call_operand.vmem [shape: f32[128,128], index: 10, kind: input, shape index: {}]
  %s11 = inlined_call_operand.vmem [shape: f32[1,128], index: 11, kind: input, shape index: {}]
  %s12 = inlined_call_operand.hbm [shape: f32[128,128], index: 12, kind: input, shape index: {}]
  %s13 = inlined_call_operand.vmem [shape: f32[1,128], index: 13, kind: input, shape index: {}]
  %s14 = inlined_call_operand.hbm [shape: f32[128,128], index: 14, kind: input, shape index: {}]
  %s15 = inlined_call_operand.vmem [shape: f32[1,128], index: 15, kind: input, shape index: {}]
  %s16 = inlined_call_operand.hbm [shape: f32[128,128], index: 16, kind: input, shape index: {}]
  %s17 = inlined_call_operand.vmem [shape: f32[1,128], index: 17, kind: input, shape index: {}]
  %s18 = inlined_call_operand.hbm [shape: f32[128,128], index: 18, kind: input, shape index: {}]
  %s19 = inlined_call_operand.vmem [shape: f32[1,128], index: 19, kind: input, shape index: {}]
  %s20 = inlined_call_operand.hbm [shape: f32[8,128], index: 20, kind: output, shape index: {}]
  %s21 = sld [smem:[#allocation0]]
  $region110: #{tpu_custom_call.1} parent=0
    _
  %s23 = ssub.s32 1, %s21
  %s24 = scalar_select 0, %s23, %s21
  $region1: #{tpu_custom_call.1} parent=0
    #allocation2 [shape = 'u8[4096]{0}', space=vmem, size = 0x1000, scoped, tag = 'input window, operand 5, single buffered']
    #allocation3 [shape = 's32[1]{0}', space=sflag, size = 0x4, scoped, tag = 'scoped memory for tpu_custom_call.1']
    #allocation4 [shape = 's32[1]{0}', space=sflag, size = 0x4, scoped, tag = 'scoped memory for tpu_custom_call.1']
    #allocation5 [shape = 'u8[65536]{0}', space=vmem, size = 0x10000, scoped, tag = 'input window, operand 12, single buffered']
    #allocation6 [shape = 's32[1]{0}', space=sflag, size = 0x4, scoped, tag = 'scoped memory for tpu_custom_call.1']
    #allocation7 [shape = 'u8[65536]{0}', space=vmem, size = 0x10000, scoped, tag = 'input window, operand 14, single buffered']
    #allocation8 [shape = 'u8[65536]{0}', space=vmem, size = 0x10000, scoped, tag = 'input window, operand 16, single buffered']
    #allocation9 [shape = 's32[1]{0}', space=sflag, size = 0x4, scoped, tag = 'scoped memory for tpu_custom_call.1']
    #allocation10 [shape = 'u8[65536]{0}', space=vmem, size = 0x10000, scoped, tag = 'input window, operand 18, single buffered']
    #allocation11 [shape = 'u8[4096]{0}', space=vmem, size = 0x1000, scoped, tag = 'output window, operand 0, single buffered']
    %25 = vsyncpa [#allocation3], 0
    %26 = vsyncpa [#allocation6], 0
    %27 = vsyncpa [#allocation9], 0
    %28 = vsyncpa [#allocation4], 0
    // Predicated region
    $region2: #{tpu_custom_call.1} parent=1 // pred_check
      _
    $region3: #{tpu_custom_call.1} parent=1 // pred_check_branch
      %30 = sbr.rel (0) target = $region5
    $region4: #{tpu_custom_call.1} parent=1 // pred_region
      _
    $region5: #{tpu_custom_call.1} parent=1 // pred_fallthru
      _
    // Predicated region
    $region6: #{tpu_custom_call.1} parent=1 // pred_check
      _
    $region7: #{tpu_custom_call.1} parent=1 // pred_check_branch
      %32 = sbr.rel (0) target = $region9
    $region8: #{tpu_custom_call.1} parent=1 // pred_region
      _
    $region9: #{tpu_custom_call.1} parent=1 // pred_fallthru
      _
    // Predicated region
    $region10: #{tpu_custom_call.1} parent=1 // pred_check
      _
    $region11: #{tpu_custom_call.1} parent=1 // pred_check_branch
      %34 = sbr.rel (0) target = $region13
    $region12: #{tpu_custom_call.1} parent=1 // pred_region
      _
    $region13: #{tpu_custom_call.1} parent=1 // pred_fallthru
      _
    // Predicated region
    $region14: #{tpu_custom_call.1} parent=1 // pred_check
      _
    $region15: #{tpu_custom_call.1} parent=1 // pred_check_branch
      %36 = sbr.rel (0) target = $region17
    $region16: #{tpu_custom_call.1} parent=1 // pred_region
      _
    $region17: #{tpu_custom_call.1} parent=1 // pred_fallthru
      _
    // Predicated region
    $region18: #{tpu_custom_call.1} parent=1 // pred_check
      _
    $region19: #{tpu_custom_call.1} parent=1 // pred_check_branch
      %38 = sbr.rel (0) target = $region21
    $region20: #{tpu_custom_call.1} parent=1 // pred_region
      _
    $region21: #{tpu_custom_call.1} parent=1 // pred_fallthru
      _
    // Predicated region
    $region22: #{tpu_custom_call.1} parent=1 // pred_check
      _
    $region23: #{tpu_custom_call.1} parent=1 // pred_check_branch
      %40 = sbr.rel (0) target = $region25
    $region24: #{tpu_custom_call.1} parent=1 // pred_region
      %42 = vsyncadd [#allocation3], 0
      %s44 = sshll.u32 %s5, 4
      %s45 = int_to_ptr.hbm [resolvable:$true] %s44
      %s46 = sshll.u32 [#allocation2], 4
      %s47 = int_to_ptr.vmem [resolvable:$true] %s46
      %49 = dma.hbm_to_vmem [thread:$0]  %s45, 128, %s47, [#allocation3]
    $region25: #{tpu_custom_call.1} parent=1 // pred_fallthru
      _
    // Predicated region
    $region26: #{tpu_custom_call.1} parent=1 // pred_check
      _
    $region27: #{tpu_custom_call.1} parent=1 // pred_check_branch
      %51 = sbr.rel (0) target = $region29
    $region28: #{tpu_custom_call.1} parent=1 // pred_region
      _
    $region29: #{tpu_custom_call.1} parent=1 // pred_fallthru
      _
    // Predicated region
    $region30: #{tpu_custom_call.1} parent=1 // pred_check
      _
    $region31: #{tpu_custom_call.1} parent=1 // pred_check_branch
      %53 = sbr.rel (0) target = $region33
    $region32: #{tpu_custom_call.1} parent=1 // pred_region
      _
    $region33: #{tpu_custom_call.1} parent=1 // pred_fallthru
      _
    // Predicated region
    $region34: #{tpu_custom_call.1} parent=1 // pred_check
      _
    $region35: #{tpu_custom_call.1} parent=1 // pred_check_branch
      %55 = sbr.rel (0) target = $region37
    $region36: #{tpu_custom_call.1} parent=1 // pred_region
      _
    $region37: #{tpu_custom_call.1} parent=1 // pred_fallthru
      _
    // Predicated region
    $region38: #{tpu_custom_call.1} parent=1 // pred_check
      _
    $region39: #{tpu_custom_call.1} parent=1 // pred_check_branch
      %57 = sbr.rel (0) target = $region41
    $region40: #{tpu_custom_call.1} parent=1 // pred_region
      _
    $region41: #{tpu_custom_call.1} parent=1 // pred_fallthru
      _
    // Predicated region
    $region42: #{tpu_custom_call.1} parent=1 // pred_check
      _
    $region43: #{tpu_custom_call.1} parent=1 // pred_check_branch
      %59 = sbr.rel (0) target = $region45
    $region44: #{tpu_custom_call.1} parent=1 // pred_region
      _
    $region45: #{tpu_custom_call.1} parent=1 // pred_fallthru
      _
    // Predicated region
    $region46: #{tpu_custom_call.1} parent=1 // pred_check
      _
    $region47: #{tpu_custom_call.1} parent=1 // pred_check_branch
      %61 = sbr.rel (0) target = $region49
    $region48: #{tpu_custom_call.1} parent=1 // pred_region
      _
    $region49: #{tpu_custom_call.1} parent=1 // pred_fallthru
      _
    // Predicated region
    $region50: #{tpu_custom_call.1} parent=1 // pred_check
      _
    $region51: #{tpu_custom_call.1} parent=1 // pred_check_branch
      %63 = sbr.rel (0) target = $region53
    $region52: #{tpu_custom_call.1} parent=1 // pred_region
      %65 = vsyncadd [#allocation6], 0
      %s66 = sshll.u32 %s12, 4
      %s67 = int_to_ptr.hbm [resolvable:$true] %s66
      %s68 = sshll.u32 [#allocation5], 4
      %s69 = int_to_ptr.vmem [resolvable:$true] %s68
      %74 = dma.hbm_to_vmem [thread:$0]  %s67, 2048, %s69, [#allocation6], 128, 128, 8
    $region53: #{tpu_custom_call.1} parent=1 // pred_fallthru
      _
    // Predicated region
    $region54: #{tpu_custom_call.1} parent=1 // pred_check
      _
    $region55: #{tpu_custom_call.1} parent=1 // pred_check_branch
      %76 = sbr.rel (0) target = $region57
    $region56: #{tpu_custom_call.1} parent=1 // pred_region
      _
    $region57: #{tpu_custom_call.1} parent=1 // pred_fallthru
      _
    // Predicated region
    $region58: #{tpu_custom_call.1} parent=1 // pred_check
      _
    $region59: #{tpu_custom_call.1} parent=1 // pred_check_branch
      %78 = sbr.rel (0) target = $region61
    $region60: #{tpu_custom_call.1} parent=1 // pred_region
      %80 = vsyncadd [#allocation6], 0
      %s81 = sshll.u32 %s14, 4
      %s82 = int_to_ptr.hbm [resolvable:$true] %s81
      %s83 = sshll.u32 [#allocation7], 4
      %s84 = int_to_ptr.vmem [resolvable:$true] %s83
      %89 = dma.hbm_to_vmem [thread:$0]  %s82, 2048, %s84, [#allocation6], 128, 128, 8
    $region61: #{tpu_custom_call.1} parent=1 // pred_fallthru
      _
    // Predicated region
    $region62: #{tpu_custom_call.1} parent=1 // pred_check
      _
    $region63: #{tpu_custom_call.1} parent=1 // pred_check_branch
      %91 = sbr.rel (0) target = $region65
    $region64: #{tpu_custom_call.1} parent=1 // pred_region
      _
    $region65: #{tpu_custom_call.1} parent=1 // pred_fallthru
      _
    // Predicated region
    $region66: #{tpu_custom_call.1} parent=1 // pred_check
      _
    $region67: #{tpu_custom_call.1} parent=1 // pred_check_branch
      %93 = sbr.rel (0) target = $region69
    $region68: #{tpu_custom_call.1} parent=1 // pred_region
      %95 = vsyncadd [#allocation9], 0
      %s96 = sshll.u32 %s16, 4
      %s97 = int_to_ptr.hbm [resolvable:$true] %s96
      %s98 = sshll.u32 [#allocation8], 4
      %s99 = int_to_ptr.vmem [resolvable:$true] %s98
      %104 = dma.hbm_to_vmem [thread:$0]  %s97, 2048, %s99, [#allocation9], 128, 128, 8
    $region69: #{tpu_custom_call.1} parent=1 // pred_fallthru
      _
    // Predicated region
    $region70: #{tpu_custom_call.1} parent=1 // pred_check
      _
    $region71: #{tpu_custom_call.1} parent=1 // pred_check_branch
      %106 = sbr.rel (0) target = $region73
    $region72: #{tpu_custom_call.1} parent=1 // pred_region
      _
    $region73: #{tpu_custom_call.1} parent=1 // pred_fallthru
      _
    // Predicated region
    $region74: #{tpu_custom_call.1} parent=1 // pred_check
      _
    $region75: #{tpu_custom_call.1} parent=1 // pred_check_branch
      %108 = sbr.rel (0) target = $region77
    $region76: #{tpu_custom_call.1} parent=1 // pred_region
      %110 = vsyncadd [#allocation9], 0
      %s111 = sshll.u32 %s18, 4
      %s112 = int_to_ptr.hbm [resolvable:$true] %s111
      %s113 = sshll.u32 [#allocation10], 4
      %s114 = int_to_ptr.vmem [resolvable:$true] %s113
      %119 = dma.hbm_to_vmem [thread:$0]  %s112, 2048, %s114, [#allocation9], 128, 128, 8
    $region77: #{tpu_custom_call.1} parent=1 // pred_fallthru
      _
    // Predicated region
    $region78: #{tpu_custom_call.1} parent=1 // pred_check
      _
    $region79: #{tpu_custom_call.1} parent=1 // pred_check_branch
      %121 = sbr.rel (0) target = $region81
    $region80: #{tpu_custom_call.1} parent=1 // pred_region
      _
    $region81: #{tpu_custom_call.1} parent=1 // pred_fallthru
      _
    // Predicated region
    $region82: #{tpu_custom_call.1} parent=1 // pred_check
      _
    $region83: #{tpu_custom_call.1} parent=1 // pred_check_branch
      %123 = sbr.rel (0) target = $region85
    $region84: #{tpu_custom_call.1} parent=1 // pred_region
      %125 = dma.done [#allocation3], 128
    $region85: #{tpu_custom_call.1} parent=1 // pred_fallthru
      _
    // Predicated region
    $region86: #{tpu_custom_call.1} parent=1 // pred_check
      _
    $region87: #{tpu_custom_call.1} parent=1 // pred_check_branch
      %127 = sbr.rel (0) target = $region89
    $region88: #{tpu_custom_call.1} parent=1 // pred_region
      %129 = dma.done [#allocation6], 2048
    $region89: #{tpu_custom_call.1} parent=1 // pred_fallthru
      _
    // Predicated region
    $region90: #{tpu_custom_call.1} parent=1 // pred_check
      _
    $region91: #{tpu_custom_call.1} parent=1 // pred_check_branch
      %131 = sbr.rel (0) target = $region93
    $region92: #{tpu_custom_call.1} parent=1 // pred_region
      %133 = dma.done [#allocation6], 2048
    $region93: #{tpu_custom_call.1} parent=1 // pred_fallthru
      _
    // Predicated region
    $region94: #{tpu_custom_call.1} parent=1 // pred_check
      _
    $region95: #{tpu_custom_call.1} parent=1 // pred_check_branch
      %135 = sbr.rel (0) target = $region97
    $region96: #{tpu_custom_call.1} parent=1 // pred_region
      %137 = dma.done [#allocation9], 2048
    $region97: #{tpu_custom_call.1} parent=1 // pred_fallthru
      _
    // Predicated region
    $region98: #{tpu_custom_call.1} parent=1 // pred_check
      _
    $region99: #{tpu_custom_call.1} parent=1 // pred_check_branch
      %139 = sbr.rel (0) target = $region101
    $region100: #{tpu_custom_call.1} parent=1 // pred_region
      %141 = dma.done [#allocation9], 2048
    $region101: #{tpu_custom_call.1} parent=1 // pred_fallthru
      _
    %v143 = vld [vmem:[%s0] sm:$0xff]
    %v144 = vld [vmem:[%s0 + $0x8] sm:$0xff]
    %v145 = vld [vmem:[%s10] sm:$0xff]
    %v146 = vld [vmem:[%s10 + $0x8] sm:$0xff]
    %v147 = vld [vmem:[%s10 + $0x10] sm:$0xff]
    %v148 = vld [vmem:[%s10 + $0x18] sm:$0xff]
    %v149 = vld [vmem:[%s10 + $0x20] sm:$0xff]
    %v150 = vld [vmem:[%s10 + $0x28] sm:$0xff]
    %v151 = vld [vmem:[%s10 + $0x30] sm:$0xff]
    %v152 = vld [vmem:[%s10 + $0x38] sm:$0xff]
    %v153 = vld [vmem:[%s10 + $0x40] sm:$0xff]
    %v154 = vld [vmem:[%s10 + $0x48] sm:$0xff]
    %v155 = vld [vmem:[%s10 + $0x50] sm:$0xff]
    %v156 = vld [vmem:[%s10 + $0x58] sm:$0xff]
    %v157 = vld [vmem:[%s10 + $0x60] sm:$0xff]
    %v158 = vld [vmem:[%s10 + $0x68] sm:$0xff]
    %v159 = vld [vmem:[%s10 + $0x70] sm:$0xff]
    %v160 = vld [vmem:[%s10 + $0x78] sm:$0xff]
    %161 = vmatpush.xpose.msra.mxu0 %v160
    %162 = vmatpush.xpose.msra.mxu0 %v159
    %163 = vmatpush.xpose.msra.mxu0 %v158
    %164 = vmatpush.xpose.msra.mxu0 %v157
    %165 = vmatpush.xpose.msra.mxu0 %v156
    %166 = vmatpush.xpose.msra.mxu0 %v155
    %167 = vmatpush.xpose.msra.mxu0 %v154
    %168 = vmatpush.xpose.msra.mxu0 %v153
    %169 = vmatpush.xpose.msra.mxu0 %v152
    %170 = vmatpush.xpose.msra.mxu0 %v151
    %171 = vmatpush.xpose.msra.mxu0 %v150
    %172 = vmatpush.xpose.msra.mxu0 %v149
    %173 = vmatpush.xpose.msra.mxu0 %v148
    %174 = vmatpush.xpose.msra.mxu0 %v147
    %175 = vmatpush.xpose.msra.mxu0 %v146
    %176 = vmatpush.xpose.msra.mxu0 %v145
    %177 = vmatmul.f32.gmra.mxu0 %v143
    %v178 = vpop.f32.mrf.mxu0
    %v179 = vadd.f32 0.0, %v178
    %180 = vmatmul.f32.gmra.mxu0 %v144
    %v181 = vpop.f32.mrf.mxu0
    %v182 = vadd.f32 0.0, %v181
    %183 = vdwg.mxu0
    %v184 = vld [vmem:[%s7] sm:$0xff]
    %v185 = vld [vmem:[%s7 + $0x8] sm:$0xff]
    %v186 = vld [vmem:[%s7 + $0x10] sm:$0xff]
    %v187 = vld [vmem:[%s7 + $0x18] sm:$0xff]
    %v188 = vld [vmem:[%s7 + $0x20] sm:$0xff]
    %v189 = vld [vmem:[%s7 + $0x28] sm:$0xff]
    %v190 = vld [vmem:[%s7 + $0x30] sm:$0xff]
    %v191 = vld [vmem:[%s7 + $0x38] sm:$0xff]
    %v192 = vld [vmem:[%s7 + $0x40] sm:$0xff]
    %v193 = vld [vmem:[%s7 + $0x48] sm:$0xff]
    %v194 = vld [vmem:[%s7 + $0x50] sm:$0xff]
    %v195 = vld [vmem:[%s7 + $0x58] sm:$0xff]
    %v196 = vld [vmem:[%s7 + $0x60] sm:$0xff]
    %v197 = vld [vmem:[%s7 + $0x68] sm:$0xff]
    %v198 = vld [vmem:[%s7 + $0x70] sm:$0xff]
    %v199 = vld [vmem:[%s7 + $0x78] sm:$0xff]
    %v200 = vld [vmem:[%s2] sm:$0xf]
    %v201 = vld [vmem:[%s2 + $0x4] sm:$0xf]
    %v202 = vld [vmem:[%s2 + $0x8] sm:$0xf]
    %v203 = vld [vmem:[%s2 + $0xc] sm:$0xf]
    %v204 = vld [vmem:[%s2 + $0x10] sm:$0xf]
    %v205 = vld [vmem:[%s2 + $0x14] sm:$0xf]
    %v206 = vld [vmem:[%s2 + $0x18] sm:$0xf]
    %v207 = vld [vmem:[%s2 + $0x1c] sm:$0xf]
    %v208 = vld [vmem:[%s2 + $0x20] sm:$0xf]
    %v209 = vld [vmem:[%s2 + $0x24] sm:$0xf]
    %v210 = vld [vmem:[%s2 + $0x28] sm:$0xf]
    %v211 = vld [vmem:[%s2 + $0x2c] sm:$0xf]
    %v212 = vld [vmem:[%s2 + $0x30] sm:$0xf]
    %v213 = vld [vmem:[%s2 + $0x34] sm:$0xf]
    %v214 = vld [vmem:[%s2 + $0x38] sm:$0xf]
    %v215 = vld [vmem:[%s2 + $0x3c] sm:$0xf]
    %v216 = vpack.c.bf16 %v179, %v179
    %v217 = vpack.c.bf16 %v182, %v182
    %v218 = vunpack.c.l.bf16 %v216
    %v219 = vunpack.c.l.bf16 %v217
    %v220 = vsub.f32 %v179, %v218
    %v221 = vsub.f32 %v182, %v219
    %v222 = vpack.c.bf16 %v221, %v220
    %v239 = vunpack.c.l.b16 %v200
    %v240 = vunpack.c.l.b16 %v201
    %v241 = vunpack.c.l.b16 %v202
    %v242 = vunpack.c.l.b16 %v203
    %v243 = vunpack.c.l.b16 %v204
    %v244 = vunpack.c.l.b16 %v205
    %v245 = vunpack.c.l.b16 %v206
    %v246 = vunpack.c.l.b16 %v207
    %v247 = vunpack.c.l.b16 %v208
    %v248 = vunpack.c.l.b16 %v209
    %v249 = vunpack.c.l.b16 %v210
    %v250 = vunpack.c.l.b16 %v211
    %v251 = vunpack.c.l.b16 %v212
    %v252 = vunpack.c.l.b16 %v213
    %v253 = vunpack.c.l.b16 %v214
    %v254 = vunpack.c.l.b16 %v215
    %v255 = vpack.c.b16 %v240, %v239
    %v256 = vpack.c.b16 %v242, %v241
    %v257 = vpack.c.b16 %v244, %v243
    %v258 = vpack.c.b16 %v246, %v245
    %v259 = vpack.c.b16 %v248, %v247
    %v260 = vpack.c.b16 %v250, %v249
    %v261 = vpack.c.b16 %v252, %v251
    %v262 = vpack.c.b16 %v254, %v253
    %vm263 = vcmask 130048
    %v265 = vsel %vm263, %v255, 0
    %v268 = vsel %vm263, %v256, 0
    %v271 = vsel %vm263, %v257, 0
    %v274 = vsel %vm263, %v258, 0
    %v277 = vsel %vm263, %v259, 0
    %v280 = vsel %vm263, %v260, 0
    %v283 = vsel %vm263, %v261, 0
    %v286 = vsel %vm263, %v262, 0
    %288 = vmatpush.bf16.msra.mxu0 0
    %289 = vmatpush.bf16.msra.mxu0 0
    %290 = vmatpush.bf16.msra.mxu0 0
    %291 = vmatpush.bf16.msra.mxu0 0
    %292 = vmatpush.bf16.msra.mxu0 0
    %293 = vmatpush.bf16.msra.mxu0 0
    %294 = vmatpush.bf16.msra.mxu0 0
    %295 = vmatpush.bf16.msra.mxu0 %v222
    %296 = vmatmul.bf16.gmra.mxu0 %v265
    %v297 = vpop.f32.mrf.mxu0
    %v298 = vadd.f32 0.0, %v297
    %v299 = vpop.f32.mrf.mxu0
    %v300 = vadd.f32 0.0, %v299
    %301 = vmatmul.bf16.gmra.mxu0 %v268
    %v302 = vpop.f32.mrf.mxu0
    %v303 = vadd.f32 0.0, %v302
    %v304 = vpop.f32.mrf.mxu0
    %v305 = vadd.f32 0.0, %v304
    %306 = vmatmul.bf16.gmra.mxu0 %v271
    %v307 = vpop.f32.mrf.mxu0
    %v308 = vadd.f32 0.0, %v307
    %v309 = vpop.f32.mrf.mxu0
    %v310 = vadd.f32 0.0, %v309
    %311 = vmatmul.bf16.gmra.mxu0 %v274
    %v312 = vpop.f32.mrf.mxu0
    %v313 = vadd.f32 0.0, %v312
    %v314 = vpop.f32.mrf.mxu0
    %v315 = vadd.f32 0.0, %v314
    %316 = vmatmul.bf16.gmra.mxu0 %v277
    %v317 = vpop.f32.mrf.mxu0
    %v318 = vadd.f32 0.0, %v317
    %v319 = vpop.f32.mrf.mxu0
    %v320 = vadd.f32 0.0, %v319
    %321 = vmatmul.bf16.gmra.mxu0 %v280
    %v322 = vpop.f32.mrf.mxu0
    %v323 = vadd.f32 0.0, %v322
    %v324 = vpop.f32.mrf.mxu0
    %v325 = vadd.f32 0.0, %v324
    %326 = vmatmul.bf16.gmra.mxu0 %v283
    %v327 = vpop.f32.mrf.mxu0
    %v328 = vadd.f32 0.0, %v327
    %v329 = vpop.f32.mrf.mxu0
    %v330 = vadd.f32 0.0, %v329
    %331 = vmatmul.bf16.gmra.mxu0 %v286
    %v332 = vpop.f32.mrf.mxu0
    %v333 = vadd.f32 0.0, %v332
    %v334 = vpop.f32.mrf.mxu0
    %v335 = vadd.f32 0.0, %v334
    %336 = vdwg.mxu0
    %v339 = vunpack.c.l.b16 %v216
    %v340 = vunpack.c.l.b16 %v217
    %v341 = vpack.c.b16 %v340, %v339
    %343 = vmatpush.bf16.msra.mxu0 0
    %344 = vmatpush.bf16.msra.mxu0 0
    %345 = vmatpush.bf16.msra.mxu0 0
    %346 = vmatpush.bf16.msra.mxu0 0
    %347 = vmatpush.bf16.msra.mxu0 0
    %348 = vmatpush.bf16.msra.mxu0 0
    %349 = vmatpush.bf16.msra.mxu0 0
    %350 = vmatpush.bf16.msra.mxu0 %v341
    %351 = vmatmul.bf16.gmra.mxu0 %v265
    %v352 = vpop.f32.mrf.mxu0
    %v353 = vadd.f32 %v298, %v352
    %v354 = vpop.f32.mrf.mxu0
    %v355 = vadd.f32 %v300, %v354
    %356 = vmatmul.bf16.gmra.mxu0 %v268
    %v357 = vpop.f32.mrf.mxu0
    %v358 = vadd.f32 %v303, %v357
    %v359 = vpop.f32.mrf.mxu0
    %v360 = vadd.f32 %v305, %v359
    %361 = vmatmul.bf16.gmra.mxu0 %v271
    %v362 = vpop.f32.mrf.mxu0
    %v363 = vadd.f32 %v308, %v362
    %v364 = vpop.f32.mrf.mxu0
    %v365 = vadd.f32 %v310, %v364
    %366 = vmatmul.bf16.gmra.mxu0 %v274
    %v367 = vpop.f32.mrf.mxu0
    %v368 = vadd.f32 %v313, %v367
    %v369 = vpop.f32.mrf.mxu0
    %v370 = vadd.f32 %v315, %v369
    %371 = vmatmul.bf16.gmra.mxu0 %v277
    %v372 = vpop.f32.mrf.mxu0
    %v373 = vadd.f32 %v318, %v372
    %v374 = vpop.f32.mrf.mxu0
    %v375 = vadd.f32 %v320, %v374
    %376 = vmatmul.bf16.gmra.mxu0 %v280
    %v377 = vpop.f32.mrf.mxu0
    %v378 = vadd.f32 %v323, %v377
    %v379 = vpop.f32.mrf.mxu0
    %v380 = vadd.f32 %v325, %v379
    %381 = vmatmul.bf16.gmra.mxu0 %v283
    %v382 = vpop.f32.mrf.mxu0
    %v383 = vadd.f32 %v328, %v382
    %v384 = vpop.f32.mrf.mxu0
    %v385 = vadd.f32 %v330, %v384
    %386 = vmatmul.bf16.gmra.mxu0 %v286
    %v387 = vpop.f32.mrf.mxu0
    %v388 = vadd.f32 %v333, %v387
    %v389 = vpop.f32.mrf.mxu0
    %v390 = vadd.f32 %v335, %v389
    %391 = vdwg.mxu0
    %393 = vset.pattern.permute.xlu0 0
    %394 = vperm.xlu0 %393, %v184
    %v395 = vpop.permute.xlu0 %394
    %398 = vset.pattern.permute.xlu0 0
    %399 = vperm.xlu0 %398, %v185
    %v400 = vpop.permute.xlu0 %399
    %403 = vset.pattern.permute.xlu0 0
    %404 = vperm.xlu0 %403, %v186
    %v405 = vpop.permute.xlu0 %404
    %408 = vset.pattern.permute.xlu0 0
    %409 = vperm.xlu0 %408, %v187
    %v410 = vpop.permute.xlu0 %409
    %413 = vset.pattern.permute.xlu0 0
    %414 = vperm.xlu0 %413, %v188
    %v415 = vpop.permute.xlu0 %414
    %418 = vset.pattern.permute.xlu0 0
    %419 = vperm.xlu0 %418, %v189
    %v420 = vpop.permute.xlu0 %419
    %423 = vset.pattern.permute.xlu0 0
    %424 = vperm.xlu0 %423, %v190
    %v425 = vpop.permute.xlu0 %424
    %428 = vset.pattern.permute.xlu0 0
    %429 = vperm.xlu0 %428, %v191
    %v430 = vpop.permute.xlu0 %429
    %433 = vset.pattern.permute.xlu0 0
    %434 = vperm.xlu0 %433, %v192
    %v435 = vpop.permute.xlu0 %434
    %438 = vset.pattern.permute.xlu0 0
    %439 = vperm.xlu0 %438, %v193
    %v440 = vpop.permute.xlu0 %439
    %443 = vset.pattern.permute.xlu0 0
    %444 = vperm.xlu0 %443, %v194
    %v445 = vpop.permute.xlu0 %444
    %448 = vset.pattern.permute.xlu0 0
    %449 = vperm.xlu0 %448, %v195
    %v450 = vpop.permute.xlu0 %449
    %453 = vset.pattern.permute.xlu0 0
    %454 = vperm.xlu0 %453, %v196
    %v455 = vpop.permute.xlu0 %454
    %458 = vset.pattern.permute.xlu0 0
    %459 = vperm.xlu0 %458, %v197
    %v460 = vpop.permute.xlu0 %459
    %463 = vset.pattern.permute.xlu0 0
    %464 = vperm.xlu0 %463, %v198
    %v465 = vpop.permute.xlu0 %464
    %468 = vset.pattern.permute.xlu0 0
    %469 = vperm.xlu0 %468, %v199
    %v470 = vpop.permute.xlu0 %469
    %v472 = vmul.f32 %v395, %v353
    %v473 = vmul.f32 %v400, %v355
    %v474 = vmul.f32 %v405, %v358
    %v475 = vmul.f32 %v410, %v360
    %v476 = vmul.f32 %v415, %v363
    %v477 = vmul.f32 %v420, %v365
    %v478 = vmul.f32 %v425, %v368
    %v479 = vmul.f32 %v430, %v370
    %v480 = vmul.f32 %v435, %v373
    %v481 = vmul.f32 %v440, %v375
    %v482 = vmul.f32 %v445, %v378
    %v483 = vmul.f32 %v450, %v380
    %v484 = vmul.f32 %v455, %v383
    %v485 = vmul.f32 %v460, %v385
    %v486 = vmul.f32 %v465, %v388
    %v487 = vmul.f32 %v470, %v390
    %v488 = vld [vmem:[%s6] sm:$0xff]
    %v489 = vld [vmem:[%s6 + $0x8] sm:$0xff]
    %v490 = vld [vmem:[%s1] sm:$0xf]
    %v491 = vld [vmem:[%s1 + $0x4] sm:$0xf]
    %v492 = vpack.c.bf16 %v472, %v472
    %v493 = vpack.c.bf16 %v473, %v473
    %v494 = vpack.c.bf16 %v474, %v474
    %v495 = vpack.c.bf16 %v475, %v475
    %v496 = vpack.c.bf16 %v476, %v476
    %v497 = vpack.c.bf16 %v477, %v477
    %v498 = vpack.c.bf16 %v478, %v478
    %v499 = vpack.c.bf16 %v479, %v479
    %v500 = vpack.c.bf16 %v480, %v480
    %v501 = vpack.c.bf16 %v481, %v481
    %v502 = vpack.c.bf16 %v482, %v482
    %v503 = vpack.c.bf16 %v483, %v483
    %v504 = vpack.c.bf16 %v484, %v484
    %v505 = vpack.c.bf16 %v485, %v485
    %v506 = vpack.c.bf16 %v486, %v486
    %v507 = vpack.c.bf16 %v487, %v487
    %v508 = vunpack.c.l.bf16 %v492
    %v509 = vunpack.c.l.bf16 %v493
    %v510 = vunpack.c.l.bf16 %v494
    %v511 = vunpack.c.l.bf16 %v495
    %v512 = vunpack.c.l.bf16 %v496
    %v513 = vunpack.c.l.bf16 %v497
    %v514 = vunpack.c.l.bf16 %v498
    %v515 = vunpack.c.l.bf16 %v499
    %v516 = vunpack.c.l.bf16 %v500
    %v517 = vunpack.c.l.bf16 %v501
    %v518 = vunpack.c.l.bf16 %v502
    %v519 = vunpack.c.l.bf16 %v503
    %v520 = vunpack.c.l.bf16 %v504
    %v521 = vunpack.c.l.bf16 %v505
    %v522 = vunpack.c.l.bf16 %v506
    %v523 = vunpack.c.l.bf16 %v507
    %v524 = vsub.f32 %v472, %v508
    %v525 = vsub.f32 %v473, %v509
    %v526 = vsub.f32 %v474, %v510
    %v527 = vsub.f32 %v475, %v511
    %v528 = vsub.f32 %v476, %v512
    %v529 = vsub.f32 %v477, %v513
    %v530 = vsub.f32 %v478, %v514
    %v531 = vsub.f32 %v479, %v515
    %v532 = vsub.f32 %v480, %v516
    %v533 = vsub.f32 %v481, %v517
    %v534 = vsub.f32 %v482, %v518
    %v535 = vsub.f32 %v483, %v519
    %v536 = vsub.f32 %v484, %v520
    %v537 = vsub.f32 %v485, %v521
    %v538 = vsub.f32 %v486, %v522
    %v539 = vsub.f32 %v487, %v523
    %v540 = vpack.c.bf16 %v525, %v524
    %v541 = vpack.c.bf16 %v527, %v526
    %v542 = vpack.c.bf16 %v529, %v528
    %v543 = vpack.c.bf16 %v531, %v530
    %v544 = vpack.c.bf16 %v533, %v532
    %v545 = vpack.c.bf16 %v535, %v534
    %v546 = vpack.c.bf16 %v537, %v536
    %v547 = vpack.c.bf16 %v539, %v538
    %v550 = vunpack.c.l.b16 %v490
    %v551 = vunpack.c.l.b16 %v491
    %v552 = vpack.c.b16 %v551, %v550
    %554 = vmatpush.bf16.msra.mxu0 %v547
    %555 = vmatpush.bf16.msra.mxu0 %v546
    %556 = vmatpush.bf16.msra.mxu0 %v545
    %557 = vmatpush.bf16.msra.mxu0 %v544
    %558 = vmatpush.bf16.msra.mxu0 %v543
    %559 = vmatpush.bf16.msra.mxu0 %v542
    %560 = vmatpush.bf16.msra.mxu0 %v541
    %561 = vmatpush.bf16.msra.mxu0 %v540
    %562 = vmatmul.bf16.gmra.mxu0 %v552
    %v563 = vpop.f32.mrf.mxu0
    %v564 = vadd.f32 0.0, %v563
    %v565 = vpop.f32.mrf.mxu0
    %v566 = vadd.f32 0.0, %v565
    %567 = vdwg.mxu0
    %v584 = vunpack.c.l.b16 %v492
    %v585 = vunpack.c.l.b16 %v493
    %v586 = vunpack.c.l.b16 %v494
    %v587 = vunpack.c.l.b16 %v495
    %v588 = vunpack.c.l.b16 %v496
    %v589 = vunpack.c.l.b16 %v497
    %v590 = vunpack.c.l.b16 %v498
    %v591 = vunpack.c.l.b16 %v499
    %v592 = vunpack.c.l.b16 %v500
    %v593 = vunpack.c.l.b16 %v501
    %v594 = vunpack.c.l.b16 %v502
    %v595 = vunpack.c.l.b16 %v503
    %v596 = vunpack.c.l.b16 %v504
    %v597 = vunpack.c.l.b16 %v505
    %v598 = vunpack.c.l.b16 %v506
    %v599 = vunpack.c.l.b16 %v507
    %v600 = vpack.c.b16 %v585, %v584
    %v601 = vpack.c.b16 %v587, %v586
    %v602 = vpack.c.b16 %v589, %v588
    %v603 = vpack.c.b16 %v591, %v590
    %v604 = vpack.c.b16 %v593, %v592
    %v605 = vpack.c.b16 %v595, %v594
    %v606 = vpack.c.b16 %v597, %v596
    %v607 = vpack.c.b16 %v599, %v598
    %616 = vmatpush.bf16.msra.mxu0 %v607
    %617 = vmatpush.bf16.msra.mxu0 %v606
    %618 = vmatpush.bf16.msra.mxu0 %v605
    %619 = vmatpush.bf16.msra.mxu0 %v604
    %620 = vmatpush.bf16.msra.mxu0 %v603
    %621 = vmatpush.bf16.msra.mxu0 %v602
    %622 = vmatpush.bf16.msra.mxu0 %v601
    %623 = vmatpush.bf16.msra.mxu0 %v600
    %624 = vmatmul.bf16.gmra.mxu0 %v552
    %v625 = vpop.f32.mrf.mxu0
    %v626 = vadd.f32 %v564, %v625
    %v627 = vpop.f32.mrf.mxu0
    %v628 = vadd.f32 %v566, %v627
    %629 = vdwg.mxu0
    %631 = vset.pattern.permute.xlu0 0
    %632 = vperm.xlu0 %631, %v488
    %v633 = vpop.permute.xlu0 %632
    %636 = vset.pattern.permute.xlu0 0
    %637 = vperm.xlu0 %636, %v489
    %v638 = vpop.permute.xlu0 %637
    %v640 = vmul.f32 %v633, %v626
    %v641 = vmul.f32 %v638, %v628
    %v642 = vld [vmem:[%s11] sm:$0x1]
    %v644 = vperm.slane %v642, 0
    %v646 = vadd.f32 %v640, %v644
    %v647 = vadd.f32 %v641, %v644
    %vm648 = vcmp.gt.f32.partialorder %v646, 0.0
    %vm649 = vcmp.gt.f32.partialorder %v647, 0.0
    %v650 = vmul.f32 %v646, 0.01
    %v651 = vmul.f32 %v647, 0.01
    %v652 = vsel %vm648, %v646, %v650
    %v653 = vsel %vm649, %v647, %v651
    %654 = vxpose.xlu0.b32.start [1/16] %v652, 128
    %655 = vxpose.xlu0.b32.cont [2/16] %v653, 128
    %656 = vxpose.xlu0.b32.cont [3/16] 0.0, 128
    %657 = vxpose.xlu0.b32.cont [4/16] 0.0, 128
    %658 = vxpose.xlu0.b32.cont [5/16] 0.0, 128
    %659 = vxpose.xlu0.b32.cont [6/16] 0.0, 128
    %660 = vxpose.xlu0.b32.cont [7/16] 0.0, 128
    %661 = vxpose.xlu0.b32.cont [8/16] 0.0, 128
    %662 = vxpose.xlu0.b32.cont [9/16] 0.0, 128
    %663 = vxpose.xlu0.b32.cont [10/16] 0.0, 128
    %664 = vxpose.xlu0.b32.cont [11/16] 0.0, 128
    %665 = vxpose.xlu0.b32.cont [12/16] 0.0, 128
    %666 = vxpose.xlu0.b32.cont [13/16] 0.0, 128
    %667 = vxpose.xlu0.b32.cont [14/16] 0.0, 128
    %668 = vxpose.xlu0.b32.cont [15/16] 0.0, 128
    %669 = vxpose.xlu0.b32.end [16/16] 0.0, 128
    %v670 = vpop.trf.xlu0
    %v671 = vpop.trf.xlu0
    %v672 = vpop.trf.xlu0
    %v673 = vpop.trf.xlu0
    %v674 = vpop.trf.xlu0
    %v675 = vpop.trf.xlu0
    %v676 = vpop.trf.xlu0
    %v677 = vpop.trf.xlu0
    %v678 = vpop.trf.xlu0
    %v679 = vpop.trf.xlu0
    %v680 = vpop.trf.xlu0
    %v681 = vpop.trf.xlu0
    %v682 = vpop.trf.xlu0
    %v683 = vpop.trf.xlu0
    %v684 = vpop.trf.xlu0
    %v685 = vpop.trf.xlu0
    %v687 = vsel %vm263, %v670, 0
    %v690 = vsel %vm263, %v671, 0
    %v693 = vsel %vm263, %v672, 0
    %v696 = vsel %vm263, %v673, 0
    %v699 = vsel %vm263, %v674, 0
    %v702 = vsel %vm263, %v675, 0
    %v705 = vsel %vm263, %v676, 0
    %v708 = vsel %vm263, %v677, 0
    %v711 = vsel %vm263, %v678, 0
    %v714 = vsel %vm263, %v679, 0
    %v717 = vsel %vm263, %v680, 0
    %v720 = vsel %vm263, %v681, 0
    %v723 = vsel %vm263, %v682, 0
    %v726 = vsel %vm263, %v683, 0
    %v729 = vsel %vm263, %v684, 0
    %v732 = vsel %vm263, %v685, 0
    %734 = vmatpush.msra.mxu0 0.0
    %735 = vmatpush.msra.mxu0 0.0
    %736 = vmatpush.msra.mxu0 0.0
    %737 = vmatpush.msra.mxu0 0.0
    %738 = vmatpush.msra.mxu0 0.0
    %739 = vmatpush.msra.mxu0 0.0
    %740 = vmatpush.msra.mxu0 0.0
    %741 = vmatpush.msra.mxu0 0.0
    %742 = vmatpush.msra.mxu0 0.0
    %743 = vmatpush.msra.mxu0 0.0
    %744 = vmatpush.msra.mxu0 0.0
    %745 = vmatpush.msra.mxu0 0.0
    %746 = vmatpush.msra.mxu0 0.0
    %747 = vmatpush.msra.mxu0 0.0
    %748 = vmatpush.msra.mxu0 %v653
    %749 = vmatpush.msra.mxu0 %v652
    %750 = vmatmul.f32.gmra.mxu0 %v687
    %v751 = vpop.f32.mrf.mxu0
    %v752 = vadd.f32 0.0, %v751
    %753 = vmatmul.f32.gmra.mxu0 %v690
    %v754 = vpop.f32.mrf.mxu0
    %v755 = vadd.f32 0.0, %v754
    %756 = vmatmul.f32.gmra.mxu0 %v693
    %v757 = vpop.f32.mrf.mxu0
    %v758 = vadd.f32 0.0, %v757
    %759 = vmatmul.f32.gmra.mxu0 %v696
    %v760 = vpop.f32.mrf.mxu0
    %v761 = vadd.f32 0.0, %v760
    %762 = vmatmul.f32.gmra.mxu0 %v699
    %v763 = vpop.f32.mrf.mxu0
    %v764 = vadd.f32 0.0, %v763
    %765 = vmatmul.f32.gmra.mxu0 %v702
    %v766 = vpop.f32.mrf.mxu0
    %v767 = vadd.f32 0.0, %v766
    %768 = vmatmul.f32.gmra.mxu0 %v705
    %v769 = vpop.f32.mrf.mxu0
    %v770 = vadd.f32 0.0, %v769
    %771 = vmatmul.f32.gmra.mxu0 %v708
    %v772 = vpop.f32.mrf.mxu0
    %v773 = vadd.f32 0.0, %v772
    %774 = vmatmul.f32.gmra.mxu0 %v711
    %v775 = vpop.f32.mrf.mxu0
    %v776 = vadd.f32 0.0, %v775
    %777 = vmatmul.f32.gmra.mxu0 %v714
    %v778 = vpop.f32.mrf.mxu0
    %v779 = vadd.f32 0.0, %v778
    %780 = vmatmul.f32.gmra.mxu0 %v717
    %v781 = vpop.f32.mrf.mxu0
    %v782 = vadd.f32 0.0, %v781
    %783 = vmatmul.f32.gmra.mxu0 %v720
    %v784 = vpop.f32.mrf.mxu0
    %v785 = vadd.f32 0.0, %v784
    %786 = vmatmul.f32.gmra.mxu0 %v723
    %v787 = vpop.f32.mrf.mxu0
    %v788 = vadd.f32 0.0, %v787
    %789 = vmatmul.f32.gmra.mxu0 %v726
    %v790 = vpop.f32.mrf.mxu0
    %v791 = vadd.f32 0.0, %v790
    %792 = vmatmul.f32.gmra.mxu0 %v729
    %v793 = vpop.f32.mrf.mxu0
    %v794 = vadd.f32 0.0, %v793
    %795 = vmatmul.f32.gmra.mxu0 %v732
    %v796 = vpop.f32.mrf.mxu0
    %v797 = vadd.f32 0.0, %v796
    %798 = vdwg.mxu0
    %v799 = vld [vmem:[#allocation5] sm:$0xff]
    %v800 = vld [vmem:[#allocation5 + $0x8] sm:$0xff]
    %v801 = vld [vmem:[#allocation5 + $0x10] sm:$0xff]
    %v802 = vld [vmem:[#allocation5 + $0x18] sm:$0xff]
    %v803 = vld [vmem:[#allocation5 + $0x20] sm:$0xff]
    %v804 = vld [vmem:[#allocation5 + $0x28] sm:$0xff]
    %v805 = vld [vmem:[#allocation5 + $0x30] sm:$0xff]
    %v806 = vld [vmem:[#allocation5 + $0x38] sm:$0xff]
    %v807 = vld [vmem:[#allocation5 + $0x40] sm:$0xff]
    %v808 = vld [vmem:[#allocation5 + $0x48] sm:$0xff]
    %v809 = vld [vmem:[#allocation5 + $0x50] sm:$0xff]
    %v810 = vld [vmem:[#allocation5 + $0x58] sm:$0xff]
    %v811 = vld [vmem:[#allocation5 + $0x60] sm:$0xff]
    %v812 = vld [vmem:[#allocation5 + $0x68] sm:$0xff]
    %v813 = vld [vmem:[#allocation5 + $0x70] sm:$0xff]
    %v814 = vld [vmem:[#allocation5 + $0x78] sm:$0xff]
    %v815 = vld [vmem:[%s13] sm:$0x1]
    %v817 = vperm.slane %v815, 0
    %819 = vmatpush.xpose.msra.mxu0 %v814
    %820 = vmatpush.xpose.msra.mxu0 %v813
    %821 = vmatpush.xpose.msra.mxu0 %v812
    %822 = vmatpush.xpose.msra.mxu0 %v811
    %823 = vmatpush.xpose.msra.mxu0 %v810
    %824 = vmatpush.xpose.msra.mxu0 %v809
    %825 = vmatpush.xpose.msra.mxu0 %v808
    %826 = vmatpush.xpose.msra.mxu0 %v807
    %827 = vmatpush.xpose.msra.mxu0 %v806
    %828 = vmatpush.xpose.msra.mxu0 %v805
    %829 = vmatpush.xpose.msra.mxu0 %v804
    %830 = vmatpush.xpose.msra.mxu0 %v803
    %831 = vmatpush.xpose.msra.mxu0 %v802
    %832 = vmatpush.xpose.msra.mxu0 %v801
    %833 = vmatpush.xpose.msra.mxu0 %v800
    %834 = vmatpush.xpose.msra.mxu0 %v799
    %835 = vmatmul.f32.gmra.mxu0 %v752
    %v836 = vpop.f32.mrf.mxu0
    %v837 = vadd.f32 %v817, %v836
    %838 = vmatmul.f32.gmra.mxu0 %v755
    %v839 = vpop.f32.mrf.mxu0
    %v840 = vadd.f32 %v817, %v839
    %841 = vmatmul.f32.gmra.mxu0 %v758
    %v842 = vpop.f32.mrf.mxu0
    %v843 = vadd.f32 %v817, %v842
    %844 = vmatmul.f32.gmra.mxu0 %v761
    %v845 = vpop.f32.mrf.mxu0
    %v846 = vadd.f32 %v817, %v845
    %847 = vmatmul.f32.gmra.mxu0 %v764
    %v848 = vpop.f32.mrf.mxu0
    %v849 = vadd.f32 %v817, %v848
    %850 = vmatmul.f32.gmra.mxu0 %v767
    %v851 = vpop.f32.mrf.mxu0
    %v852 = vadd.f32 %v817, %v851
    %853 = vmatmul.f32.gmra.mxu0 %v770
    %v854 = vpop.f32.mrf.mxu0
    %v855 = vadd.f32 %v817, %v854
    %856 = vmatmul.f32.gmra.mxu0 %v773
    %v857 = vpop.f32.mrf.mxu0
    %v858 = vadd.f32 %v817, %v857
    %859 = vmatmul.f32.gmra.mxu0 %v776
    %v860 = vpop.f32.mrf.mxu0
    %v861 = vadd.f32 %v817, %v860
    %862 = vmatmul.f32.gmra.mxu0 %v779
    %v863 = vpop.f32.mrf.mxu0
    %v864 = vadd.f32 %v817, %v863
    %865 = vmatmul.f32.gmra.mxu0 %v782
    %v866 = vpop.f32.mrf.mxu0
    %v867 = vadd.f32 %v817, %v866
    %868 = vmatmul.f32.gmra.mxu0 %v785
    %v869 = vpop.f32.mrf.mxu0
    %v870 = vadd.f32 %v817, %v869
    %871 = vmatmul.f32.gmra.mxu0 %v788
    %v872 = vpop.f32.mrf.mxu0
    %v873 = vadd.f32 %v817, %v872
    %874 = vmatmul.f32.gmra.mxu0 %v791
    %v875 = vpop.f32.mrf.mxu0
    %v876 = vadd.f32 %v817, %v875
    %877 = vmatmul.f32.gmra.mxu0 %v794
    %v878 = vpop.f32.mrf.mxu0
    %v879 = vadd.f32 %v817, %v878
    %880 = vmatmul.f32.gmra.mxu0 %v797
    %v881 = vpop.f32.mrf.mxu0
    %v882 = vadd.f32 %v817, %v881
    %883 = vdwg.mxu0
    %vm884 = vcmp.gt.f32.partialorder %v837, 0.0
    %vm885 = vcmp.gt.f32.partialorder %v840, 0.0
    %vm886 = vcmp.gt.f32.partialorder %v843, 0.0
    %vm887 = vcmp.gt.f32.partialorder %v846, 0.0
    %vm888 = vcmp.gt.f32.partialorder %v849, 0.0
    %vm889 = vcmp.gt.f32.partialorder %v852, 0.0
    %vm890 = vcmp.gt.f32.partialorder %v855, 0.0
    %vm891 = vcmp.gt.f32.partialorder %v858, 0.0
    %vm892 = vcmp.gt.f32.partialorder %v861, 0.0
    %vm893 = vcmp.gt.f32.partialorder %v864, 0.0
    %vm894 = vcmp.gt.f32.partialorder %v867, 0.0
    %vm895 = vcmp.gt.f32.partialorder %v870, 0.0
    %vm896 = vcmp.gt.f32.partialorder %v873, 0.0
    %vm897 = vcmp.gt.f32.partialorder %v876, 0.0
    %vm898 = vcmp.gt.f32.partialorder %v879, 0.0
    %vm899 = vcmp.gt.f32.partialorder %v882, 0.0
    %v900 = vmul.f32 %v837, 0.01
    %v901 = vmul.f32 %v840, 0.01
    %v902 = vmul.f32 %v843, 0.01
    %v903 = vmul.f32 %v846, 0.01
    %v904 = vmul.f32 %v849, 0.01
    %v905 = vmul.f32 %v852, 0.01
    %v906 = vmul.f32 %v855, 0.01
    %v907 = vmul.f32 %v858, 0.01
    %v908 = vmul.f32 %v861, 0.01
    %v909 = vmul.f32 %v864, 0.01
    %v910 = vmul.f32 %v867, 0.01
    %v911 = vmul.f32 %v870, 0.01
    %v912 = vmul.f32 %v873, 0.01
    %v913 = vmul.f32 %v876, 0.01
    %v914 = vmul.f32 %v879, 0.01
    %v915 = vmul.f32 %v882, 0.01
    %v916 = vsel %vm884, %v837, %v900
    %v917 = vsel %vm885, %v840, %v901
    %v918 = vsel %vm886, %v843, %v902
    %v919 = vsel %vm887, %v846, %v903
    %v920 = vsel %vm888, %v849, %v904
    %v921 = vsel %vm889, %v852, %v905
    %v922 = vsel %vm890, %v855, %v906
    %v923 = vsel %vm891, %v858, %v907
    %v924 = vsel %vm892, %v861, %v908
    %v925 = vsel %vm893, %v864, %v909
    %v926 = vsel %vm894, %v867, %v910
    %v927 = vsel %vm895, %v870, %v911
    %v928 = vsel %vm896, %v873, %v912
    %v929 = vsel %vm897, %v876, %v913
    %v930 = vsel %vm898, %v879, %v914
    %v931 = vsel %vm899, %v882, %v915
    %v932 = vld [vmem:[%s4] sm:$0xff]
    %v933 = vld [vmem:[%s4 + $0x8] sm:$0xff]
    %v934 = vld [vmem:[%s4 + $0x10] sm:$0xff]
    %v935 = vld [vmem:[%s4 + $0x18] sm:$0xff]
    %v936 = vld [vmem:[%s4 + $0x20] sm:$0xff]
    %v937 = vld [vmem:[%s4 + $0x28] sm:$0xff]
    %v938 = vld [vmem:[%s4 + $0x30] sm:$0xff]
    %v939 = vld [vmem:[%s4 + $0x38] sm:$0xff]
    %v940 = vld [vmem:[%s4 + $0x40] sm:$0xff]
    %v941 = vld [vmem:[%s4 + $0x48] sm:$0xff]
    %v942 = vld [vmem:[%s4 + $0x50] sm:$0xff]
    %v943 = vld [vmem:[%s4 + $0x58] sm:$0xff]
    %v944 = vld [vmem:[%s4 + $0x60] sm:$0xff]
    %v945 = vld [vmem:[%s4 + $0x68] sm:$0xff]
    %v946 = vld [vmem:[%s4 + $0x70] sm:$0xff]
    %v947 = vld [vmem:[%s4 + $0x78] sm:$0xff]
    %948 = vmatpush.msra.mxu0 %v931
    %949 = vmatpush.msra.mxu0 %v930
    %950 = vmatpush.msra.mxu0 %v929
    %951 = vmatpush.msra.mxu0 %v928
    %952 = vmatpush.msra.mxu0 %v927
    %953 = vmatpush.msra.mxu0 %v926
    %954 = vmatpush.msra.mxu0 %v925
    %955 = vmatpush.msra.mxu0 %v924
    %956 = vmatpush.msra.mxu0 %v923
    %957 = vmatpush.msra.mxu0 %v922
    %958 = vmatpush.msra.mxu0 %v921
    %959 = vmatpush.msra.mxu0 %v920
    %960 = vmatpush.msra.mxu0 %v919
    %961 = vmatpush.msra.mxu0 %v918
    %962 = vmatpush.msra.mxu0 %v917
    %963 = vmatpush.msra.mxu0 %v916
    %964 = vmatmul.f32.gmra.mxu0 %v932
    %v965 = vpop.f32.mrf.mxu0
    %v966 = vadd.f32 0.0, %v965
    %967 = vmatmul.f32.gmra.mxu0 %v933
    %v968 = vpop.f32.mrf.mxu0
    %v969 = vadd.f32 0.0, %v968
    %970 = vmatmul.f32.gmra.mxu0 %v934
    %v971 = vpop.f32.mrf.mxu0
    %v972 = vadd.f32 0.0, %v971
    %973 = vmatmul.f32.gmra.mxu0 %v935
    %v974 = vpop.f32.mrf.mxu0
    %v975 = vadd.f32 0.0, %v974
    %976 = vmatmul.f32.gmra.mxu0 %v936
    %v977 = vpop.f32.mrf.mxu0
    %v978 = vadd.f32 0.0, %v977
    %979 = vmatmul.f32.gmra.mxu0 %v937
    %v980 = vpop.f32.mrf.mxu0
    %v981 = vadd.f32 0.0, %v980
    %982 = vmatmul.f32.gmra.mxu0 %v938
    %v983 = vpop.f32.mrf.mxu0
    %v984 = vadd.f32 0.0, %v983
    %985 = vmatmul.f32.gmra.mxu0 %v939
    %v986 = vpop.f32.mrf.mxu0
    %v987 = vadd.f32 0.0, %v986
    %988 = vmatmul.f32.gmra.mxu0 %v940
    %v989 = vpop.f32.mrf.mxu0
    %v990 = vadd.f32 0.0, %v989
    %991 = vmatmul.f32.gmra.mxu0 %v941
    %v992 = vpop.f32.mrf.mxu0
    %v993 = vadd.f32 0.0, %v992
    %994 = vmatmul.f32.gmra.mxu0 %v942
    %v995 = vpop.f32.mrf.mxu0
    %v996 = vadd.f32 0.0, %v995
    %997 = vmatmul.f32.gmra.mxu0 %v943
    %v998 = vpop.f32.mrf.mxu0
    %v999 = vadd.f32 0.0, %v998
    %1000 = vmatmul.f32.gmra.mxu0 %v944
    %v1001 = vpop.f32.mrf.mxu0
    %v1002 = vadd.f32 0.0, %v1001
    %1003 = vmatmul.f32.gmra.mxu0 %v945
    %v1004 = vpop.f32.mrf.mxu0
    %v1005 = vadd.f32 0.0, %v1004
    %1006 = vmatmul.f32.gmra.mxu0 %v946
    %v1007 = vpop.f32.mrf.mxu0
    %v1008 = vadd.f32 0.0, %v1007
    %1009 = vmatmul.f32.gmra.mxu0 %v947
    %v1010 = vpop.f32.mrf.mxu0
    %v1011 = vadd.f32 0.0, %v1010
    %1012 = vdwg.mxu0
    %v1013 = vld [vmem:[#allocation7] sm:$0xff]
    %v1014 = vld [vmem:[#allocation7 + $0x8] sm:$0xff]
    %v1015 = vld [vmem:[#allocation7 + $0x10] sm:$0xff]
    %v1016 = vld [vmem:[#allocation7 + $0x18] sm:$0xff]
    %v1017 = vld [vmem:[#allocation7 + $0x20] sm:$0xff]
    %v1018 = vld [vmem:[#allocation7 + $0x28] sm:$0xff]
    %v1019 = vld [vmem:[#allocation7 + $0x30] sm:$0xff]
    %v1020 = vld [vmem:[#allocation7 + $0x38] sm:$0xff]
    %v1021 = vld [vmem:[#allocation7 + $0x40] sm:$0xff]
    %v1022 = vld [vmem:[#allocation7 + $0x48] sm:$0xff]
    %v1023 = vld [vmem:[#allocation7 + $0x50] sm:$0xff]
    %v1024 = vld [vmem:[#allocation7 + $0x58] sm:$0xff]
    %v1025 = vld [vmem:[#allocation7 + $0x60] sm:$0xff]
    %v1026 = vld [vmem:[#allocation7 + $0x68] sm:$0xff]
    %v1027 = vld [vmem:[#allocation7 + $0x70] sm:$0xff]
    %v1028 = vld [vmem:[#allocation7 + $0x78] sm:$0xff]
    %1029 = vmatpush.xpose.msra.mxu0 %v1028
    %1030 = vmatpush.xpose.msra.mxu0 %v1027
    %1031 = vmatpush.xpose.msra.mxu0 %v1026
    %1032 = vmatpush.xpose.msra.mxu0 %v1025
    %1033 = vmatpush.xpose.msra.mxu0 %v1024
    %1034 = vmatpush.xpose.msra.mxu0 %v1023
    %1035 = vmatpush.xpose.msra.mxu0 %v1022
    %1036 = vmatpush.xpose.msra.mxu0 %v1021
    %1037 = vmatpush.xpose.msra.mxu0 %v1020
    %1038 = vmatpush.xpose.msra.mxu0 %v1019
    %1039 = vmatpush.xpose.msra.mxu0 %v1018
    %1040 = vmatpush.xpose.msra.mxu0 %v1017
    %1041 = vmatpush.xpose.msra.mxu0 %v1016
    %1042 = vmatpush.xpose.msra.mxu0 %v1015
    %1043 = vmatpush.xpose.msra.mxu0 %v1014
    %1044 = vmatpush.xpose.msra.mxu0 %v1013
    %1045 = vmatmul.f32.gmra.mxu0 %v966
    %v1046 = vpop.f32.mrf.mxu0
    %v1047 = vadd.f32 0.0, %v1046
    %1048 = vmatmul.f32.gmra.mxu0 %v969
    %v1049 = vpop.f32.mrf.mxu0
    %v1050 = vadd.f32 0.0, %v1049
    %1051 = vmatmul.f32.gmra.mxu0 %v972
    %v1052 = vpop.f32.mrf.mxu0
    %v1053 = vadd.f32 0.0, %v1052
    %1054 = vmatmul.f32.gmra.mxu0 %v975
    %v1055 = vpop.f32.mrf.mxu0
    %v1056 = vadd.f32 0.0, %v1055
    %1057 = vmatmul.f32.gmra.mxu0 %v978
    %v1058 = vpop.f32.mrf.mxu0
    %v1059 = vadd.f32 0.0, %v1058
    %1060 = vmatmul.f32.gmra.mxu0 %v981
    %v1061 = vpop.f32.mrf.mxu0
    %v1062 = vadd.f32 0.0, %v1061
    %1063 = vmatmul.f32.gmra.mxu0 %v984
    %v1064 = vpop.f32.mrf.mxu0
    %v1065 = vadd.f32 0.0, %v1064
    %1066 = vmatmul.f32.gmra.mxu0 %v987
    %v1067 = vpop.f32.mrf.mxu0
    %v1068 = vadd.f32 0.0, %v1067
    %1069 = vmatmul.f32.gmra.mxu0 %v990
    %v1070 = vpop.f32.mrf.mxu0
    %v1071 = vadd.f32 0.0, %v1070
    %1072 = vmatmul.f32.gmra.mxu0 %v993
    %v1073 = vpop.f32.mrf.mxu0
    %v1074 = vadd.f32 0.0, %v1073
    %1075 = vmatmul.f32.gmra.mxu0 %v996
    %v1076 = vpop.f32.mrf.mxu0
    %v1077 = vadd.f32 0.0, %v1076
    %1078 = vmatmul.f32.gmra.mxu0 %v999
    %v1079 = vpop.f32.mrf.mxu0
    %v1080 = vadd.f32 0.0, %v1079
    %1081 = vmatmul.f32.gmra.mxu0 %v1002
    %v1082 = vpop.f32.mrf.mxu0
    %v1083 = vadd.f32 0.0, %v1082
    %1084 = vmatmul.f32.gmra.mxu0 %v1005
    %v1085 = vpop.f32.mrf.mxu0
    %v1086 = vadd.f32 0.0, %v1085
    %1087 = vmatmul.f32.gmra.mxu0 %v1008
    %v1088 = vpop.f32.mrf.mxu0
    %v1089 = vadd.f32 0.0, %v1088
    %1090 = vmatmul.f32.gmra.mxu0 %v1011
    %v1091 = vpop.f32.mrf.mxu0
    %v1092 = vadd.f32 0.0, %v1091
    %1093 = vdwg.mxu0
    %v1094 = vld [vmem:[%s8] sm:$0xff]
    %v1095 = vld [vmem:[%s8 + $0x8] sm:$0xff]
    %v1096 = vld [vmem:[%s8 + $0x10] sm:$0xff]
    %v1097 = vld [vmem:[%s8 + $0x18] sm:$0xff]
    %v1098 = vld [vmem:[%s8 + $0x20] sm:$0xff]
    %v1099 = vld [vmem:[%s8 + $0x28] sm:$0xff]
    %v1100 = vld [vmem:[%s8 + $0x30] sm:$0xff]
    %v1101 = vld [vmem:[%s8 + $0x38] sm:$0xff]
    %v1102 = vld [vmem:[%s8 + $0x40] sm:$0xff]
    %v1103 = vld [vmem:[%s8 + $0x48] sm:$0xff]
    %v1104 = vld [vmem:[%s8 + $0x50] sm:$0xff]
    %v1105 = vld [vmem:[%s8 + $0x58] sm:$0xff]
    %v1106 = vld [vmem:[%s8 + $0x60] sm:$0xff]
    %v1107 = vld [vmem:[%s8 + $0x68] sm:$0xff]
    %v1108 = vld [vmem:[%s8 + $0x70] sm:$0xff]
    %v1109 = vld [vmem:[%s8 + $0x78] sm:$0xff]
    %v1110 = vld [vmem:[%s3] sm:$0xf]
    %v1111 = vld [vmem:[%s3 + $0x4] sm:$0xf]
    %v1112 = vld [vmem:[%s3 + $0x8] sm:$0xf]
    %v1113 = vld [vmem:[%s3 + $0xc] sm:$0xf]
    %v1114 = vld [vmem:[%s3 + $0x10] sm:$0xf]
    %v1115 = vld [vmem:[%s3 + $0x14] sm:$0xf]
    %v1116 = vld [vmem:[%s3 + $0x18] sm:$0xf]
    %v1117 = vld [vmem:[%s3 + $0x1c] sm:$0xf]
    %v1118 = vld [vmem:[%s3 + $0x20] sm:$0xf]
    %v1119 = vld [vmem:[%s3 + $0x24] sm:$0xf]
    %v1120 = vld [vmem:[%s3 + $0x28] sm:$0xf]
    %v1121 = vld [vmem:[%s3 + $0x2c] sm:$0xf]
    %v1122 = vld [vmem:[%s3 + $0x30] sm:$0xf]
    %v1123 = vld [vmem:[%s3 + $0x34] sm:$0xf]
    %v1124 = vld [vmem:[%s3 + $0x38] sm:$0xf]
    %v1125 = vld [vmem:[%s3 + $0x3c] sm:$0xf]
    %1127 = vset.pattern.permute.xlu0 0
    %1128 = vperm.xlu0 %1127, %v1094
    %v1129 = vpop.permute.xlu0 %1128
    %1132 = vset.pattern.permute.xlu0 0
    %1133 = vperm.xlu0 %1132, %v1095
    %v1134 = vpop.permute.xlu0 %1133
    %1137 = vset.pattern.permute.xlu0 0
    %1138 = vperm.xlu0 %1137, %v1096
    %v1139 = vpop.permute.xlu0 %1138
    %1142 = vset.pattern.permute.xlu0 0
    %1143 = vperm.xlu0 %1142, %v1097
    %v1144 = vpop.permute.xlu0 %1143
    %1147 = vset.pattern.permute.xlu0 0
    %1148 = vperm.xlu0 %1147, %v1098
    %v1149 = vpop.permute.xlu0 %1148
    %1152 = vset.pattern.permute.xlu0 0
    %1153 = vperm.xlu0 %1152, %v1099
    %v1154 = vpop.permute.xlu0 %1153
    %1157 = vset.pattern.permute.xlu0 0
    %1158 = vperm.xlu0 %1157, %v1100
    %v1159 = vpop.permute.xlu0 %1158
    %1162 = vset.pattern.permute.xlu0 0
    %1163 = vperm.xlu0 %1162, %v1101
    %v1164 = vpop.permute.xlu0 %1163
    %1167 = vset.pattern.permute.xlu0 0
    %1168 = vperm.xlu0 %1167, %v1102
    %v1169 = vpop.permute.xlu0 %1168
    %1172 = vset.pattern.permute.xlu0 0
    %1173 = vperm.xlu0 %1172, %v1103
    %v1174 = vpop.permute.xlu0 %1173
    %1177 = vset.pattern.permute.xlu0 0
    %1178 = vperm.xlu0 %1177, %v1104
    %v1179 = vpop.permute.xlu0 %1178
    %1182 = vset.pattern.permute.xlu0 0
    %1183 = vperm.xlu0 %1182, %v1105
    %v1184 = vpop.permute.xlu0 %1183
    %1187 = vset.pattern.permute.xlu0 0
    %1188 = vperm.xlu0 %1187, %v1106
    %v1189 = vpop.permute.xlu0 %1188
    %1192 = vset.pattern.permute.xlu0 0
    %1193 = vperm.xlu0 %1192, %v1107
    %v1194 = vpop.permute.xlu0 %1193
    %1197 = vset.pattern.permute.xlu0 0
    %1198 = vperm.xlu0 %1197, %v1108
    %v1199 = vpop.permute.xlu0 %1198
    %1202 = vset.pattern.permute.xlu0 0
    %1203 = vperm.xlu0 %1202, %v1109
    %v1204 = vpop.permute.xlu0 %1203
    %v1206 = vmul.f32 %v1129, %v1047
    %v1207 = vmul.f32 %v1134, %v1050
    %v1208 = vmul.f32 %v1139, %v1053
    %v1209 = vmul.f32 %v1144, %v1056
    %v1210 = vmul.f32 %v1149, %v1059
    %v1211 = vmul.f32 %v1154, %v1062
    %v1212 = vmul.f32 %v1159, %v1065
    %v1213 = vmul.f32 %v1164, %v1068
    %v1214 = vmul.f32 %v1169, %v1071
    %v1215 = vmul.f32 %v1174, %v1074
    %v1216 = vmul.f32 %v1179, %v1077
    %v1217 = vmul.f32 %v1184, %v1080
    %v1218 = vmul.f32 %v1189, %v1083
    %v1219 = vmul.f32 %v1194, %v1086
    %v1220 = vmul.f32 %v1199, %v1089
    %v1221 = vmul.f32 %v1204, %v1092
    %v1222 = vpack.c.bf16 %v1206, %v1206
    %v1223 = vpack.c.bf16 %v1207, %v1207
    %v1224 = vpack.c.bf16 %v1208, %v1208
    %v1225 = vpack.c.bf16 %v1209, %v1209
    %v1226 = vpack.c.bf16 %v1210, %v1210
    %v1227 = vpack.c.bf16 %v1211, %v1211
    %v1228 = vpack.c.bf16 %v1212, %v1212
    %v1229 = vpack.c.bf16 %v1213, %v1213
    %v1230 = vpack.c.bf16 %v1214, %v1214
    %v1231 = vpack.c.bf16 %v1215, %v1215
    %v1232 = vpack.c.bf16 %v1216, %v1216
    %v1233 = vpack.c.bf16 %v1217, %v1217
    %v1234 = vpack.c.bf16 %v1218, %v1218
    %v1235 = vpack.c.bf16 %v1219, %v1219
    %v1236 = vpack.c.bf16 %v1220, %v1220
    %v1237 = vpack.c.bf16 %v1221, %v1221
    %v1238 = vunpack.c.l.bf16 %v1222
    %v1239 = vunpack.c.l.bf16 %v1223
    %v1240 = vunpack.c.l.bf16 %v1224
    %v1241 = vunpack.c.l.bf16 %v1225
    %v1242 = vunpack.c.l.bf16 %v1226
    %v1243 = vunpack.c.l.bf16 %v1227
    %v1244 = vunpack.c.l.bf16 %v1228
    %v1245 = vunpack.c.l.bf16 %v1229
    %v1246 = vunpack.c.l.bf16 %v1230
    %v1247 = vunpack.c.l.bf16 %v1231
    %v1248 = vunpack.c.l.bf16 %v1232
    %v1249 = vunpack.c.l.bf16 %v1233
    %v1250 = vunpack.c.l.bf16 %v1234
    %v1251 = vunpack.c.l.bf16 %v1235
    %v1252 = vunpack.c.l.bf16 %v1236
    %v1253 = vunpack.c.l.bf16 %v1237
    %v1254 = vsub.f32 %v1206, %v1238
    %v1255 = vsub.f32 %v1207, %v1239
    %v1256 = vsub.f32 %v1208, %v1240
    %v1257 = vsub.f32 %v1209, %v1241
    %v1258 = vsub.f32 %v1210, %v1242
    %v1259 = vsub.f32 %v1211, %v1243
    %v1260 = vsub.f32 %v1212, %v1244
    %v1261 = vsub.f32 %v1213, %v1245
    %v1262 = vsub.f32 %v1214, %v1246
    %v1263 = vsub.f32 %v1215, %v1247
    %v1264 = vsub.f32 %v1216, %v1248
    %v1265 = vsub.f32 %v1217, %v1249
    %v1266 = vsub.f32 %v1218, %v1250
    %v1267 = vsub.f32 %v1219, %v1251
    %v1268 = vsub.f32 %v1220, %v1252
    %v1269 = vsub.f32 %v1221, %v1253
    %v1270 = vpack.c.bf16 %v1255, %v1254
    %v1271 = vpack.c.bf16 %v1257, %v1256
    %v1272 = vpack.c.bf16 %v1259, %v1258
    %v1273 = vpack.c.bf16 %v1261, %v1260
    %v1274 = vpack.c.bf16 %v1263, %v1262
    %v1275 = vpack.c.bf16 %v1265, %v1264
    %v1276 = vpack.c.bf16 %v1267, %v1266
    %v1277 = vpack.c.bf16 %v1269, %v1268
    %v1294 = vunpack.c.l.b16 %v1110
    %v1295 = vunpack.c.l.b16 %v1111
    %v1296 = vunpack.c.l.b16 %v1112
    %v1297 = vunpack.c.l.b16 %v1113
    %v1298 = vunpack.c.l.b16 %v1114
    %v1299 = vunpack.c.l.b16 %v1115
    %v1300 = vunpack.c.l.b16 %v1116
    %v1301 = vunpack.c.l.b16 %v1117
    %v1302 = vunpack.c.l.b16 %v1118
    %v1303 = vunpack.c.l.b16 %v1119
    %v1304 = vunpack.c.l.b16 %v1120
    %v1305 = vunpack.c.l.b16 %v1121
    %v1306 = vunpack.c.l.b16 %v1122
    %v1307 = vunpack.c.l.b16 %v1123
    %v1308 = vunpack.c.l.b16 %v1124
    %v1309 = vunpack.c.l.b16 %v1125
    %v1310 = vpack.c.b16 %v1295, %v1294
    %v1311 = vpack.c.b16 %v1297, %v1296
    %v1312 = vpack.c.b16 %v1299, %v1298
    %v1313 = vpack.c.b16 %v1301, %v1300
    %v1314 = vpack.c.b16 %v1303, %v1302
    %v1315 = vpack.c.b16 %v1305, %v1304
    %v1316 = vpack.c.b16 %v1307, %v1306
    %v1317 = vpack.c.b16 %v1309, %v1308
    %1326 = vmatpush.bf16.msra.mxu0 %v1277
    %1327 = vmatpush.bf16.msra.mxu0 %v1276
    %1328 = vmatpush.bf16.msra.mxu0 %v1275
    %1329 = vmatpush.bf16.msra.mxu0 %v1274
    %1330 = vmatpush.bf16.msra.mxu0 %v1273
    %1331 = vmatpush.bf16.msra.mxu0 %v1272
    %1332 = vmatpush.bf16.msra.mxu0 %v1271
    %1333 = vmatpush.bf16.msra.mxu0 %v1270
    %1334 = vmatmul.bf16.gmra.mxu0 %v1310
    %v1335 = vpop.f32.mrf.mxu0
    %v1336 = vadd.f32 0.0, %v1335
    %v1337 = vpop.f32.mrf.mxu0
    %v1338 = vadd.f32 0.0, %v1337
    %1339 = vmatmul.bf16.gmra.mxu0 %v1311
    %v1340 = vpop.f32.mrf.mxu0
    %v1341 = vadd.f32 0.0, %v1340
    %v1342 = vpop.f32.mrf.mxu0
    %v1343 = vadd.f32 0.0, %v1342
    %1344 = vmatmul.bf16.gmra.mxu0 %v1312
    %v1345 = vpop.f32.mrf.mxu0
    %v1346 = vadd.f32 0.0, %v1345
    %v1347 = vpop.f32.mrf.mxu0
    %v1348 = vadd.f32 0.0, %v1347
    %1349 = vmatmul.bf16.gmra.mxu0 %v1313
    %v1350 = vpop.f32.mrf.mxu0
    %v1351 = vadd.f32 0.0, %v1350
    %v1352 = vpop.f32.mrf.mxu0
    %v1353 = vadd.f32 0.0, %v1352
    %1354 = vmatmul.bf16.gmra.mxu0 %v1314
    %v1355 = vpop.f32.mrf.mxu0
    %v1356 = vadd.f32 0.0, %v1355
    %v1357 = vpop.f32.mrf.mxu0
    %v1358 = vadd.f32 0.0, %v1357
    %1359 = vmatmul.bf16.gmra.mxu0 %v1315
    %v1360 = vpop.f32.mrf.mxu0
    %v1361 = vadd.f32 0.0, %v1360
    %v1362 = vpop.f32.mrf.mxu0
    %v1363 = vadd.f32 0.0, %v1362
    %1364 = vmatmul.bf16.gmra.mxu0 %v1316
    %v1365 = vpop.f32.mrf.mxu0
    %v1366 = vadd.f32 0.0, %v1365
    %v1367 = vpop.f32.mrf.mxu0
    %v1368 = vadd.f32 0.0, %v1367
    %1369 = vmatmul.bf16.gmra.mxu0 %v1317
    %v1370 = vpop.f32.mrf.mxu0
    %v1371 = vadd.f32 0.0, %v1370
    %v1372 = vpop.f32.mrf.mxu0
    %v1373 = vadd.f32 0.0, %v1372
    %1374 = vdwg.mxu0
    %v1391 = vunpack.c.l.b16 %v1222
    %v1392 = vunpack.c.l.b16 %v1223
    %v1393 = vunpack.c.l.b16 %v1224
    %v1394 = vunpack.c.l.b16 %v1225
    %v1395 = vunpack.c.l.b16 %v1226
    %v1396 = vunpack.c.l.b16 %v1227
    %v1397 = vunpack.c.l.b16 %v1228
    %v1398 = vunpack.c.l.b16 %v1229
    %v1399 = vunpack.c.l.b16 %v1230
    %v1400 = vunpack.c.l.b16 %v1231
    %v1401 = vunpack.c.l.b16 %v1232
    %v1402 = vunpack.c.l.b16 %v1233
    %v1403 = vunpack.c.l.b16 %v1234
    %v1404 = vunpack.c.l.b16 %v1235
    %v1405 = vunpack.c.l.b16 %v1236
    %v1406 = vunpack.c.l.b16 %v1237
    %v1407 = vpack.c.b16 %v1392, %v1391
    %v1408 = vpack.c.b16 %v1394, %v1393
    %v1409 = vpack.c.b16 %v1396, %v1395
    %v1410 = vpack.c.b16 %v1398, %v1397
    %v1411 = vpack.c.b16 %v1400, %v1399
    %v1412 = vpack.c.b16 %v1402, %v1401
    %v1413 = vpack.c.b16 %v1404, %v1403
    %v1414 = vpack.c.b16 %v1406, %v1405
    %1423 = vmatpush.bf16.msra.mxu0 %v1414
    %1424 = vmatpush.bf16.msra.mxu0 %v1413
    %1425 = vmatpush.bf16.msra.mxu0 %v1412
    %1426 = vmatpush.bf16.msra.mxu0 %v1411
    %1427 = vmatpush.bf16.msra.mxu0 %v1410
    %1428 = vmatpush.bf16.msra.mxu0 %v1409
    %1429 = vmatpush.bf16.msra.mxu0 %v1408
    %1430 = vmatpush.bf16.msra.mxu0 %v1407
    %1431 = vmatmul.bf16.gmra.mxu0 %v1310
    %v1432 = vpop.f32.mrf.mxu0
    %v1433 = vadd.f32 %v1336, %v1432
    %v1434 = vpop.f32.mrf.mxu0
    %v1435 = vadd.f32 %v1338, %v1434
    %1436 = vmatmul.bf16.gmra.mxu0 %v1311
    %v1437 = vpop.f32.mrf.mxu0
    %v1438 = vadd.f32 %v1341, %v1437
    %v1439 = vpop.f32.mrf.mxu0
    %v1440 = vadd.f32 %v1343, %v1439
    %1441 = vmatmul.bf16.gmra.mxu0 %v1312
    %v1442 = vpop.f32.mrf.mxu0
    %v1443 = vadd.f32 %v1346, %v1442
    %v1444 = vpop.f32.mrf.mxu0
    %v1445 = vadd.f32 %v1348, %v1444
    %1446 = vmatmul.bf16.gmra.mxu0 %v1313
    %v1447 = vpop.f32.mrf.mxu0
    %v1448 = vadd.f32 %v1351, %v1447
    %v1449 = vpop.f32.mrf.mxu0
    %v1450 = vadd.f32 %v1353, %v1449
    %1451 = vmatmul.bf16.gmra.mxu0 %v1314
    %v1452 = vpop.f32.mrf.mxu0
    %v1453 = vadd.f32 %v1356, %v1452
    %v1454 = vpop.f32.mrf.mxu0
    %v1455 = vadd.f32 %v1358, %v1454
    %1456 = vmatmul.bf16.gmra.mxu0 %v1315
    %v1457 = vpop.f32.mrf.mxu0
    %v1458 = vadd.f32 %v1361, %v1457
    %v1459 = vpop.f32.mrf.mxu0
    %v1460 = vadd.f32 %v1363, %v1459
    %1461 = vmatmul.bf16.gmra.mxu0 %v1316
    %v1462 = vpop.f32.mrf.mxu0
    %v1463 = vadd.f32 %v1366, %v1462
    %v1464 = vpop.f32.mrf.mxu0
    %v1465 = vadd.f32 %v1368, %v1464
    %1466 = vmatmul.bf16.gmra.mxu0 %v1317
    %v1467 = vpop.f32.mrf.mxu0
    %v1468 = vadd.f32 %v1371, %v1467
    %v1469 = vpop.f32.mrf.mxu0
    %v1470 = vadd.f32 %v1373, %v1469
    %1471 = vdwg.mxu0
    %v1472 = vmul.f32 %v1129, %v1433
    %v1473 = vmul.f32 %v1134, %v1435
    %v1474 = vmul.f32 %v1139, %v1438
    %v1475 = vmul.f32 %v1144, %v1440
    %v1476 = vmul.f32 %v1149, %v1443
    %v1477 = vmul.f32 %v1154, %v1445
    %v1478 = vmul.f32 %v1159, %v1448
    %v1479 = vmul.f32 %v1164, %v1450
    %v1480 = vmul.f32 %v1169, %v1453
    %v1481 = vmul.f32 %v1174, %v1455
    %v1482 = vmul.f32 %v1179, %v1458
    %v1483 = vmul.f32 %v1184, %v1460
    %v1484 = vmul.f32 %v1189, %v1463
    %v1485 = vmul.f32 %v1194, %v1465
    %v1486 = vmul.f32 %v1199, %v1468
    %v1487 = vmul.f32 %v1204, %v1470
    %v1488 = vld [vmem:[%s15] sm:$0x1]
    %v1490 = vperm.slane %v1488, 0
    %v1492 = vadd.f32 %v1472, %v1490
    %v1493 = vadd.f32 %v1473, %v1490
    %v1494 = vadd.f32 %v1474, %v1490
    %v1495 = vadd.f32 %v1475, %v1490
    %v1496 = vadd.f32 %v1476, %v1490
    %v1497 = vadd.f32 %v1477, %v1490
    %v1498 = vadd.f32 %v1478, %v1490
    %v1499 = vadd.f32 %v1479, %v1490
    %v1500 = vadd.f32 %v1480, %v1490
    %v1501 = vadd.f32 %v1481, %v1490
    %v1502 = vadd.f32 %v1482, %v1490
    %v1503 = vadd.f32 %v1483, %v1490
    %v1504 = vadd.f32 %v1484, %v1490
    %v1505 = vadd.f32 %v1485, %v1490
    %v1506 = vadd.f32 %v1486, %v1490
    %v1507 = vadd.f32 %v1487, %v1490
    %v1508 = vld [vmem:[#allocation8] sm:$0xff]
    %v1509 = vld [vmem:[#allocation8 + $0x8] sm:$0xff]
    %v1510 = vld [vmem:[#allocation8 + $0x10] sm:$0xff]
    %v1511 = vld [vmem:[#allocation8 + $0x18] sm:$0xff]
    %v1512 = vld [vmem:[#allocation8 + $0x20] sm:$0xff]
    %v1513 = vld [vmem:[#allocation8 + $0x28] sm:$0xff]
    %v1514 = vld [vmem:[#allocation8 + $0x30] sm:$0xff]
    %v1515 = vld [vmem:[#allocation8 + $0x38] sm:$0xff]
    %v1516 = vld [vmem:[#allocation8 + $0x40] sm:$0xff]
    %v1517 = vld [vmem:[#allocation8 + $0x48] sm:$0xff]
    %v1518 = vld [vmem:[#allocation8 + $0x50] sm:$0xff]
    %v1519 = vld [vmem:[#allocation8 + $0x58] sm:$0xff]
    %v1520 = vld [vmem:[#allocation8 + $0x60] sm:$0xff]
    %v1521 = vld [vmem:[#allocation8 + $0x68] sm:$0xff]
    %v1522 = vld [vmem:[#allocation8 + $0x70] sm:$0xff]
    %v1523 = vld [vmem:[#allocation8 + $0x78] sm:$0xff]
    %v1524 = vld [vmem:[%s17] sm:$0x1]
    %v1526 = vperm.slane %v1524, 0
    %1528 = vmatpush.xpose.msra.mxu0 %v1523
    %1529 = vmatpush.xpose.msra.mxu0 %v1522
    %1530 = vmatpush.xpose.msra.mxu0 %v1521
    %1531 = vmatpush.xpose.msra.mxu0 %v1520
    %1532 = vmatpush.xpose.msra.mxu0 %v1519
    %1533 = vmatpush.xpose.msra.mxu0 %v1518
    %1534 = vmatpush.xpose.msra.mxu0 %v1517
    %1535 = vmatpush.xpose.msra.mxu0 %v1516
    %1536 = vmatpush.xpose.msra.mxu0 %v1515
    %1537 = vmatpush.xpose.msra.mxu0 %v1514
    %1538 = vmatpush.xpose.msra.mxu0 %v1513
    %1539 = vmatpush.xpose.msra.mxu0 %v1512
    %1540 = vmatpush.xpose.msra.mxu0 %v1511
    %1541 = vmatpush.xpose.msra.mxu0 %v1510
    %1542 = vmatpush.xpose.msra.mxu0 %v1509
    %1543 = vmatpush.xpose.msra.mxu0 %v1508
    %1544 = vmatmul.f32.gmra.mxu0 %v1492
    %v1545 = vpop.f32.mrf.mxu0
    %v1546 = vadd.f32 %v1526, %v1545
    %1547 = vmatmul.f32.gmra.mxu0 %v1493
    %v1548 = vpop.f32.mrf.mxu0
    %v1549 = vadd.f32 %v1526, %v1548
    %1550 = vmatmul.f32.gmra.mxu0 %v1494
    %v1551 = vpop.f32.mrf.mxu0
    %v1552 = vadd.f32 %v1526, %v1551
    %1553 = vmatmul.f32.gmra.mxu0 %v1495
    %v1554 = vpop.f32.mrf.mxu0
    %v1555 = vadd.f32 %v1526, %v1554
    %1556 = vmatmul.f32.gmra.mxu0 %v1496
    %v1557 = vpop.f32.mrf.mxu0
    %v1558 = vadd.f32 %v1526, %v1557
    %1559 = vmatmul.f32.gmra.mxu0 %v1497
    %v1560 = vpop.f32.mrf.mxu0
    %v1561 = vadd.f32 %v1526, %v1560
    %1562 = vmatmul.f32.gmra.mxu0 %v1498
    %v1563 = vpop.f32.mrf.mxu0
    %v1564 = vadd.f32 %v1526, %v1563
    %1565 = vmatmul.f32.gmra.mxu0 %v1499
    %v1566 = vpop.f32.mrf.mxu0
    %v1567 = vadd.f32 %v1526, %v1566
    %1568 = vmatmul.f32.gmra.mxu0 %v1500
    %v1569 = vpop.f32.mrf.mxu0
    %v1570 = vadd.f32 %v1526, %v1569
    %1571 = vmatmul.f32.gmra.mxu0 %v1501
    %v1572 = vpop.f32.mrf.mxu0
    %v1573 = vadd.f32 %v1526, %v1572
    %1574 = vmatmul.f32.gmra.mxu0 %v1502
    %v1575 = vpop.f32.mrf.mxu0
    %v1576 = vadd.f32 %v1526, %v1575
    %1577 = vmatmul.f32.gmra.mxu0 %v1503
    %v1578 = vpop.f32.mrf.mxu0
    %v1579 = vadd.f32 %v1526, %v1578
    %1580 = vmatmul.f32.gmra.mxu0 %v1504
    %v1581 = vpop.f32.mrf.mxu0
    %v1582 = vadd.f32 %v1526, %v1581
    %1583 = vmatmul.f32.gmra.mxu0 %v1505
    %v1584 = vpop.f32.mrf.mxu0
    %v1585 = vadd.f32 %v1526, %v1584
    %1586 = vmatmul.f32.gmra.mxu0 %v1506
    %v1587 = vpop.f32.mrf.mxu0
    %v1588 = vadd.f32 %v1526, %v1587
    %1589 = vmatmul.f32.gmra.mxu0 %v1507
    %v1590 = vpop.f32.mrf.mxu0
    %v1591 = vadd.f32 %v1526, %v1590
    %1592 = vdwg.mxu0
    %vm1593 = vcmp.gt.f32.partialorder %v1546, 0.0
    %vm1594 = vcmp.gt.f32.partialorder %v1549, 0.0
    %vm1595 = vcmp.gt.f32.partialorder %v1552, 0.0
    %vm1596 = vcmp.gt.f32.partialorder %v1555, 0.0
    %vm1597 = vcmp.gt.f32.partialorder %v1558, 0.0
    %vm1598 = vcmp.gt.f32.partialorder %v1561, 0.0
    %vm1599 = vcmp.gt.f32.partialorder %v1564, 0.0
    %vm1600 = vcmp.gt.f32.partialorder %v1567, 0.0
    %vm1601 = vcmp.gt.f32.partialorder %v1570, 0.0
    %vm1602 = vcmp.gt.f32.partialorder %v1573, 0.0
    %vm1603 = vcmp.gt.f32.partialorder %v1576, 0.0
    %vm1604 = vcmp.gt.f32.partialorder %v1579, 0.0
    %vm1605 = vcmp.gt.f32.partialorder %v1582, 0.0
    %vm1606 = vcmp.gt.f32.partialorder %v1585, 0.0
    %vm1607 = vcmp.gt.f32.partialorder %v1588, 0.0
    %vm1608 = vcmp.gt.f32.partialorder %v1591, 0.0
    %v1609 = vmul.f32 %v1546, 0.01
    %v1610 = vmul.f32 %v1549, 0.01
    %v1611 = vmul.f32 %v1552, 0.01
    %v1612 = vmul.f32 %v1555, 0.01
    %v1613 = vmul.f32 %v1558, 0.01
    %v1614 = vmul.f32 %v1561, 0.01
    %v1615 = vmul.f32 %v1564, 0.01
    %v1616 = vmul.f32 %v1567, 0.01
    %v1617 = vmul.f32 %v1570, 0.01
    %v1618 = vmul.f32 %v1573, 0.01
    %v1619 = vmul.f32 %v1576, 0.01
    %v1620 = vmul.f32 %v1579, 0.01
    %v1621 = vmul.f32 %v1582, 0.01
    %v1622 = vmul.f32 %v1585, 0.01
    %v1623 = vmul.f32 %v1588, 0.01
    %v1624 = vmul.f32 %v1591, 0.01
    %v1625 = vsel %vm1593, %v1546, %v1609
    %v1626 = vsel %vm1594, %v1549, %v1610
    %v1627 = vsel %vm1595, %v1552, %v1611
    %v1628 = vsel %vm1596, %v1555, %v1612
    %v1629 = vsel %vm1597, %v1558, %v1613
    %v1630 = vsel %vm1598, %v1561, %v1614
    %v1631 = vsel %vm1599, %v1564, %v1615
    %v1632 = vsel %vm1600, %v1567, %v1616
    %v1633 = vsel %vm1601, %v1570, %v1617
    %v1634 = vsel %vm1602, %v1573, %v1618
    %v1635 = vsel %vm1603, %v1576, %v1619
    %v1636 = vsel %vm1604, %v1579, %v1620
    %v1637 = vsel %vm1605, %v1582, %v1621
    %v1638 = vsel %vm1606, %v1585, %v1622
    %v1639 = vsel %vm1607, %v1588, %v1623
    %v1640 = vsel %vm1608, %v1591, %v1624
    %v1641 = vld [vmem:[#allocation2] sm:$0xff]
    %v1642 = vperm.slane %v1641, 0
    %v1643 = vlaneseq
    %v1644 = vshrl.u32 %v1643, 7
    %1646 = vset.pattern.permute.xlu0 %v1644
    %1647 = vperm.xlu0 %1646, %v1642
    %v1648 = vpop.permute.xlu0 %1647
    %v1649 = vlaneseq
    %v1650 = vshrl.u32 %v1649, 7
    %v1651 = vadd.s32 %v1650, 8
    %1652 = vset.pattern.permute.xlu0 %v1651
    %1653 = vperm.xlu0 %1652, %v1642
    %v1654 = vpop.permute.xlu0 %1653
    %v1655 = vlaneseq
    %v1656 = vshrl.u32 %v1655, 7
    %v1657 = vadd.s32 %v1656, 16
    %1658 = vset.pattern.permute.xlu0 %v1657
    %1659 = vperm.xlu0 %1658, %v1642
    %v1660 = vpop.permute.xlu0 %1659
    %v1661 = vlaneseq
    %v1662 = vshrl.u32 %v1661, 7
    %v1663 = vadd.s32 %v1662, 24
    %1664 = vset.pattern.permute.xlu0 %v1663
    %1665 = vperm.xlu0 %1664, %v1642
    %v1666 = vpop.permute.xlu0 %1665
    %v1667 = vlaneseq
    %v1668 = vshrl.u32 %v1667, 7
    %v1669 = vadd.s32 %v1668, 32
    %1670 = vset.pattern.permute.xlu0 %v1669
    %1671 = vperm.xlu0 %1670, %v1642
    %v1672 = vpop.permute.xlu0 %1671
    %v1673 = vlaneseq
    %v1674 = vshrl.u32 %v1673, 7
    %v1675 = vadd.s32 %v1674, 40
    %1676 = vset.pattern.permute.xlu0 %v1675
    %1677 = vperm.xlu0 %1676, %v1642
    %v1678 = vpop.permute.xlu0 %1677
    %v1679 = vlaneseq
    %v1680 = vshrl.u32 %v1679, 7
    %v1681 = vadd.s32 %v1680, 48
    %1682 = vset.pattern.permute.xlu0 %v1681
    %1683 = vperm.xlu0 %1682, %v1642
    %v1684 = vpop.permute.xlu0 %1683
    %v1685 = vlaneseq
    %v1686 = vshrl.u32 %v1685, 7
    %v1687 = vadd.s32 %v1686, 56
    %1688 = vset.pattern.permute.xlu0 %v1687
    %1689 = vperm.xlu0 %1688, %v1642
    %v1690 = vpop.permute.xlu0 %1689
    %v1691 = vlaneseq
    %v1692 = vshrl.u32 %v1691, 7
    %v1693 = vadd.s32 %v1692, 64
    %1694 = vset.pattern.permute.xlu0 %v1693
    %1695 = vperm.xlu0 %1694, %v1642
    %v1696 = vpop.permute.xlu0 %1695
    %v1697 = vlaneseq
    %v1698 = vshrl.u32 %v1697, 7
    %v1699 = vadd.s32 %v1698, 72
    %1700 = vset.pattern.permute.xlu0 %v1699
    %1701 = vperm.xlu0 %1700, %v1642
    %v1702 = vpop.permute.xlu0 %1701
    %v1703 = vlaneseq
    %v1704 = vshrl.u32 %v1703, 7
    %v1705 = vadd.s32 %v1704, 80
    %1706 = vset.pattern.permute.xlu0 %v1705
    %1707 = vperm.xlu0 %1706, %v1642
    %v1708 = vpop.permute.xlu0 %1707
    %v1709 = vlaneseq
    %v1710 = vshrl.u32 %v1709, 7
    %v1711 = vadd.s32 %v1710, 88
    %1712 = vset.pattern.permute.xlu0 %v1711
    %1713 = vperm.xlu0 %1712, %v1642
    %v1714 = vpop.permute.xlu0 %1713
    %v1715 = vlaneseq
    %v1716 = vshrl.u32 %v1715, 7
    %v1717 = vadd.s32 %v1716, 96
    %1718 = vset.pattern.permute.xlu0 %v1717
    %1719 = vperm.xlu0 %1718, %v1642
    %v1720 = vpop.permute.xlu0 %1719
    %v1721 = vlaneseq
    %v1722 = vshrl.u32 %v1721, 7
    %v1723 = vadd.s32 %v1722, 104
    %1724 = vset.pattern.permute.xlu0 %v1723
    %1725 = vperm.xlu0 %1724, %v1642
    %v1726 = vpop.permute.xlu0 %1725
    %v1727 = vlaneseq
    %v1728 = vshrl.u32 %v1727, 7
    %v1729 = vadd.s32 %v1728, 112
    %1730 = vset.pattern.permute.xlu0 %v1729
    %1731 = vperm.xlu0 %1730, %v1642
    %v1732 = vpop.permute.xlu0 %1731
    %v1733 = vlaneseq
    %v1734 = vshrl.u32 %v1733, 7
    %v1735 = vadd.s32 %v1734, 120
    %1736 = vset.pattern.permute.xlu0 %v1735
    %1737 = vperm.xlu0 %1736, %v1642
    %v1738 = vpop.permute.xlu0 %1737
    %v1739 = vperm.slane %v1641, 1
    %v1740 = vlaneseq
    %v1741 = vshrl.u32 %v1740, 7
    %1743 = vset.pattern.permute.xlu0 %v1741
    %1744 = vperm.xlu0 %1743, %v1739
    %v1745 = vpop.permute.xlu0 %1744
    %v1746 = vlaneseq
    %v1747 = vshrl.u32 %v1746, 7
    %v1748 = vadd.s32 %v1747, 8
    %1749 = vset.pattern.permute.xlu0 %v1748
    %1750 = vperm.xlu0 %1749, %v1739
    %v1751 = vpop.permute.xlu0 %1750
    %v1752 = vlaneseq
    %v1753 = vshrl.u32 %v1752, 7
    %v1754 = vadd.s32 %v1753, 16
    %1755 = vset.pattern.permute.xlu0 %v1754
    %1756 = vperm.xlu0 %1755, %v1739
    %v1757 = vpop.permute.xlu0 %1756
    %v1758 = vlaneseq
    %v1759 = vshrl.u32 %v1758, 7
    %v1760 = vadd.s32 %v1759, 24
    %1761 = vset.pattern.permute.xlu0 %v1760
    %1762 = vperm.xlu0 %1761, %v1739
    %v1763 = vpop.permute.xlu0 %1762
    %v1764 = vlaneseq
    %v1765 = vshrl.u32 %v1764, 7
    %v1766 = vadd.s32 %v1765, 32
    %1767 = vset.pattern.permute.xlu0 %v1766
    %1768 = vperm.xlu0 %1767, %v1739
    %v1769 = vpop.permute.xlu0 %1768
    %v1770 = vlaneseq
    %v1771 = vshrl.u32 %v1770, 7
    %v1772 = vadd.s32 %v1771, 40
    %1773 = vset.pattern.permute.xlu0 %v1772
    %1774 = vperm.xlu0 %1773, %v1739
    %v1775 = vpop.permute.xlu0 %1774
    %v1776 = vlaneseq
    %v1777 = vshrl.u32 %v1776, 7
    %v1778 = vadd.s32 %v1777, 48
    %1779 = vset.pattern.permute.xlu0 %v1778
    %1780 = vperm.xlu0 %1779, %v1739
    %v1781 = vpop.permute.xlu0 %1780
    %v1782 = vlaneseq
    %v1783 = vshrl.u32 %v1782, 7
    %v1784 = vadd.s32 %v1783, 56
    %1785 = vset.pattern.permute.xlu0 %v1784
    %1786 = vperm.xlu0 %1785, %v1739
    %v1787 = vpop.permute.xlu0 %1786
    %v1788 = vlaneseq
    %v1789 = vshrl.u32 %v1788, 7
    %v1790 = vadd.s32 %v1789, 64
    %1791 = vset.pattern.permute.xlu0 %v1790
    %1792 = vperm.xlu0 %1791, %v1739
    %v1793 = vpop.permute.xlu0 %1792
    %v1794 = vlaneseq
    %v1795 = vshrl.u32 %v1794, 7
    %v1796 = vadd.s32 %v1795, 72
    %1797 = vset.pattern.permute.xlu0 %v1796
    %1798 = vperm.xlu0 %1797, %v1739
    %v1799 = vpop.permute.xlu0 %1798
    %v1800 = vlaneseq
    %v1801 = vshrl.u32 %v1800, 7
    %v1802 = vadd.s32 %v1801, 80
    %1803 = vset.pattern.permute.xlu0 %v1802
    %1804 = vperm.xlu0 %1803, %v1739
    %v1805 = vpop.permute.xlu0 %1804
    %v1806 = vlaneseq
    %v1807 = vshrl.u32 %v1806, 7
    %v1808 = vadd.s32 %v1807, 88
    %1809 = vset.pattern.permute.xlu0 %v1808
    %1810 = vperm.xlu0 %1809, %v1739
    %v1811 = vpop.permute.xlu0 %1810
    %v1812 = vlaneseq
    %v1813 = vshrl.u32 %v1812, 7
    %v1814 = vadd.s32 %v1813, 96
    %1815 = vset.pattern.permute.xlu0 %v1814
    %1816 = vperm.xlu0 %1815, %v1739
    %v1817 = vpop.permute.xlu0 %1816
    %v1818 = vlaneseq
    %v1819 = vshrl.u32 %v1818, 7
    %v1820 = vadd.s32 %v1819, 104
    %1821 = vset.pattern.permute.xlu0 %v1820
    %1822 = vperm.xlu0 %1821, %v1739
    %v1823 = vpop.permute.xlu0 %1822
    %v1824 = vlaneseq
    %v1825 = vshrl.u32 %v1824, 7
    %v1826 = vadd.s32 %v1825, 112
    %1827 = vset.pattern.permute.xlu0 %v1826
    %1828 = vperm.xlu0 %1827, %v1739
    %v1829 = vpop.permute.xlu0 %1828
    %v1830 = vlaneseq
    %v1831 = vshrl.u32 %v1830, 7
    %v1832 = vadd.s32 %v1831, 120
    %1833 = vset.pattern.permute.xlu0 %v1832
    %1834 = vperm.xlu0 %1833, %v1739
    %v1835 = vpop.permute.xlu0 %1834
    %v1836 = vperm.slane %v1641, 2
    %v1837 = vlaneseq
    %v1838 = vshrl.u32 %v1837, 7
    %1840 = vset.pattern.permute.xlu0 %v1838
    %1841 = vperm.xlu0 %1840, %v1836
    %v1842 = vpop.permute.xlu0 %1841
    %v1843 = vlaneseq
    %v1844 = vshrl.u32 %v1843, 7
    %v1845 = vadd.s32 %v1844, 8
    %1846 = vset.pattern.permute.xlu0 %v1845
    %1847 = vperm.xlu0 %1846, %v1836
    %v1848 = vpop.permute.xlu0 %1847
    %v1849 = vlaneseq
    %v1850 = vshrl.u32 %v1849, 7
    %v1851 = vadd.s32 %v1850, 16
    %1852 = vset.pattern.permute.xlu0 %v1851
    %1853 = vperm.xlu0 %1852, %v1836
    %v1854 = vpop.permute.xlu0 %1853
    %v1855 = vlaneseq
    %v1856 = vshrl.u32 %v1855, 7
    %v1857 = vadd.s32 %v1856, 24
    %1858 = vset.pattern.permute.xlu0 %v1857
    %1859 = vperm.xlu0 %1858, %v1836
    %v1860 = vpop.permute.xlu0 %1859
    %v1861 = vlaneseq
    %v1862 = vshrl.u32 %v1861, 7
    %v1863 = vadd.s32 %v1862, 32
    %1864 = vset.pattern.permute.xlu0 %v1863
    %1865 = vperm.xlu0 %1864, %v1836
    %v1866 = vpop.permute.xlu0 %1865
    %v1867 = vlaneseq
    %v1868 = vshrl.u32 %v1867, 7
    %v1869 = vadd.s32 %v1868, 40
    %1870 = vset.pattern.permute.xlu0 %v1869
    %1871 = vperm.xlu0 %1870, %v1836
    %v1872 = vpop.permute.xlu0 %1871
    %v1873 = vlaneseq
    %v1874 = vshrl.u32 %v1873, 7
    %v1875 = vadd.s32 %v1874, 48
    %1876 = vset.pattern.permute.xlu0 %v1875
    %1877 = vperm.xlu0 %1876, %v1836
    %v1878 = vpop.permute.xlu0 %1877
    %v1879 = vlaneseq
    %v1880 = vshrl.u32 %v1879, 7
    %v1881 = vadd.s32 %v1880, 56
    %1882 = vset.pattern.permute.xlu0 %v1881
    %1883 = vperm.xlu0 %1882, %v1836
    %v1884 = vpop.permute.xlu0 %1883
    %v1885 = vlaneseq
    %v1886 = vshrl.u32 %v1885, 7
    %v1887 = vadd.s32 %v1886, 64
    %1888 = vset.pattern.permute.xlu0 %v1887
    %1889 = vperm.xlu0 %1888, %v1836
    %v1890 = vpop.permute.xlu0 %1889
    %v1891 = vlaneseq
    %v1892 = vshrl.u32 %v1891, 7
    %v1893 = vadd.s32 %v1892, 72
    %1894 = vset.pattern.permute.xlu0 %v1893
    %1895 = vperm.xlu0 %1894, %v1836
    %v1896 = vpop.permute.xlu0 %1895
    %v1897 = vlaneseq
    %v1898 = vshrl.u32 %v1897, 7
    %v1899 = vadd.s32 %v1898, 80
    %1900 = vset.pattern.permute.xlu0 %v1899
    %1901 = vperm.xlu0 %1900, %v1836
    %v1902 = vpop.permute.xlu0 %1901
    %v1903 = vlaneseq
    %v1904 = vshrl.u32 %v1903, 7
    %v1905 = vadd.s32 %v1904, 88
    %1906 = vset.pattern.permute.xlu0 %v1905
    %1907 = vperm.xlu0 %1906, %v1836
    %v1908 = vpop.permute.xlu0 %1907
    %v1909 = vlaneseq
    %v1910 = vshrl.u32 %v1909, 7
    %v1911 = vadd.s32 %v1910, 96
    %1912 = vset.pattern.permute.xlu0 %v1911
    %1913 = vperm.xlu0 %1912, %v1836
    %v1914 = vpop.permute.xlu0 %1913
    %v1915 = vlaneseq
    %v1916 = vshrl.u32 %v1915, 7
    %v1917 = vadd.s32 %v1916, 104
    %1918 = vset.pattern.permute.xlu0 %v1917
    %1919 = vperm.xlu0 %1918, %v1836
    %v1920 = vpop.permute.xlu0 %1919
    %v1921 = vlaneseq
    %v1922 = vshrl.u32 %v1921, 7
    %v1923 = vadd.s32 %v1922, 112
    %1924 = vset.pattern.permute.xlu0 %v1923
    %1925 = vperm.xlu0 %1924, %v1836
    %v1926 = vpop.permute.xlu0 %1925
    %v1927 = vlaneseq
    %v1928 = vshrl.u32 %v1927, 7
    %v1929 = vadd.s32 %v1928, 120
    %1930 = vset.pattern.permute.xlu0 %v1929
    %1931 = vperm.xlu0 %1930, %v1836
    %v1932 = vpop.permute.xlu0 %1931
    %v1933 = vperm.slane %v1641, 3
    %v1934 = vlaneseq
    %v1935 = vshrl.u32 %v1934, 7
    %1937 = vset.pattern.permute.xlu0 %v1935
    %1938 = vperm.xlu0 %1937, %v1933
    %v1939 = vpop.permute.xlu0 %1938
    %v1940 = vlaneseq
    %v1941 = vshrl.u32 %v1940, 7
    %v1942 = vadd.s32 %v1941, 8
    %1943 = vset.pattern.permute.xlu0 %v1942
    %1944 = vperm.xlu0 %1943, %v1933
    %v1945 = vpop.permute.xlu0 %1944
    %v1946 = vlaneseq
    %v1947 = vshrl.u32 %v1946, 7
    %v1948 = vadd.s32 %v1947, 16
    %1949 = vset.pattern.permute.xlu0 %v1948
    %1950 = vperm.xlu0 %1949, %v1933
    %v1951 = vpop.permute.xlu0 %1950
    %v1952 = vlaneseq
    %v1953 = vshrl.u32 %v1952, 7
    %v1954 = vadd.s32 %v1953, 24
    %1955 = vset.pattern.permute.xlu0 %v1954
    %1956 = vperm.xlu0 %1955, %v1933
    %v1957 = vpop.permute.xlu0 %1956
    %v1958 = vlaneseq
    %v1959 = vshrl.u32 %v1958, 7
    %v1960 = vadd.s32 %v1959, 32
    %1961 = vset.pattern.permute.xlu0 %v1960
    %1962 = vperm.xlu0 %1961, %v1933
    %v1963 = vpop.permute.xlu0 %1962
    %v1964 = vlaneseq
    %v1965 = vshrl.u32 %v1964, 7
    %v1966 = vadd.s32 %v1965, 40
    %1967 = vset.pattern.permute.xlu0 %v1966
    %1968 = vperm.xlu0 %1967, %v1933
    %v1969 = vpop.permute.xlu0 %1968
    %v1970 = vlaneseq
    %v1971 = vshrl.u32 %v1970, 7
    %v1972 = vadd.s32 %v1971, 48
    %1973 = vset.pattern.permute.xlu0 %v1972
    %1974 = vperm.xlu0 %1973, %v1933
    %v1975 = vpop.permute.xlu0 %1974
    %v1976 = vlaneseq
    %v1977 = vshrl.u32 %v1976, 7
    %v1978 = vadd.s32 %v1977, 56
    %1979 = vset.pattern.permute.xlu0 %v1978
    %1980 = vperm.xlu0 %1979, %v1933
    %v1981 = vpop.permute.xlu0 %1980
    %v1982 = vlaneseq
    %v1983 = vshrl.u32 %v1982, 7
    %v1984 = vadd.s32 %v1983, 64
    %1985 = vset.pattern.permute.xlu0 %v1984
    %1986 = vperm.xlu0 %1985, %v1933
    %v1987 = vpop.permute.xlu0 %1986
    %v1988 = vlaneseq
    %v1989 = vshrl.u32 %v1988, 7
    %v1990 = vadd.s32 %v1989, 72
    %1991 = vset.pattern.permute.xlu0 %v1990
    %1992 = vperm.xlu0 %1991, %v1933
    %v1993 = vpop.permute.xlu0 %1992
    %v1994 = vlaneseq
    %v1995 = vshrl.u32 %v1994, 7
    %v1996 = vadd.s32 %v1995, 80
    %1997 = vset.pattern.permute.xlu0 %v1996
    %1998 = vperm.xlu0 %1997, %v1933
    %v1999 = vpop.permute.xlu0 %1998
    %v2000 = vlaneseq
    %v2001 = vshrl.u32 %v2000, 7
    %v2002 = vadd.s32 %v2001, 88
    %2003 = vset.pattern.permute.xlu0 %v2002
    %2004 = vperm.xlu0 %2003, %v1933
    %v2005 = vpop.permute.xlu0 %2004
    %v2006 = vlaneseq
    %v2007 = vshrl.u32 %v2006, 7
    %v2008 = vadd.s32 %v2007, 96
    %2009 = vset.pattern.permute.xlu0 %v2008
    %2010 = vperm.xlu0 %2009, %v1933
    %v2011 = vpop.permute.xlu0 %2010
    %v2012 = vlaneseq
    %v2013 = vshrl.u32 %v2012, 7
    %v2014 = vadd.s32 %v2013, 104
    %2015 = vset.pattern.permute.xlu0 %v2014
    %2016 = vperm.xlu0 %2015, %v1933
    %v2017 = vpop.permute.xlu0 %2016
    %v2018 = vlaneseq
    %v2019 = vshrl.u32 %v2018, 7
    %v2020 = vadd.s32 %v2019, 112
    %2021 = vset.pattern.permute.xlu0 %v2020
    %2022 = vperm.xlu0 %2021, %v1933
    %v2023 = vpop.permute.xlu0 %2022
    %v2024 = vlaneseq
    %v2025 = vshrl.u32 %v2024, 7
    %v2026 = vadd.s32 %v2025, 120
    %2027 = vset.pattern.permute.xlu0 %v2026
    %2028 = vperm.xlu0 %2027, %v1933
    %v2029 = vpop.permute.xlu0 %2028
    %v2030 = vperm.slane %v1641, 4
    %v2031 = vlaneseq
    %v2032 = vshrl.u32 %v2031, 7
    %2034 = vset.pattern.permute.xlu0 %v2032
    %2035 = vperm.xlu0 %2034, %v2030
    %v2036 = vpop.permute.xlu0 %2035
    %v2037 = vlaneseq
    %v2038 = vshrl.u32 %v2037, 7
    %v2039 = vadd.s32 %v2038, 8
    %2040 = vset.pattern.permute.xlu0 %v2039
    %2041 = vperm.xlu0 %2040, %v2030
    %v2042 = vpop.permute.xlu0 %2041
    %v2043 = vlaneseq
    %v2044 = vshrl.u32 %v2043, 7
    %v2045 = vadd.s32 %v2044, 16
    %2046 = vset.pattern.permute.xlu0 %v2045
    %2047 = vperm.xlu0 %2046, %v2030
    %v2048 = vpop.permute.xlu0 %2047
    %v2049 = vlaneseq
    %v2050 = vshrl.u32 %v2049, 7
    %v2051 = vadd.s32 %v2050, 24
    %2052 = vset.pattern.permute.xlu0 %v2051
    %2053 = vperm.xlu0 %2052, %v2030
    %v2054 = vpop.permute.xlu0 %2053
    %v2055 = vlaneseq
    %v2056 = vshrl.u32 %v2055, 7
    %v2057 = vadd.s32 %v2056, 32
    %2058 = vset.pattern.permute.xlu0 %v2057
    %2059 = vperm.xlu0 %2058, %v2030
    %v2060 = vpop.permute.xlu0 %2059
    %v2061 = vlaneseq
    %v2062 = vshrl.u32 %v2061, 7
    %v2063 = vadd.s32 %v2062, 40
    %2064 = vset.pattern.permute.xlu0 %v2063
    %2065 = vperm.xlu0 %2064, %v2030
    %v2066 = vpop.permute.xlu0 %2065
    %v2067 = vlaneseq
    %v2068 = vshrl.u32 %v2067, 7
    %v2069 = vadd.s32 %v2068, 48
    %2070 = vset.pattern.permute.xlu0 %v2069
    %2071 = vperm.xlu0 %2070, %v2030
    %v2072 = vpop.permute.xlu0 %2071
    %v2073 = vlaneseq
    %v2074 = vshrl.u32 %v2073, 7
    %v2075 = vadd.s32 %v2074, 56
    %2076 = vset.pattern.permute.xlu0 %v2075
    %2077 = vperm.xlu0 %2076, %v2030
    %v2078 = vpop.permute.xlu0 %2077
    %v2079 = vlaneseq
    %v2080 = vshrl.u32 %v2079, 7
    %v2081 = vadd.s32 %v2080, 64
    %2082 = vset.pattern.permute.xlu0 %v2081
    %2083 = vperm.xlu0 %2082, %v2030
    %v2084 = vpop.permute.xlu0 %2083
    %v2085 = vlaneseq
    %v2086 = vshrl.u32 %v2085, 7
    %v2087 = vadd.s32 %v2086, 72
    %2088 = vset.pattern.permute.xlu0 %v2087
    %2089 = vperm.xlu0 %2088, %v2030
    %v2090 = vpop.permute.xlu0 %2089
    %v2091 = vlaneseq
    %v2092 = vshrl.u32 %v2091, 7
    %v2093 = vadd.s32 %v2092, 80
    %2094 = vset.pattern.permute.xlu0 %v2093
    %2095 = vperm.xlu0 %2094, %v2030
    %v2096 = vpop.permute.xlu0 %2095
    %v2097 = vlaneseq
    %v2098 = vshrl.u32 %v2097, 7
    %v2099 = vadd.s32 %v2098, 88
    %2100 = vset.pattern.permute.xlu0 %v2099
    %2101 = vperm.xlu0 %2100, %v2030
    %v2102 = vpop.permute.xlu0 %2101
    %v2103 = vlaneseq
    %v2104 = vshrl.u32 %v2103, 7
    %v2105 = vadd.s32 %v2104, 96
    %2106 = vset.pattern.permute.xlu0 %v2105
    %2107 = vperm.xlu0 %2106, %v2030
    %v2108 = vpop.permute.xlu0 %2107
    %v2109 = vlaneseq
    %v2110 = vshrl.u32 %v2109, 7
    %v2111 = vadd.s32 %v2110, 104
    %2112 = vset.pattern.permute.xlu0 %v2111
    %2113 = vperm.xlu0 %2112, %v2030
    %v2114 = vpop.permute.xlu0 %2113
    %v2115 = vlaneseq
    %v2116 = vshrl.u32 %v2115, 7
    %v2117 = vadd.s32 %v2116, 112
    %2118 = vset.pattern.permute.xlu0 %v2117
    %2119 = vperm.xlu0 %2118, %v2030
    %v2120 = vpop.permute.xlu0 %2119
    %v2121 = vlaneseq
    %v2122 = vshrl.u32 %v2121, 7
    %v2123 = vadd.s32 %v2122, 120
    %2124 = vset.pattern.permute.xlu0 %v2123
    %2125 = vperm.xlu0 %2124, %v2030
    %v2126 = vpop.permute.xlu0 %2125
    %v2127 = vperm.slane %v1641, 5
    %v2128 = vlaneseq
    %v2129 = vshrl.u32 %v2128, 7
    %2131 = vset.pattern.permute.xlu0 %v2129
    %2132 = vperm.xlu0 %2131, %v2127
    %v2133 = vpop.permute.xlu0 %2132
    %v2134 = vlaneseq
    %v2135 = vshrl.u32 %v2134, 7
    %v2136 = vadd.s32 %v2135, 8
    %2137 = vset.pattern.permute.xlu0 %v2136
    %2138 = vperm.xlu0 %2137, %v2127
    %v2139 = vpop.permute.xlu0 %2138
    %v2140 = vlaneseq
    %v2141 = vshrl.u32 %v2140, 7
    %v2142 = vadd.s32 %v2141, 16
    %2143 = vset.pattern.permute.xlu0 %v2142
    %2144 = vperm.xlu0 %2143, %v2127
    %v2145 = vpop.permute.xlu0 %2144
    %v2146 = vlaneseq
    %v2147 = vshrl.u32 %v2146, 7
    %v2148 = vadd.s32 %v2147, 24
    %2149 = vset.pattern.permute.xlu0 %v2148
    %2150 = vperm.xlu0 %2149, %v2127
    %v2151 = vpop.permute.xlu0 %2150
    %v2152 = vlaneseq
    %v2153 = vshrl.u32 %v2152, 7
    %v2154 = vadd.s32 %v2153, 32
    %2155 = vset.pattern.permute.xlu0 %v2154
    %2156 = vperm.xlu0 %2155, %v2127
    %v2157 = vpop.permute.xlu0 %2156
    %v2158 = vlaneseq
    %v2159 = vshrl.u32 %v2158, 7
    %v2160 = vadd.s32 %v2159, 40
    %2161 = vset.pattern.permute.xlu0 %v2160
    %2162 = vperm.xlu0 %2161, %v2127
    %v2163 = vpop.permute.xlu0 %2162
    %v2164 = vlaneseq
    %v2165 = vshrl.u32 %v2164, 7
    %v2166 = vadd.s32 %v2165, 48
    %2167 = vset.pattern.permute.xlu0 %v2166
    %2168 = vperm.xlu0 %2167, %v2127
    %v2169 = vpop.permute.xlu0 %2168
    %v2170 = vlaneseq
    %v2171 = vshrl.u32 %v2170, 7
    %v2172 = vadd.s32 %v2171, 56
    %2173 = vset.pattern.permute.xlu0 %v2172
    %2174 = vperm.xlu0 %2173, %v2127
    %v2175 = vpop.permute.xlu0 %2174
    %v2176 = vlaneseq
    %v2177 = vshrl.u32 %v2176, 7
    %v2178 = vadd.s32 %v2177, 64
    %2179 = vset.pattern.permute.xlu0 %v2178
    %2180 = vperm.xlu0 %2179, %v2127
    %v2181 = vpop.permute.xlu0 %2180
    %v2182 = vlaneseq
    %v2183 = vshrl.u32 %v2182, 7
    %v2184 = vadd.s32 %v2183, 72
    %2185 = vset.pattern.permute.xlu0 %v2184
    %2186 = vperm.xlu0 %2185, %v2127
    %v2187 = vpop.permute.xlu0 %2186
    %v2188 = vlaneseq
    %v2189 = vshrl.u32 %v2188, 7
    %v2190 = vadd.s32 %v2189, 80
    %2191 = vset.pattern.permute.xlu0 %v2190
    %2192 = vperm.xlu0 %2191, %v2127
    %v2193 = vpop.permute.xlu0 %2192
    %v2194 = vlaneseq
    %v2195 = vshrl.u32 %v2194, 7
    %v2196 = vadd.s32 %v2195, 88
    %2197 = vset.pattern.permute.xlu0 %v2196
    %2198 = vperm.xlu0 %2197, %v2127
    %v2199 = vpop.permute.xlu0 %2198
    %v2200 = vlaneseq
    %v2201 = vshrl.u32 %v2200, 7
    %v2202 = vadd.s32 %v2201, 96
    %2203 = vset.pattern.permute.xlu0 %v2202
    %2204 = vperm.xlu0 %2203, %v2127
    %v2205 = vpop.permute.xlu0 %2204
    %v2206 = vlaneseq
    %v2207 = vshrl.u32 %v2206, 7
    %v2208 = vadd.s32 %v2207, 104
    %2209 = vset.pattern.permute.xlu0 %v2208
    %2210 = vperm.xlu0 %2209, %v2127
    %v2211 = vpop.permute.xlu0 %2210
    %v2212 = vlaneseq
    %v2213 = vshrl.u32 %v2212, 7
    %v2214 = vadd.s32 %v2213, 112
    %2215 = vset.pattern.permute.xlu0 %v2214
    %2216 = vperm.xlu0 %2215, %v2127
    %v2217 = vpop.permute.xlu0 %2216
    %v2218 = vlaneseq
    %v2219 = vshrl.u32 %v2218, 7
    %v2220 = vadd.s32 %v2219, 120
    %2221 = vset.pattern.permute.xlu0 %v2220
    %2222 = vperm.xlu0 %2221, %v2127
    %v2223 = vpop.permute.xlu0 %2222
    %v2224 = vperm.slane %v1641, 6
    %v2225 = vlaneseq
    %v2226 = vshrl.u32 %v2225, 7
    %2228 = vset.pattern.permute.xlu0 %v2226
    %2229 = vperm.xlu0 %2228, %v2224
    %v2230 = vpop.permute.xlu0 %2229
    %v2231 = vlaneseq
    %v2232 = vshrl.u32 %v2231, 7
    %v2233 = vadd.s32 %v2232, 8
    %2234 = vset.pattern.permute.xlu0 %v2233
    %2235 = vperm.xlu0 %2234, %v2224
    %v2236 = vpop.permute.xlu0 %2235
    %v2237 = vlaneseq
    %v2238 = vshrl.u32 %v2237, 7
    %v2239 = vadd.s32 %v2238, 16
    %2240 = vset.pattern.permute.xlu0 %v2239
    %2241 = vperm.xlu0 %2240, %v2224
    %v2242 = vpop.permute.xlu0 %2241
    %v2243 = vlaneseq
    %v2244 = vshrl.u32 %v2243, 7
    %v2245 = vadd.s32 %v2244, 24
    %2246 = vset.pattern.permute.xlu0 %v2245
    %2247 = vperm.xlu0 %2246, %v2224
    %v2248 = vpop.permute.xlu0 %2247
    %v2249 = vlaneseq
    %v2250 = vshrl.u32 %v2249, 7
    %v2251 = vadd.s32 %v2250, 32
    %2252 = vset.pattern.permute.xlu0 %v2251
    %2253 = vperm.xlu0 %2252, %v2224
    %v2254 = vpop.permute.xlu0 %2253
    %v2255 = vlaneseq
    %v2256 = vshrl.u32 %v2255, 7
    %v2257 = vadd.s32 %v2256, 40
    %2258 = vset.pattern.permute.xlu0 %v2257
    %2259 = vperm.xlu0 %2258, %v2224
    %v2260 = vpop.permute.xlu0 %2259
    %v2261 = vlaneseq
    %v2262 = vshrl.u32 %v2261, 7
    %v2263 = vadd.s32 %v2262, 48
    %2264 = vset.pattern.permute.xlu0 %v2263
    %2265 = vperm.xlu0 %2264, %v2224
    %v2266 = vpop.permute.xlu0 %2265
    %v2267 = vlaneseq
    %v2268 = vshrl.u32 %v2267, 7
    %v2269 = vadd.s32 %v2268, 56
    %2270 = vset.pattern.permute.xlu0 %v2269
    %2271 = vperm.xlu0 %2270, %v2224
    %v2272 = vpop.permute.xlu0 %2271
    %v2273 = vlaneseq
    %v2274 = vshrl.u32 %v2273, 7
    %v2275 = vadd.s32 %v2274, 64
    %2276 = vset.pattern.permute.xlu0 %v2275
    %2277 = vperm.xlu0 %2276, %v2224
    %v2278 = vpop.permute.xlu0 %2277
    %v2279 = vlaneseq
    %v2280 = vshrl.u32 %v2279, 7
    %v2281 = vadd.s32 %v2280, 72
    %2282 = vset.pattern.permute.xlu0 %v2281
    %2283 = vperm.xlu0 %2282, %v2224
    %v2284 = vpop.permute.xlu0 %2283
    %v2285 = vlaneseq
    %v2286 = vshrl.u32 %v2285, 7
    %v2287 = vadd.s32 %v2286, 80
    %2288 = vset.pattern.permute.xlu0 %v2287
    %2289 = vperm.xlu0 %2288, %v2224
    %v2290 = vpop.permute.xlu0 %2289
    %v2291 = vlaneseq
    %v2292 = vshrl.u32 %v2291, 7
    %v2293 = vadd.s32 %v2292, 88
    %2294 = vset.pattern.permute.xlu0 %v2293
    %2295 = vperm.xlu0 %2294, %v2224
    %v2296 = vpop.permute.xlu0 %2295
    %v2297 = vlaneseq
    %v2298 = vshrl.u32 %v2297, 7
    %v2299 = vadd.s32 %v2298, 96
    %2300 = vset.pattern.permute.xlu0 %v2299
    %2301 = vperm.xlu0 %2300, %v2224
    %v2302 = vpop.permute.xlu0 %2301
    %v2303 = vlaneseq
    %v2304 = vshrl.u32 %v2303, 7
    %v2305 = vadd.s32 %v2304, 104
    %2306 = vset.pattern.permute.xlu0 %v2305
    %2307 = vperm.xlu0 %2306, %v2224
    %v2308 = vpop.permute.xlu0 %2307
    %v2309 = vlaneseq
    %v2310 = vshrl.u32 %v2309, 7
    %v2311 = vadd.s32 %v2310, 112
    %2312 = vset.pattern.permute.xlu0 %v2311
    %2313 = vperm.xlu0 %2312, %v2224
    %v2314 = vpop.permute.xlu0 %2313
    %v2315 = vlaneseq
    %v2316 = vshrl.u32 %v2315, 7
    %v2317 = vadd.s32 %v2316, 120
    %2318 = vset.pattern.permute.xlu0 %v2317
    %2319 = vperm.xlu0 %2318, %v2224
    %v2320 = vpop.permute.xlu0 %2319
    %v2321 = vperm.slane %v1641, 7
    %v2322 = vlaneseq
    %v2323 = vshrl.u32 %v2322, 7
    %2325 = vset.pattern.permute.xlu0 %v2323
    %2326 = vperm.xlu0 %2325, %v2321
    %v2327 = vpop.permute.xlu0 %2326
    %v2328 = vlaneseq
    %v2329 = vshrl.u32 %v2328, 7
    %v2330 = vadd.s32 %v2329, 8
    %2331 = vset.pattern.permute.xlu0 %v2330
    %2332 = vperm.xlu0 %2331, %v2321
    %v2333 = vpop.permute.xlu0 %2332
    %v2334 = vlaneseq
    %v2335 = vshrl.u32 %v2334, 7
    %v2336 = vadd.s32 %v2335, 16
    %2337 = vset.pattern.permute.xlu0 %v2336
    %2338 = vperm.xlu0 %2337, %v2321
    %v2339 = vpop.permute.xlu0 %2338
    %v2340 = vlaneseq
    %v2341 = vshrl.u32 %v2340, 7
    %v2342 = vadd.s32 %v2341, 24
    %2343 = vset.pattern.permute.xlu0 %v2342
    %2344 = vperm.xlu0 %2343, %v2321
    %v2345 = vpop.permute.xlu0 %2344
    %v2346 = vlaneseq
    %v2347 = vshrl.u32 %v2346, 7
    %v2348 = vadd.s32 %v2347, 32
    %2349 = vset.pattern.permute.xlu0 %v2348
    %2350 = vperm.xlu0 %2349, %v2321
    %v2351 = vpop.permute.xlu0 %2350
    %v2352 = vlaneseq
    %v2353 = vshrl.u32 %v2352, 7
    %v2354 = vadd.s32 %v2353, 40
    %2355 = vset.pattern.permute.xlu0 %v2354
    %2356 = vperm.xlu0 %2355, %v2321
    %v2357 = vpop.permute.xlu0 %2356
    %v2358 = vlaneseq
    %v2359 = vshrl.u32 %v2358, 7
    %v2360 = vadd.s32 %v2359, 48
    %2361 = vset.pattern.permute.xlu0 %v2360
    %2362 = vperm.xlu0 %2361, %v2321
    %v2363 = vpop.permute.xlu0 %2362
    %v2364 = vlaneseq
    %v2365 = vshrl.u32 %v2364, 7
    %v2366 = vadd.s32 %v2365, 56
    %2367 = vset.pattern.permute.xlu0 %v2366
    %2368 = vperm.xlu0 %2367, %v2321
    %v2369 = vpop.permute.xlu0 %2368
    %v2370 = vlaneseq
    %v2371 = vshrl.u32 %v2370, 7
    %v2372 = vadd.s32 %v2371, 64
    %2373 = vset.pattern.permute.xlu0 %v2372
    %2374 = vperm.xlu0 %2373, %v2321
    %v2375 = vpop.permute.xlu0 %2374
    %v2376 = vlaneseq
    %v2377 = vshrl.u32 %v2376, 7
    %v2378 = vadd.s32 %v2377, 72
    %2379 = vset.pattern.permute.xlu0 %v2378
    %2380 = vperm.xlu0 %2379, %v2321
    %v2381 = vpop.permute.xlu0 %2380
    %v2382 = vlaneseq
    %v2383 = vshrl.u32 %v2382, 7
    %v2384 = vadd.s32 %v2383, 80
    %2385 = vset.pattern.permute.xlu0 %v2384
    %2386 = vperm.xlu0 %2385, %v2321
    %v2387 = vpop.permute.xlu0 %2386
    %v2388 = vlaneseq
    %v2389 = vshrl.u32 %v2388, 7
    %v2390 = vadd.s32 %v2389, 88
    %2391 = vset.pattern.permute.xlu0 %v2390
    %2392 = vperm.xlu0 %2391, %v2321
    %v2393 = vpop.permute.xlu0 %2392
    %v2394 = vlaneseq
    %v2395 = vshrl.u32 %v2394, 7
    %v2396 = vadd.s32 %v2395, 96
    %2397 = vset.pattern.permute.xlu0 %v2396
    %2398 = vperm.xlu0 %2397, %v2321
    %v2399 = vpop.permute.xlu0 %2398
    %v2400 = vlaneseq
    %v2401 = vshrl.u32 %v2400, 7
    %v2402 = vadd.s32 %v2401, 104
    %2403 = vset.pattern.permute.xlu0 %v2402
    %2404 = vperm.xlu0 %2403, %v2321
    %v2405 = vpop.permute.xlu0 %2404
    %v2406 = vlaneseq
    %v2407 = vshrl.u32 %v2406, 7
    %v2408 = vadd.s32 %v2407, 112
    %2409 = vset.pattern.permute.xlu0 %v2408
    %2410 = vperm.xlu0 %2409, %v2321
    %v2411 = vpop.permute.xlu0 %2410
    %v2412 = vlaneseq
    %v2413 = vshrl.u32 %v2412, 7
    %v2414 = vadd.s32 %v2413, 120
    %2415 = vset.pattern.permute.xlu0 %v2414
    %2416 = vperm.xlu0 %2415, %v2321
    %v2417 = vpop.permute.xlu0 %2416
    %v2418 = vadd.f32 %v1648, %v1625
    %v2419 = vadd.f32 %v1654, %v1626
    %v2420 = vadd.f32 %v1660, %v1627
    %v2421 = vadd.f32 %v1666, %v1628
    %v2422 = vadd.f32 %v1672, %v1629
    %v2423 = vadd.f32 %v1678, %v1630
    %v2424 = vadd.f32 %v1684, %v1631
    %v2425 = vadd.f32 %v1690, %v1632
    %v2426 = vadd.f32 %v1696, %v1633
    %v2427 = vadd.f32 %v1702, %v1634
    %v2428 = vadd.f32 %v1708, %v1635
    %v2429 = vadd.f32 %v1714, %v1636
    %v2430 = vadd.f32 %v1720, %v1637
    %v2431 = vadd.f32 %v1726, %v1638
    %v2432 = vadd.f32 %v1732, %v1639
    %v2433 = vadd.f32 %v1738, %v1640
    %v2434 = vadd.f32 %v1745, %v1625
    %v2435 = vadd.f32 %v1751, %v1626
    %v2436 = vadd.f32 %v1757, %v1627
    %v2437 = vadd.f32 %v1763, %v1628
    %v2438 = vadd.f32 %v1769, %v1629
    %v2439 = vadd.f32 %v1775, %v1630
    %v2440 = vadd.f32 %v1781, %v1631
    %v2441 = vadd.f32 %v1787, %v1632
    %v2442 = vadd.f32 %v1793, %v1633
    %v2443 = vadd.f32 %v1799, %v1634
    %v2444 = vadd.f32 %v1805, %v1635
    %v2445 = vadd.f32 %v1811, %v1636
    %v2446 = vadd.f32 %v1817, %v1637
    %v2447 = vadd.f32 %v1823, %v1638
    %v2448 = vadd.f32 %v1829, %v1639
    %v2449 = vadd.f32 %v1835, %v1640
    %v2450 = vadd.f32 %v1842, %v1625
    %v2451 = vadd.f32 %v1848, %v1626
    %v2452 = vadd.f32 %v1854, %v1627
    %v2453 = vadd.f32 %v1860, %v1628
    %v2454 = vadd.f32 %v1866, %v1629
    %v2455 = vadd.f32 %v1872, %v1630
    %v2456 = vadd.f32 %v1878, %v1631
    %v2457 = vadd.f32 %v1884, %v1632
    %v2458 = vadd.f32 %v1890, %v1633
    %v2459 = vadd.f32 %v1896, %v1634
    %v2460 = vadd.f32 %v1902, %v1635
    %v2461 = vadd.f32 %v1908, %v1636
    %v2462 = vadd.f32 %v1914, %v1637
    %v2463 = vadd.f32 %v1920, %v1638
    %v2464 = vadd.f32 %v1926, %v1639
    %v2465 = vadd.f32 %v1932, %v1640
    %v2466 = vadd.f32 %v1939, %v1625
    %v2467 = vadd.f32 %v1945, %v1626
    %v2468 = vadd.f32 %v1951, %v1627
    %v2469 = vadd.f32 %v1957, %v1628
    %v2470 = vadd.f32 %v1963, %v1629
    %v2471 = vadd.f32 %v1969, %v1630
    %v2472 = vadd.f32 %v1975, %v1631
    %v2473 = vadd.f32 %v1981, %v1632
    %v2474 = vadd.f32 %v1987, %v1633
    %v2475 = vadd.f32 %v1993, %v1634
    %v2476 = vadd.f32 %v1999, %v1635
    %v2477 = vadd.f32 %v2005, %v1636
    %v2478 = vadd.f32 %v2011, %v1637
    %v2479 = vadd.f32 %v2017, %v1638
    %v2480 = vadd.f32 %v2023, %v1639
    %v2481 = vadd.f32 %v2029, %v1640
    %v2482 = vadd.f32 %v2036, %v1625
    %v2483 = vadd.f32 %v2042, %v1626
    %v2484 = vadd.f32 %v2048, %v1627
    %v2485 = vadd.f32 %v2054, %v1628
    %v2486 = vadd.f32 %v2060, %v1629
    %v2487 = vadd.f32 %v2066, %v1630
    %v2488 = vadd.f32 %v2072, %v1631
    %v2489 = vadd.f32 %v2078, %v1632
    %v2490 = vadd.f32 %v2084, %v1633
    %v2491 = vadd.f32 %v2090, %v1634
    %v2492 = vadd.f32 %v2096, %v1635
    %v2493 = vadd.f32 %v2102, %v1636
    %v2494 = vadd.f32 %v2108, %v1637
    %v2495 = vadd.f32 %v2114, %v1638
    %v2496 = vadd.f32 %v2120, %v1639
    %v2497 = vadd.f32 %v2126, %v1640
    %v2498 = vadd.f32 %v2133, %v1625
    %v2499 = vadd.f32 %v2139, %v1626
    %v2500 = vadd.f32 %v2145, %v1627
    %v2501 = vadd.f32 %v2151, %v1628
    %v2502 = vadd.f32 %v2157, %v1629
    %v2503 = vadd.f32 %v2163, %v1630
    %v2504 = vadd.f32 %v2169, %v1631
    %v2505 = vadd.f32 %v2175, %v1632
    %v2506 = vadd.f32 %v2181, %v1633
    %v2507 = vadd.f32 %v2187, %v1634
    %v2508 = vadd.f32 %v2193, %v1635
    %v2509 = vadd.f32 %v2199, %v1636
    %v2510 = vadd.f32 %v2205, %v1637
    %v2511 = vadd.f32 %v2211, %v1638
    %v2512 = vadd.f32 %v2217, %v1639
    %v2513 = vadd.f32 %v2223, %v1640
    %v2514 = vadd.f32 %v2230, %v1625
    %v2515 = vadd.f32 %v2236, %v1626
    %v2516 = vadd.f32 %v2242, %v1627
    %v2517 = vadd.f32 %v2248, %v1628
    %v2518 = vadd.f32 %v2254, %v1629
    %v2519 = vadd.f32 %v2260, %v1630
    %v2520 = vadd.f32 %v2266, %v1631
    %v2521 = vadd.f32 %v2272, %v1632
    %v2522 = vadd.f32 %v2278, %v1633
    %v2523 = vadd.f32 %v2284, %v1634
    %v2524 = vadd.f32 %v2290, %v1635
    %v2525 = vadd.f32 %v2296, %v1636
    %v2526 = vadd.f32 %v2302, %v1637
    %v2527 = vadd.f32 %v2308, %v1638
    %v2528 = vadd.f32 %v2314, %v1639
    %v2529 = vadd.f32 %v2320, %v1640
    %v2530 = vadd.f32 %v2327, %v1625
    %v2531 = vadd.f32 %v2333, %v1626
    %v2532 = vadd.f32 %v2339, %v1627
    %v2533 = vadd.f32 %v2345, %v1628
    %v2534 = vadd.f32 %v2351, %v1629
    %v2535 = vadd.f32 %v2357, %v1630
    %v2536 = vadd.f32 %v2363, %v1631
    %v2537 = vadd.f32 %v2369, %v1632
    %v2538 = vadd.f32 %v2375, %v1633
    %v2539 = vadd.f32 %v2381, %v1634
    %v2540 = vadd.f32 %v2387, %v1635
    %v2541 = vadd.f32 %v2393, %v1636
    %v2542 = vadd.f32 %v2399, %v1637
    %v2543 = vadd.f32 %v2405, %v1638
    %v2544 = vadd.f32 %v2411, %v1639
    %v2545 = vadd.f32 %v2417, %v1640
    %v2546 = vmin.f32 %v2418, %v2419
    %v2547 = vmin.f32 %v2546, %v2420
    %v2548 = vmin.f32 %v2547, %v2421
    %v2549 = vmin.f32 %v2548, %v2422
    %v2550 = vmin.f32 %v2549, %v2423
    %v2551 = vmin.f32 %v2550, %v2424
    %v2552 = vmin.f32 %v2551, %v2425
    %v2553 = vmin.f32 %v2552, %v2426
    %v2554 = vmin.f32 %v2553, %v2427
    %v2555 = vmin.f32 %v2554, %v2428
    %v2556 = vmin.f32 %v2555, %v2429
    %v2557 = vmin.f32 %v2556, %v2430
    %v2558 = vmin.f32 %v2557, %v2431
    %v2559 = vmin.f32 %v2558, %v2432
    %v2560 = vmin.f32 %v2559, %v2433
    %v2561 = vrot.slane %v2560, 4
    %v2562 = vmin.f32 %v2560, %v2561
    %v2563 = vrot.slane %v2562, 2
    %v2564 = vmin.f32 %v2562, %v2563
    %v2565 = vrot.slane %v2564, 1
    %v2566 = vmin.f32 %v2564, %v2565
    %v2567 = vmin.f32 %v2434, %v2435
    %v2568 = vmin.f32 %v2567, %v2436
    %v2569 = vmin.f32 %v2568, %v2437
    %v2570 = vmin.f32 %v2569, %v2438
    %v2571 = vmin.f32 %v2570, %v2439
    %v2572 = vmin.f32 %v2571, %v2440
    %v2573 = vmin.f32 %v2572, %v2441
    %v2574 = vmin.f32 %v2573, %v2442
    %v2575 = vmin.f32 %v2574, %v2443
    %v2576 = vmin.f32 %v2575, %v2444
    %v2577 = vmin.f32 %v2576, %v2445
    %v2578 = vmin.f32 %v2577, %v2446
    %v2579 = vmin.f32 %v2578, %v2447
    %v2580 = vmin.f32 %v2579, %v2448
    %v2581 = vmin.f32 %v2580, %v2449
    %v2582 = vrot.slane %v2581, 4
    %v2583 = vmin.f32 %v2581, %v2582
    %v2584 = vrot.slane %v2583, 2
    %v2585 = vmin.f32 %v2583, %v2584
    %v2586 = vrot.slane %v2585, 1
    %v2587 = vmin.f32 %v2585, %v2586
    %v2588 = vmin.f32 %v2450, %v2451
    %v2589 = vmin.f32 %v2588, %v2452
    %v2590 = vmin.f32 %v2589, %v2453
    %v2591 = vmin.f32 %v2590, %v2454
    %v2592 = vmin.f32 %v2591, %v2455
    %v2593 = vmin.f32 %v2592, %v2456
    %v2594 = vmin.f32 %v2593, %v2457
    %v2595 = vmin.f32 %v2594, %v2458
    %v2596 = vmin.f32 %v2595, %v2459
    %v2597 = vmin.f32 %v2596, %v2460
    %v2598 = vmin.f32 %v2597, %v2461
    %v2599 = vmin.f32 %v2598, %v2462
    %v2600 = vmin.f32 %v2599, %v2463
    %v2601 = vmin.f32 %v2600, %v2464
    %v2602 = vmin.f32 %v2601, %v2465
    %v2603 = vrot.slane %v2602, 4
    %v2604 = vmin.f32 %v2602, %v2603
    %v2605 = vrot.slane %v2604, 2
    %v2606 = vmin.f32 %v2604, %v2605
    %v2607 = vrot.slane %v2606, 1
    %v2608 = vmin.f32 %v2606, %v2607
    %v2609 = vmin.f32 %v2466, %v2467
    %v2610 = vmin.f32 %v2609, %v2468
    %v2611 = vmin.f32 %v2610, %v2469
    %v2612 = vmin.f32 %v2611, %v2470
    %v2613 = vmin.f32 %v2612, %v2471
    %v2614 = vmin.f32 %v2613, %v2472
    %v2615 = vmin.f32 %v2614, %v2473
    %v2616 = vmin.f32 %v2615, %v2474
    %v2617 = vmin.f32 %v2616, %v2475
    %v2618 = vmin.f32 %v2617, %v2476
    %v2619 = vmin.f32 %v2618, %v2477
    %v2620 = vmin.f32 %v2619, %v2478
    %v2621 = vmin.f32 %v2620, %v2479
    %v2622 = vmin.f32 %v2621, %v2480
    %v2623 = vmin.f32 %v2622, %v2481
    %v2624 = vrot.slane %v2623, 4
    %v2625 = vmin.f32 %v2623, %v2624
    %v2626 = vrot.slane %v2625, 2
    %v2627 = vmin.f32 %v2625, %v2626
    %v2628 = vrot.slane %v2627, 1
    %v2629 = vmin.f32 %v2627, %v2628
    %v2630 = vmin.f32 %v2482, %v2483
    %v2631 = vmin.f32 %v2630, %v2484
    %v2632 = vmin.f32 %v2631, %v2485
    %v2633 = vmin.f32 %v2632, %v2486
    %v2634 = vmin.f32 %v2633, %v2487
    %v2635 = vmin.f32 %v2634, %v2488
    %v2636 = vmin.f32 %v2635, %v2489
    %v2637 = vmin.f32 %v2636, %v2490
    %v2638 = vmin.f32 %v2637, %v2491
    %v2639 = vmin.f32 %v2638, %v2492
    %v2640 = vmin.f32 %v2639, %v2493
    %v2641 = vmin.f32 %v2640, %v2494
    %v2642 = vmin.f32 %v2641, %v2495
    %v2643 = vmin.f32 %v2642, %v2496
    %v2644 = vmin.f32 %v2643, %v2497
    %v2645 = vrot.slane %v2644, 4
    %v2646 = vmin.f32 %v2644, %v2645
    %v2647 = vrot.slane %v2646, 2
    %v2648 = vmin.f32 %v2646, %v2647
    %v2649 = vrot.slane %v2648, 1
    %v2650 = vmin.f32 %v2648, %v2649
    %v2651 = vmin.f32 %v2498, %v2499
    %v2652 = vmin.f32 %v2651, %v2500
    %v2653 = vmin.f32 %v2652, %v2501
    %v2654 = vmin.f32 %v2653, %v2502
    %v2655 = vmin.f32 %v2654, %v2503
    %v2656 = vmin.f32 %v2655, %v2504
    %v2657 = vmin.f32 %v2656, %v2505
    %v2658 = vmin.f32 %v2657, %v2506
    %v2659 = vmin.f32 %v2658, %v2507
    %v2660 = vmin.f32 %v2659, %v2508
    %v2661 = vmin.f32 %v2660, %v2509
    %v2662 = vmin.f32 %v2661, %v2510
    %v2663 = vmin.f32 %v2662, %v2511
    %v2664 = vmin.f32 %v2663, %v2512
    %v2665 = vmin.f32 %v2664, %v2513
    %v2666 = vrot.slane %v2665, 4
    %v2667 = vmin.f32 %v2665, %v2666
    %v2668 = vrot.slane %v2667, 2
    %v2669 = vmin.f32 %v2667, %v2668
    %v2670 = vrot.slane %v2669, 1
    %v2671 = vmin.f32 %v2669, %v2670
    %v2672 = vmin.f32 %v2514, %v2515
    %v2673 = vmin.f32 %v2672, %v2516
    %v2674 = vmin.f32 %v2673, %v2517
    %v2675 = vmin.f32 %v2674, %v2518
    %v2676 = vmin.f32 %v2675, %v2519
    %v2677 = vmin.f32 %v2676, %v2520
    %v2678 = vmin.f32 %v2677, %v2521
    %v2679 = vmin.f32 %v2678, %v2522
    %v2680 = vmin.f32 %v2679, %v2523
    %v2681 = vmin.f32 %v2680, %v2524
    %v2682 = vmin.f32 %v2681, %v2525
    %v2683 = vmin.f32 %v2682, %v2526
    %v2684 = vmin.f32 %v2683, %v2527
    %v2685 = vmin.f32 %v2684, %v2528
    %v2686 = vmin.f32 %v2685, %v2529
    %v2687 = vrot.slane %v2686, 4
    %v2688 = vmin.f32 %v2686, %v2687
    %v2689 = vrot.slane %v2688, 2
    %v2690 = vmin.f32 %v2688, %v2689
    %v2691 = vrot.slane %v2690, 1
    %v2692 = vmin.f32 %v2690, %v2691
    %v2693 = vmin.f32 %v2530, %v2531
    %v2694 = vmin.f32 %v2693, %v2532
    %v2695 = vmin.f32 %v2694, %v2533
    %v2696 = vmin.f32 %v2695, %v2534
    %v2697 = vmin.f32 %v2696, %v2535
    %v2698 = vmin.f32 %v2697, %v2536
    %v2699 = vmin.f32 %v2698, %v2537
    %v2700 = vmin.f32 %v2699, %v2538
    %v2701 = vmin.f32 %v2700, %v2539
    %v2702 = vmin.f32 %v2701, %v2540
    %v2703 = vmin.f32 %v2702, %v2541
    %v2704 = vmin.f32 %v2703, %v2542
    %v2705 = vmin.f32 %v2704, %v2543
    %v2706 = vmin.f32 %v2705, %v2544
    %v2707 = vmin.f32 %v2706, %v2545
    %v2708 = vrot.slane %v2707, 4
    %v2709 = vmin.f32 %v2707, %v2708
    %v2710 = vrot.slane %v2709, 2
    %v2711 = vmin.f32 %v2709, %v2710
    %v2712 = vrot.slane %v2711, 1
    %v2713 = vmin.f32 %v2711, %v2712
    %v2714 = vmin.f32 %v2566, 3e+38
    %v2715 = vmin.f32 %v2587, 3e+38
    %v2716 = vmin.f32 %v2608, 3e+38
    %v2717 = vmin.f32 %v2629, 3e+38
    %v2718 = vmin.f32 %v2650, 3e+38
    %v2719 = vmin.f32 %v2671, 3e+38
    %v2720 = vmin.f32 %v2692, 3e+38
    %v2721 = vmin.f32 %v2713, 3e+38
    %v2722 = vld [vmem:[%s9] sm:$0xff]
    %vm2723 = vcmp.gt.f32.partialorder %v2722, 0.5
    %v2724 = vsel %vm2723, 1, 0
    %2725 = vset.pattern.permute.xlu0 0
    %2726 = vperm.xlu0 %2725, %v2724
    %v2727 = vpop.permute.xlu0 %2726
    %vm2728 = vcmp.eq.s32.totalorder %v2727, 1
    %vm2737 = vcmask 1041409
    %v2738 = vsel %vm2737, %v2715, %v2714
    %vm2739 = vcmask 1042434
    %v2740 = vsel %vm2739, %v2716, %v2738
    %vm2741 = vcmask 1043459
    %v2742 = vsel %vm2741, %v2717, %v2740
    %vm2743 = vcmask 1044484
    %v2744 = vsel %vm2743, %v2718, %v2742
    %vm2745 = vcmask 1045509
    %v2746 = vsel %vm2745, %v2719, %v2744
    %vm2747 = vcmask 1046534
    %v2748 = vsel %vm2747, %v2720, %v2746
    %vm2749 = vcmask 1047559
    %v2750 = vsel %vm2749, %v2721, %v2748
    %v2752 = vsel %vm2728, %v2750, 0.0
    %v2753 = vld [vmem:[#allocation10] sm:$0xff]
    %v2754 = vld [vmem:[#allocation10 + $0x8] sm:$0xff]
    %v2755 = vld [vmem:[#allocation10 + $0x10] sm:$0xff]
    %v2756 = vld [vmem:[#allocation10 + $0x18] sm:$0xff]
    %v2757 = vld [vmem:[#allocation10 + $0x20] sm:$0xff]
    %v2758 = vld [vmem:[#allocation10 + $0x28] sm:$0xff]
    %v2759 = vld [vmem:[#allocation10 + $0x30] sm:$0xff]
    %v2760 = vld [vmem:[#allocation10 + $0x38] sm:$0xff]
    %v2761 = vld [vmem:[#allocation10 + $0x40] sm:$0xff]
    %v2762 = vld [vmem:[#allocation10 + $0x48] sm:$0xff]
    %v2763 = vld [vmem:[#allocation10 + $0x50] sm:$0xff]
    %v2764 = vld [vmem:[#allocation10 + $0x58] sm:$0xff]
    %v2765 = vld [vmem:[#allocation10 + $0x60] sm:$0xff]
    %v2766 = vld [vmem:[#allocation10 + $0x68] sm:$0xff]
    %v2767 = vld [vmem:[#allocation10 + $0x70] sm:$0xff]
    %v2768 = vld [vmem:[#allocation10 + $0x78] sm:$0xff]
    %v2769 = vld [vmem:[%s19] sm:$0x1]
    %v2771 = vperm.slane %v2769, 0
    %2773 = vmatpush.xpose.msra.mxu0 %v2768
    %2774 = vmatpush.xpose.msra.mxu0 %v2767
    %2775 = vmatpush.xpose.msra.mxu0 %v2766
    %2776 = vmatpush.xpose.msra.mxu0 %v2765
    %2777 = vmatpush.xpose.msra.mxu0 %v2764
    %2778 = vmatpush.xpose.msra.mxu0 %v2763
    %2779 = vmatpush.xpose.msra.mxu0 %v2762
    %2780 = vmatpush.xpose.msra.mxu0 %v2761
    %2781 = vmatpush.xpose.msra.mxu0 %v2760
    %2782 = vmatpush.xpose.msra.mxu0 %v2759
    %2783 = vmatpush.xpose.msra.mxu0 %v2758
    %2784 = vmatpush.xpose.msra.mxu0 %v2757
    %2785 = vmatpush.xpose.msra.mxu0 %v2756
    %2786 = vmatpush.xpose.msra.mxu0 %v2755
    %2787 = vmatpush.xpose.msra.mxu0 %v2754
    %2788 = vmatpush.xpose.msra.mxu0 %v2753
    %2789 = vmatmul.f32.gmra.mxu0 %v2752
    %v2790 = vpop.f32.mrf.mxu0
    %v2791 = vadd.f32 %v2771, %v2790
    %2792 = vdwg.mxu0
    %2793 = vst [vmem:[#allocation11] sm:$0xff] %v2791
    // Predicated region
    $region102: #{tpu_custom_call.1} parent=1 // pred_check
      _
    $region103: #{tpu_custom_call.1} parent=1 // pred_check_branch
      %2795 = sbr.rel (0) target = $region105
    $region104: #{tpu_custom_call.1} parent=1 // pred_region
      %2797 = vsyncadd [#allocation4], 0
      %s2799 = sshll.u32 [#allocation11], 4
      %s2800 = int_to_ptr.vmem [resolvable:$true] %s2799
      %s2801 = sshll.u32 %s20, 4
      %s2802 = int_to_ptr.hbm [resolvable:$true] %s2801
      %2804 = dma.vmem_to_hbm [thread:$0]  %s2800, 128, %s2802, [#allocation4]
    $region105: #{tpu_custom_call.1} parent=1 // pred_fallthru
      _
    // Predicated region
    $region106: #{tpu_custom_call.1} parent=1 // pred_check
      _
    $region107: #{tpu_custom_call.1} parent=1 // pred_check_branch
      %2806 = sbr.rel (0) target = $region109
    $region108: #{tpu_custom_call.1} parent=1 // pred_region
      %2808 = dma.done [#allocation4], 128
    $region109: #{tpu_custom_call.1} parent=1 // pred_fallthru
      _
    %2809 = vsyncpa [#allocation3], 1
    %2810 = vsyncpa [#allocation6], 1
    %2811 = vsyncpa [#allocation9], 1
    %2812 = vsyncpa [#allocation4], 1

</llo_original>
